<compile_context>
chip_gen: v7x
topology: tpu7x:2x2x1
jax: 0.10.0
libtpu: 0.0.40
codegen_flags: <defaults>
</compile_context>

<pallas_src>
import functools

import jax
import jax.numpy as jnp
from jax.experimental import pallas as pl
from jax.experimental.pallas import tpu as pltpu


def ada_block_kernel(x_ref, w_ref, cp_ref, wse_ref, o_ref, *, H, W, Cout):
    # x_ref:   ((H+2)*(W+2)+2, Cin)  zero-padded input, rows flattened (halo slab)
    # w_ref:   (9*Cin, Cp)  bf16     3x3 conv weight as a matmul (tap-major rows)
    # cp_ref:  (4, Cp)      f32      [conv bias; gamma; beta; SE bias] (channel-padded)
    # wse_ref: (Cp, Cp)     bf16     SE 1x1 conv weight, [in, out] layout (channel-padded)
    # o_ref:   (H*(W+2), Cp)         output slab (2 wrap-around cols per row, sliced outside)
    W2 = W + 2
    HWp = H * W2

    # ---- build the 9 im2col taps from the halo slab (static contiguous slices) ----
    taps = [x_ref[pl.ds(dh * W2 + dw, HWp), :]
            for dh in range(3) for dw in range(3)]
    patches = jnp.concatenate(taps, axis=-1).astype(jnp.bfloat16)       # (HWp, 9*Cin)

    # ---- 3x3 conv as one MXU matmul, bf16 in / f32 accumulate ----
    acc = jnp.dot(patches, w_ref[...], preferred_element_type=jnp.float32)
    acc = acc + cp_ref[0:1, :]                                          # conv bias

    # valid-position mask: within each group of W+2 rows, the last 2 are wrap-around garbage
    rows = jax.lax.broadcasted_iota(jnp.int32, (HWp, 1), 0)
    valid = (rows % W2) < W

    # ---- GroupNorm(num_groups=1): one-pass mean/var over the H*W*Cout real elements ----
    # (padded channels are exactly zero, garbage rows are masked, so the sums are exact)
    cnt = float(H * W * Cout)
    am = jnp.where(valid, acc, 0.0)
    s1 = jnp.sum(am)
    s2 = jnp.sum(am * am)
    mean = s1 / cnt
    var = jnp.maximum(s2 / cnt - mean * mean, 0.0)                      # biased variance
    rstd = jax.lax.rsqrt(var + 1e-5)
    y = (acc - mean) * rstd * cp_ref[1:2, :] + cp_ref[2:3, :]
    y = jnp.maximum(y, 0.0)                                             # ReLU
    y = jnp.where(valid, y, 0.0)                                        # zero garbage cols

    # ---- SE block: global average pool -> 1x1 conv -> sigmoid -> channel scale ----
    g = (jnp.sum(y, axis=0, keepdims=True) * (1.0 / float(H * W))).astype(jnp.bfloat16)
    s = jax.nn.sigmoid(
        jnp.dot(g, wse_ref[...], preferred_element_type=jnp.float32) + cp_ref[3:4, :])
    o_ref[...] = (y * s).astype(o_ref.dtype)


@jax.jit
def ada_block_forward(x_nchw, params):
    """x_nchw: (N, Cin, H, W) float32. Returns NHWC (N, H, W, Cout)."""
    N, Cin, H, W = x_nchw.shape
    w_conv = params["w_conv"]                       # (3, 3, Cin, Cout), HWIO
    Cout = w_conv.shape[-1]
    Cp = ((Cout + 127) // 128) * 128                # lane-dense padded channel count
    W2 = W + 2
    R = (H + 2) * W2 + 2                            # +2 rows so the last tap slice is in-bounds
    HWp = H * W2

    # ---- glue: NCHW -> NHWC, zero halo pad, flatten rows (no 9x im2col in HBM) ----
    x = jnp.transpose(x_nchw, (0, 2, 3, 1))                            # (N, H, W, Cin)
    xp = jnp.pad(x, ((0, 0), (1, 1), (1, 1), (0, 0)))                  # (N, H+2, W+2, Cin)
    xp = xp.reshape(N, (H + 2) * W2, Cin)
    xp = jnp.pad(xp, ((0, 0), (0, 2), (0, 0)))                         # (N, R, Cin)

    # conv weight as (9*Cin, Cp), tap-major rows, zero-padded channels, bf16
    w_mat = w_conv.reshape(9 * Cin, Cout)
    w_mat = jnp.pad(w_mat, ((0, 0), (0, Cp - Cout))).astype(jnp.bfloat16)

    # per-channel params packed into a single (4, Cp) f32 input
    def _padc(v):
        return jnp.pad(v.reshape(1, Cout), ((0, 0), (0, Cp - Cout)))
    chan = jnp.concatenate(
        [_padc(params["b_conv"]), _padc(params["gamma"]),
         _padc(params["beta"]), _padc(params["b_se"])], axis=0)        # (4, Cp)

    w_se = jnp.pad(params["w_se"],
                   ((0, Cp - Cout), (0, Cp - Cout))).astype(jnp.bfloat16)   # (Cp, Cp)

    kernel = functools.partial(ada_block_kernel, H=H, W=W, Cout=Cout)
    out = pl.pallas_call(
        kernel,
        out_shape=jax.ShapeDtypeStruct((N, HWp, Cp), jnp.float32),
        grid_spec=pltpu.PrefetchScalarGridSpec(
            num_scalar_prefetch=0,
            grid=(N,),
            in_specs=[
                pl.BlockSpec((None, R, Cin), lambda n: (n, 0, 0)),
                pl.BlockSpec((9 * Cin, Cp), lambda n: (0, 0)),
                pl.BlockSpec((4, Cp), lambda n: (0, 0)),
                pl.BlockSpec((Cp, Cp), lambda n: (0, 0)),
            ],
            out_specs=pl.BlockSpec((None, HWp, Cp), lambda n: (n, 0, 0)),
        ),
        compiler_params=pltpu.CompilerParams(
            dimension_semantics=("parallel",),
            vmem_limit_bytes=32 * 1024 * 1024),
    )(xp, w_mat, chan, w_se)

    # drop the 2 wrap-around columns per image row and the padded channels
    out = out.reshape(N, H, W2, Cp)[:, :, :W, :Cout]
    return out


def ref_forward(x_nchw, params):
    """Pure-JAX f32 reference matching PyTorch ada_block semantics (returns NHWC)."""
    x = jnp.transpose(x_nchw, (0, 2, 3, 1))
    y = jax.lax.conv_general_dilated(
        x, params["w_conv"], window_strides=(1, 1), padding="SAME",
        dimension_numbers=("NHWC", "HWIO", "NHWC"))
    y = y + params["b_conv"][None, None, None, :]
    mean = jnp.mean(y, axis=(1, 2, 3), keepdims=True)
    var = jnp.mean(jnp.square(y - mean), axis=(1, 2, 3), keepdims=True)
    y = (y - mean) / jnp.sqrt(var + 1e-5)
    y = y * params["gamma"][None, None, None, :] + params["beta"][None, None, None, :]
    y = jnp.maximum(y, 0.0)
    g = jnp.mean(y, axis=(1, 2), keepdims=True)                        # (N,1,1,C)
    s = jax.nn.sigmoid(
        jnp.einsum("nijc,cd->nijd", g, params["w_se"]) + params["b_se"])
    return y * s


def init_params(key, cin, cout):
    ks = jax.random.split(key, 6)
    return {
        "w_conv": 0.1 * jax.random.normal(ks[0], (3, 3, cin, cout), jnp.float32),
        "b_conv": 0.1 * jax.random.normal(ks[1], (cout,), jnp.float32),
        "gamma": 1.0 + 0.1 * jax.random.normal(ks[2], (cout,), jnp.float32),
        "beta": 0.1 * jax.random.normal(ks[3], (cout,), jnp.float32),
        "w_se": 0.1 * jax.random.normal(ks[4], (cout, cout), jnp.float32),
        "b_se": 0.1 * jax.random.normal(ks[5], (cout,), jnp.float32),
    }


if __name__ == "__main__":
    N, Cin, H, W = 2, 4, 16, 16          # small shapes; module default out_feat=64
    Cout = 8                             # scaled down, even (SE_block's unused gn needs feat//2)

    key = jax.random.PRNGKey(0)
    kx, kp = jax.random.split(key)
    x = jax.random.normal(kx, (N, Cin, H, W), jnp.float32)             # NCHW like PyTorch
    params = init_params(kp, Cin, Cout)

    out = jax.block_until_ready(ada_block_forward(x, params))
    ref = ref_forward(x, params)

    assert out.shape == (N, H, W, Cout)
    max_err = float(jnp.max(jnp.abs(out - ref)))
    # bf16 MXU inputs (f32 accumulation) -> slightly looser tolerance than pure-f32.
    assert jnp.allclose(out, ref, rtol=3e-2, atol=3e-2), f"max abs err = {max_err}"

    print("KERNEL_OK")
</pallas_src>

<mosaic_0001>
module attributes {stable_mosaic.version = 11 : i64} {
  func.func @ada_block_kernel(%arg0: i32, %arg1: memref<1x326x4xf32, #tpu.memory_space<vmem>>, %arg2: memref<36x128xbf16, #tpu.memory_space<vmem>>, %arg3: memref<4x128xf32, #tpu.memory_space<vmem>>, %arg4: memref<128x128xbf16, #tpu.memory_space<vmem>>, %arg5: memref<1x288x128xf32, #tpu.memory_space<vmem>>) attributes {dimension_semantics = [#tpu.dimension_semantics<parallel>], iteration_bounds = array<i64: 2>, scalar_prefetch = 0 : i64, scratch_operands = 0 : i64, tpu.core_type = #tpu.core_type<tc>, window_params = [{transform_indices = @transform_0, window_bounds = array<i64: 1, 326, 4>}, {pipeline_mode = #tpu.pipeline_mode<synchronous>, transform_indices = @transform_1, window_bounds = array<i64: 36, 128>}, {pipeline_mode = #tpu.pipeline_mode<synchronous>, transform_indices = @transform_2, window_bounds = array<i64: 4, 128>}, {pipeline_mode = #tpu.pipeline_mode<synchronous>, transform_indices = @transform_3, window_bounds = array<i64: 128, 128>}, {transform_indices = @transform_4, window_bounds = array<i64: 1, 288, 128>}]} {
    %c0 = arith.constant 0 : index
    %c0_0 = arith.constant 0 : index
    %c0_1 = arith.constant 0 : index
    %0 = vector.load %arg1[%c0, %c0_0, %c0_1] : memref<1x326x4xf32, #tpu.memory_space<vmem>>, vector<1x288x4xf32>
    %1 = vector.shape_cast %0 : vector<1x288x4xf32> to vector<288x4xf32>
    %c0_2 = arith.constant 0 : index
    %c1 = arith.constant 1 : index
    %c0_3 = arith.constant 0 : index
    %2 = vector.load %arg1[%c0_2, %c1, %c0_3] : memref<1x326x4xf32, #tpu.memory_space<vmem>>, vector<1x288x4xf32>
    %3 = vector.shape_cast %2 : vector<1x288x4xf32> to vector<288x4xf32>
    %c0_4 = arith.constant 0 : index
    %c2 = arith.constant 2 : index
    %c0_5 = arith.constant 0 : index
    %4 = vector.load %arg1[%c0_4, %c2, %c0_5] : memref<1x326x4xf32, #tpu.memory_space<vmem>>, vector<1x288x4xf32>
    %5 = vector.shape_cast %4 : vector<1x288x4xf32> to vector<288x4xf32>
    %c0_6 = arith.constant 0 : index
    %c18 = arith.constant 18 : index
    %c0_7 = arith.constant 0 : index
    %6 = vector.load %arg1[%c0_6, %c18, %c0_7] : memref<1x326x4xf32, #tpu.memory_space<vmem>>, vector<1x288x4xf32>
    %7 = vector.shape_cast %6 : vector<1x288x4xf32> to vector<288x4xf32>
    %c0_8 = arith.constant 0 : index
    %c19 = arith.constant 19 : index
    %c0_9 = arith.constant 0 : index
    %8 = vector.load %arg1[%c0_8, %c19, %c0_9] : memref<1x326x4xf32, #tpu.memory_space<vmem>>, vector<1x288x4xf32>
    %9 = vector.shape_cast %8 : vector<1x288x4xf32> to vector<288x4xf32>
    %c0_10 = arith.constant 0 : index
    %c20 = arith.constant 20 : index
    %c0_11 = arith.constant 0 : index
    %10 = vector.load %arg1[%c0_10, %c20, %c0_11] : memref<1x326x4xf32, #tpu.memory_space<vmem>>, vector<1x288x4xf32>
    %11 = vector.shape_cast %10 : vector<1x288x4xf32> to vector<288x4xf32>
    %c0_12 = arith.constant 0 : index
    %c36 = arith.constant 36 : index
    %c0_13 = arith.constant 0 : index
    %12 = vector.load %arg1[%c0_12, %c36, %c0_13] : memref<1x326x4xf32, #tpu.memory_space<vmem>>, vector<1x288x4xf32>
    %13 = vector.shape_cast %12 : vector<1x288x4xf32> to vector<288x4xf32>
    %c0_14 = arith.constant 0 : index
    %c37 = arith.constant 37 : index
    %c0_15 = arith.constant 0 : index
    %14 = vector.load %arg1[%c0_14, %c37, %c0_15] : memref<1x326x4xf32, #tpu.memory_space<vmem>>, vector<1x288x4xf32>
    %15 = vector.shape_cast %14 : vector<1x288x4xf32> to vector<288x4xf32>
    %c0_16 = arith.constant 0 : index
    %c38 = arith.constant 38 : index
    %c0_17 = arith.constant 0 : index
    %16 = vector.load %arg1[%c0_16, %c38, %c0_17] : memref<1x326x4xf32, #tpu.memory_space<vmem>>, vector<1x288x4xf32>
    %17 = vector.shape_cast %16 : vector<1x288x4xf32> to vector<288x4xf32>
    %18 = tpu.concatenate %1, %3, %5, %7, %9, %11, %13, %15, %17 in 1 : vector<288x4xf32>, vector<288x4xf32>, vector<288x4xf32>, vector<288x4xf32>, vector<288x4xf32>, vector<288x4xf32>, vector<288x4xf32>, vector<288x4xf32>, vector<288x4xf32> -> vector<288x36xf32>
    %19 = arith.truncf %18 : vector<288x36xf32> to vector<288x36xbf16>
    %c0_18 = arith.constant 0 : index
    %c0_19 = arith.constant 0 : index
    %20 = vector.load %arg2[%c0_18, %c0_19] : memref<36x128xbf16, #tpu.memory_space<vmem>>, vector<36x128xbf16>
    %cst = arith.constant dense<0.000000e+00> : vector<288x128xf32>
    %21 = tpu.matmul %19, %20, %cst {dimension_numbers = #tpu.dot_dimension_numbers<[1], [0], [0], [1], [0, 0, 1, 1], [], []>} : vector<288x36xbf16>, vector<36x128xbf16>, vector<288x128xf32> -> vector<288x128xf32>
    %c0_20 = arith.constant 0 : index
    %c0_21 = arith.constant 0 : index
    %22 = vector.load %arg3[%c0_20, %c0_21] : memref<4x128xf32, #tpu.memory_space<vmem>>, vector<1x128xf32>
    %23 = vector.broadcast %22 : vector<1x128xf32> to vector<288x128xf32>
    %24 = arith.addf %21, %23 : vector<288x128xf32>
    %25 = tpu.iota {dimensions = array<i32: 0>} : vector<288x1xi32>
    %c18_i32 = arith.constant 18 : i32
    %c0_i32 = arith.constant 0 : i32
    %26 = arith.cmpi eq, %c18_i32, %c0_i32 : i32
    %c1_i32 = arith.constant 1 : i32
    %27 = arith.select %26, %c1_i32, %c18_i32 : i32
    %28 = vector.broadcast %27 : i32 to vector<288x1xi32>
    %29 = arith.remsi %25, %28 : vector<288x1xi32>
    %c0_i32_22 = arith.constant 0 : i32
    %30 = vector.broadcast %c0_i32_22 : i32 to vector<288x1xi32>
    %31 = arith.cmpi ne, %29, %30 : vector<288x1xi32>
    %c0_i32_23 = arith.constant 0 : i32
    %32 = vector.broadcast %c0_i32_23 : i32 to vector<288x1xi32>
    %33 = arith.cmpi slt, %29, %32 : vector<288x1xi32>
    %c0_i32_24 = arith.constant 0 : i32
    %34 = arith.cmpi slt, %27, %c0_i32_24 : i32
    %35 = vector.broadcast %34 : i1 to vector<288x1xi1>
    %36 = vector.broadcast %35 : vector<288x1xi1> to vector<288x1xi1>
    %37 = arith.xori %33, %36 : vector<288x1xi1>
    %38 = arith.andi %37, %31 : vector<288x1xi1>
    %39 = vector.broadcast %27 : i32 to vector<288x1xi32>
    %40 = arith.addi %29, %39 : vector<288x1xi32>
    %41 = arith.select %38, %40, %29 : vector<288x1xi1>, vector<288x1xi32>
    %c16_i32 = arith.constant 16 : i32
    %42 = vector.broadcast %c16_i32 : i32 to vector<288x1xi32>
    %43 = arith.cmpi slt, %41, %42 : vector<288x1xi32>
    %cst_25 = arith.constant 0.000000e+00 : f32
    %44 = vector.shape_cast %43 : vector<288x1xi1> to vector<288x1xi1>
    %45 = vector.broadcast %44 : vector<288x1xi1> to vector<288x128xi1>
    %46 = vector.broadcast %cst_25 : f32 to vector<288x128xf32>
    %47 = arith.select %45, %24, %46 : vector<288x128xi1>, vector<288x128xf32>
    %48 = vector.shape_cast %47 : vector<288x128xf32> to vector<1x288x128xf32>
    %cst_26 = arith.constant dense<0.000000e+00> : vector<1xf32>
    %49 = vector.multi_reduction <add>, %48, %cst_26 [1, 2] : vector<1x288x128xf32> to vector<1xf32>
    %50 = vector.shape_cast %49 : vector<1xf32> to vector<1x1x1xf32>
    %51 = vector.extract %50[0, 0, 0] : f32 from vector<1x1x1xf32>
    %52 = arith.mulf %47, %47 : vector<288x128xf32>
    %53 = vector.shape_cast %52 : vector<288x128xf32> to vector<1x288x128xf32>
    %cst_27 = arith.constant dense<0.000000e+00> : vector<1xf32>
    %54 = vector.multi_reduction <add>, %53, %cst_27 [1, 2] : vector<1x288x128xf32> to vector<1xf32>
    %55 = vector.shape_cast %54 : vector<1xf32> to vector<1x1x1xf32>
    %56 = vector.extract %55[0, 0, 0] : f32 from vector<1x1x1xf32>
    %cst_28 = arith.constant 2.048000e+03 : f32
    %57 = arith.divf %51, %cst_28 : f32
    %cst_29 = arith.constant 2.048000e+03 : f32
    %58 = arith.divf %56, %cst_29 : f32
    %59 = arith.mulf %57, %57 : f32
    %60 = arith.subf %58, %59 : f32
    %cst_30 = arith.constant 0.000000e+00 : f32
    %61 = arith.maximumf %60, %cst_30 : f32
    %cst_31 = arith.constant 9.99999974E-6 : f32
    %62 = arith.addf %61, %cst_31 : f32
    %63 = math.rsqrt %62 : f32
    %64 = vector.broadcast %57 : f32 to vector<288x128xf32>
    %65 = arith.subf %24, %64 : vector<288x128xf32>
    %66 = vector.broadcast %63 : f32 to vector<288x128xf32>
    %67 = arith.mulf %65, %66 : vector<288x128xf32>
    %c1_32 = arith.constant 1 : index
    %c0_33 = arith.constant 0 : index
    %68 = vector.load %arg3[%c1_32, %c0_33] : memref<4x128xf32, #tpu.memory_space<vmem>>, vector<1x128xf32>
    %69 = vector.broadcast %68 : vector<1x128xf32> to vector<288x128xf32>
    %70 = arith.mulf %67, %69 : vector<288x128xf32>
    %c2_34 = arith.constant 2 : index
    %c0_35 = arith.constant 0 : index
    %71 = vector.load %arg3[%c2_34, %c0_35] : memref<4x128xf32, #tpu.memory_space<vmem>>, vector<1x128xf32>
    %72 = vector.broadcast %71 : vector<1x128xf32> to vector<288x128xf32>
    %73 = arith.addf %70, %72 : vector<288x128xf32>
    %cst_36 = arith.constant 0.000000e+00 : f32
    %74 = vector.broadcast %cst_36 : f32 to vector<288x128xf32>
    %75 = arith.maximumf %73, %74 : vector<288x128xf32>
    %cst_37 = arith.constant 0.000000e+00 : f32
    %76 = vector.shape_cast %43 : vector<288x1xi1> to vector<288x1xi1>
    %77 = vector.broadcast %76 : vector<288x1xi1> to vector<288x128xi1>
    %78 = vector.broadcast %cst_37 : f32 to vector<288x128xf32>
    %79 = arith.select %77, %75, %78 : vector<288x128xi1>, vector<288x128xf32>
    %cst_38 = arith.constant dense<0.000000e+00> : vector<128xf32>
    %80 = vector.multi_reduction <add>, %79, %cst_38 [0] : vector<288x128xf32> to vector<128xf32>
    %81 = vector.shape_cast %80 : vector<128xf32> to vector<1x128xf32>
    %cst_39 = arith.constant 3.906250e-03 : f32
    %82 = vector.broadcast %cst_39 : f32 to vector<1x128xf32>
    %83 = arith.mulf %81, %82 : vector<1x128xf32>
    %84 = arith.truncf %83 : vector<1x128xf32> to vector<1x128xbf16>
    %c0_40 = arith.constant 0 : index
    %c0_41 = arith.constant 0 : index
    %85 = vector.load %arg4[%c0_40, %c0_41] : memref<128x128xbf16, #tpu.memory_space<vmem>>, vector<128x128xbf16>
    %cst_42 = arith.constant dense<0.000000e+00> : vector<1x128xf32>
    %86 = tpu.matmul %84, %85, %cst_42 {dimension_numbers = #tpu.dot_dimension_numbers<[1], [0], [0], [1], [0, 0, 1, 1], [], []>} : vector<1x128xbf16>, vector<128x128xbf16>, vector<1x128xf32> -> vector<1x128xf32>
    %c3 = arith.constant 3 : index
    %c0_43 = arith.constant 0 : index
    %87 = vector.load %arg3[%c3, %c0_43] : memref<4x128xf32, #tpu.memory_space<vmem>>, vector<1x128xf32>
    %88 = arith.addf %86, %87 : vector<1x128xf32>
    %89 = arith.negf %88 : vector<1x128xf32>
    %90 = math.exp %89 : vector<1x128xf32>
    %cst_44 = arith.constant 1.000000e+00 : f32
    %91 = vector.broadcast %cst_44 : f32 to vector<1x128xf32>
    %92 = arith.addf %91, %90 : vector<1x128xf32>
    %93 = arith.divf %91, %92 : vector<1x128xf32>
    %94 = vector.broadcast %93 : vector<1x128xf32> to vector<288x128xf32>
    %95 = arith.mulf %79, %94 : vector<288x128xf32>
    %c0_45 = arith.constant 0 : index
    %c0_46 = arith.constant 0 : index
    %c0_47 = arith.constant 0 : index
    %96 = vector.load %arg5[%c0_45, %c0_46, %c0_47] : memref<1x288x128xf32, #tpu.memory_space<vmem>>, vector<1x288x128xf32>
    %97 = vector.shape_cast %96 : vector<1x288x128xf32> to vector<288x128xf32>
    %98 = vector.shape_cast %95 : vector<288x128xf32> to vector<1x288x128xf32>
    tpu.vector_store %arg5[%c0_45, %c0_46, %c0_47], %98 {strides = array<i32>} : memref<1x288x128xf32, #tpu.memory_space<vmem>>, vector<1x288x128xf32>,
    return
  }
  func.func @transform_0(%arg0: i32) -> (i32, i32, i32) {
    %c0_i32 = arith.constant 0 : i32
    %c0_i32_0 = arith.constant 0 : i32
    %c0_i32_1 = arith.constant 0 : i32
    return %arg0, %c0_i32, %c0_i32_0 : i32, i32, i32
  }
  func.func @transform_1(%arg0: i32) -> (i32, i32) {
    %c0_i32 = arith.constant 0 : i32
    %c0_i32_0 = arith.constant 0 : i32
    %c0_i32_1 = arith.constant 0 : i32
    return %c0_i32, %c0_i32_0 : i32, i32
  }
  func.func @transform_2(%arg0: i32) -> (i32, i32) {
    %c0_i32 = arith.constant 0 : i32
    %c0_i32_0 = arith.constant 0 : i32
    %c0_i32_1 = arith.constant 0 : i32
    return %c0_i32, %c0_i32_0 : i32, i32
  }
  func.func @transform_3(%arg0: i32) -> (i32, i32) {
    %c0_i32 = arith.constant 0 : i32
    %c0_i32_0 = arith.constant 0 : i32
    %c0_i32_1 = arith.constant 0 : i32
    return %c0_i32, %c0_i32_0 : i32, i32
  }
  func.func @transform_4(%arg0: i32) -> (i32, i32, i32) {
    %c0_i32 = arith.constant 0 : i32
    %c0_i32_0 = arith.constant 0 : i32
    %c0_i32_1 = arith.constant 0 : i32
    return %arg0, %c0_i32, %c0_i32_0 : i32, i32, i32
  }
}

</mosaic_0001>

<llo_original>
// kernel: ada_block_forward.1
$region0: #{ada_block_forward.1}
  #allocation0 [shape = 'u32[]', space=smem, size = 0x4, offset = 0x4, fixed_abs, tag = 'smem constant byte address 0x4 - core index']
  #allocation1 [shape = 'u32[144,128]{1,0:T(1,128)}', space=vmem, size = 0x12000, scoped, tag = 'internal scratch']
  %s0 = inlined_call_operand.vmem [shape: f32[2,326,4], index: 0, kind: input, shape index: {}]
  %s1 = inlined_call_operand.vmem [shape: bf16[36,128], index: 1, kind: input, shape index: {}]
  %s2 = inlined_call_operand.vmem [shape: f32[4,128], index: 2, kind: input, shape index: {}]
  %s3 = inlined_call_operand.vmem [shape: bf16[128,128], index: 3, kind: input, shape index: {}]
  %s4 = inlined_call_operand.vmem [shape: f32[2,288,128], index: 4, kind: output, shape index: {}]
  %s5 = sld [smem:[#allocation0]]
  $region49: #{ada_block_forward.1} parent=0
    _
  %s7 = ssub.s32 1, %s5
  %s8 = scalar_select 0, %s7, %s5
  loop: start=0, step=1, limit=4
  $region2: #{ada_block_forward.1} parent=0 // loop_pre_header
    _
  $region3: #{ada_block_forward.1} parent=0 // loop_header
    %s10 = sphi 0, %s14
    %p11 = scmp.ge.s32.totalorder %s10, 4
    %s20 = sphi 0, %s22
    %s23 = sphi 0, %s20
    %s24 = sphi 0, %s23
    %s40 = sphi 0, %s24
    %s44 = sphi 0, %s44
    %s46 = sphi 0, %s44
    %s47 = sphi 0, %s46
    %s61 = sphi 0, %s47
    %s65 = sphi 0, %s65
    %s67 = sphi 0, %s65
    %s68 = sphi 0, %s67
    %s82 = sphi 0, %s68
    %s86 = sphi 0, %s86
    %s88 = sphi 0, %s86
    %s89 = sphi 0, %s88
    %s103 = sphi 0, %s89
    %s109 = sphi 0, %s111
    %s112 = sphi 0, %s109
    %s113 = sphi 0, %s112
    %s129 = sphi 0, %s113
  $region4: #{ada_block_forward.1} parent=0 // loop_header_branch
    %13 = sbr.rel (%p11) target = $region8
  $region5: #{ada_block_forward.1} parent=0 // loop_body
    %s15 = ssub.s32 %s10, 1
    %s16 = ssub.s32 %s10, 2
    %s17 = sadd.s32 %s10, 1
    %s18 = ssub.s32 %s10, %s17
    %p19 = scmp.eq.s32.totalorder %s18, 0
    %s21 = sadd.s32 %s20, 1
    %s22 = scalar_select %p19, %s20, %s21
    %p25 = pneg %p19
    %p26 = scmp.eq.s32.totalorder %s10, 1
    %p27 = por %p25, %p26
    %p28 = scmp.ne.s32.totalorder %s20, %s23
    %p29 = scmp.eq.s32.totalorder %s10, 0
    %p30 = por %p28, %p29
    %p31 = scmp.ne.s32.totalorder %s20, %s23
    %p32 = scmp.eq.s32.totalorder %s15, 1
    %p33 = por %p31, %p32
    %p34 = scmp.ne.s32.totalorder %s23, %s24
    %p35 = scmp.eq.s32.totalorder %s15, 0
    %p36 = por %p34, %p35
    %p37 = scmp.ne.s32.totalorder %s23, %s24
    %p38 = scmp.eq.s32.totalorder %s16, 1
    %p39 = por %p37, %p38
    %p41 = scmp.ne.s32.totalorder %s24, %s40
    %p42 = scmp.eq.s32.totalorder %s16, 0
    %p43 = por %p41, %p42
    %s45 = sadd.s32 %s44, 1
    %p48 = scmp.eq.s32.totalorder %s10, 1
    %p49 = scmp.ne.s32.totalorder %s44, %s46
    %p50 = scmp.eq.s32.totalorder %s10, 0
    %p51 = por %p49, %p50
    %p52 = scmp.ne.s32.totalorder %s44, %s46
    %p53 = scmp.eq.s32.totalorder %s15, 1
    %p54 = por %p52, %p53
    %p55 = scmp.ne.s32.totalorder %s46, %s47
    %p56 = scmp.eq.s32.totalorder %s15, 0
    %p57 = por %p55, %p56
    %p58 = scmp.ne.s32.totalorder %s46, %s47
    %p59 = scmp.eq.s32.totalorder %s16, 1
    %p60 = por %p58, %p59
    %p62 = scmp.ne.s32.totalorder %s47, %s61
    %p63 = scmp.eq.s32.totalorder %s16, 0
    %p64 = por %p62, %p63
    %s66 = sadd.s32 %s65, 1
    %p69 = scmp.eq.s32.totalorder %s10, 1
    %p70 = scmp.ne.s32.totalorder %s65, %s67
    %p71 = scmp.eq.s32.totalorder %s10, 0
    %p72 = por %p70, %p71
    %p73 = scmp.ne.s32.totalorder %s65, %s67
    %p74 = scmp.eq.s32.totalorder %s15, 1
    %p75 = por %p73, %p74
    %p76 = scmp.ne.s32.totalorder %s67, %s68
    %p77 = scmp.eq.s32.totalorder %s15, 0
    %p78 = por %p76, %p77
    %p79 = scmp.ne.s32.totalorder %s67, %s68
    %p80 = scmp.eq.s32.totalorder %s16, 1
    %p81 = por %p79, %p80
    %p83 = scmp.ne.s32.totalorder %s68, %s82
    %p84 = scmp.eq.s32.totalorder %s16, 0
    %p85 = por %p83, %p84
    %s87 = sadd.s32 %s86, 1
    %p90 = scmp.eq.s32.totalorder %s10, 1
    %p91 = scmp.ne.s32.totalorder %s86, %s88
    %p92 = scmp.eq.s32.totalorder %s10, 0
    %p93 = por %p91, %p92
    %p94 = scmp.ne.s32.totalorder %s86, %s88
    %p95 = scmp.eq.s32.totalorder %s15, 1
    %p96 = por %p94, %p95
    %p97 = scmp.ne.s32.totalorder %s88, %s89
    %p98 = scmp.eq.s32.totalorder %s15, 0
    %p99 = por %p97, %p98
    %p100 = scmp.ne.s32.totalorder %s88, %s89
    %p101 = scmp.eq.s32.totalorder %s16, 1
    %p102 = por %p100, %p101
    %p104 = scmp.ne.s32.totalorder %s89, %s103
    %p105 = scmp.eq.s32.totalorder %s16, 0
    %p106 = por %p104, %p105
    %s107 = ssub.s32 %s10, %s17
    %p108 = scmp.eq.s32.totalorder %s107, 0
    %s110 = sadd.s32 %s109, 1
    %s111 = scalar_select %p108, %s109, %s110
    %p114 = pneg %p108
    %p115 = scmp.eq.s32.totalorder %s10, 1
    %p116 = por %p114, %p115
    %p117 = scmp.ne.s32.totalorder %s109, %s112
    %p118 = scmp.eq.s32.totalorder %s10, 0
    %p119 = por %p117, %p118
    %p120 = scmp.ne.s32.totalorder %s109, %s112
    %p121 = scmp.eq.s32.totalorder %s15, 1
    %p122 = por %p120, %p121
    %p123 = scmp.ne.s32.totalorder %s112, %s113
    %p124 = scmp.eq.s32.totalorder %s15, 0
    %p125 = por %p123, %p124
    %p126 = scmp.ne.s32.totalorder %s112, %s113
    %p127 = scmp.eq.s32.totalorder %s16, 1
    %p128 = por %p126, %p127
    %p130 = scmp.ne.s32.totalorder %s113, %s129
    %p131 = scmp.eq.s32.totalorder %s16, 0
    %p132 = por %p130, %p131
    %p133 = scmp.le.s32.totalorder 1, %s10
    %p134 = scmp.lt.s32.totalorder %s10, 3
    %p135 = pnand %p133, %p134
    %p136 = pneg %p135
    // Predicated region
    $region9: #{ada_block_forward.1} parent=5 // pred_check
      _
    $region10: #{ada_block_forward.1} parent=5 // pred_check_branch
      %138 = sbr.rel (%p135) target = $region12
    $region11: #{ada_block_forward.1} parent=5 // pred_region
      %s139 = ssub.s32 %s10, 1
      // Predicated region
      $region13: #{ada_block_forward.1} parent=11 // pred_check
        %p140 = pneg %p57
      $region14: #{ada_block_forward.1} parent=11 // pred_check_branch
        %142 = sbr.rel (%p140) target = $region16
      $region15: #{ada_block_forward.1} parent=11 // pred_region
        _
      $region16: #{ada_block_forward.1} parent=11 // pred_fallthru
        _
      // Predicated region
      $region17: #{ada_block_forward.1} parent=11 // pred_check
        %p143 = pneg %p78
      $region18: #{ada_block_forward.1} parent=11 // pred_check_branch
        %145 = sbr.rel (%p143) target = $region20
      $region19: #{ada_block_forward.1} parent=11 // pred_region
        _
      $region20: #{ada_block_forward.1} parent=11 // pred_fallthru
        _
      // Predicated region
      $region21: #{ada_block_forward.1} parent=11 // pred_check
        %p146 = pneg %p99
      $region22: #{ada_block_forward.1} parent=11 // pred_check_branch
        %148 = sbr.rel (%p146) target = $region24
      $region23: #{ada_block_forward.1} parent=11 // pred_region
        _
      $region24: #{ada_block_forward.1} parent=11 // pred_fallthru
        _
    $region12: #{ada_block_forward.1} parent=5 // pred_fallthru
      _
    %p149 = scmp.lt.s32.totalorder %s10, 2
    // Predicated region
    $region25: #{ada_block_forward.1} parent=5 // pred_check
      %p150 = pneg %p149
    $region26: #{ada_block_forward.1} parent=5 // pred_check_branch
      %152 = sbr.rel (%p150) target = $region28
    $region27: #{ada_block_forward.1} parent=5 // pred_region
      // Predicated region
      $region29: #{ada_block_forward.1} parent=27 // pred_check
        %p153 = pneg %p30
      $region30: #{ada_block_forward.1} parent=27 // pred_check_branch
        %155 = sbr.rel (%p153) target = $region32
      $region31: #{ada_block_forward.1} parent=27 // pred_region
        %p156 = scmp.lt.s32.totalorder %s10, 1
        %s157 = scalar_select %p156, %s10, 1
        %s158 = smul.addr %s157, 41
        %s159 = smul.addr %s158, 8
        %s160 = scalar_lea.vmem %s0, %s159
      $region32: #{ada_block_forward.1} parent=27 // pred_fallthru
        _
    $region28: #{ada_block_forward.1} parent=5 // pred_fallthru
      _
    %p161 = scmp.le.s32.totalorder 1, %s10
    %p162 = scmp.lt.s32.totalorder %s10, 3
    %p163 = pnand %p161, %p162
    %p164 = pneg %p163
    // Predicated region
    $region33: #{ada_block_forward.1} parent=5 // pred_check
      _
    $region34: #{ada_block_forward.1} parent=5 // pred_check_branch
      %166 = sbr.rel (%p163) target = $region36
    $region35: #{ada_block_forward.1} parent=5 // pred_region
      %s167 = ssub.s32 %s10, 1
      %p168 = scmp.lt.s32.totalorder %s15, 1
      %s169 = scalar_select %p168, %s15, 1
      %s170 = smul.addr %s169, 41
      %s171 = smul.addr %s170, 8
      %s172 = scalar_lea.vmem %s0, %s171
      %p173 = pneg %p36
      %p174 = pneg %p33
      %p175 = pneg %p57
      %p176 = pneg %p54
      %p177 = pneg %p78
      %p178 = pneg %p75
      %p179 = pneg %p99
      %p180 = pneg %p96
      %p181 = pneg %p125
      %p182 = pneg %p122
      %p183 = scmp.lt.s32.totalorder %s15, 1
      %s184 = scalar_select %p183, %s15, 1
      %s185 = smul.addr %s184, 36
      %s186 = smul.addr %s185, 8
      %s187 = scalar_lea.vmem %s4, %s186
      %p188 = scmp.lt.s32.totalorder %s15, 1
      %s189 = scalar_select %p188, %s15, 1
      %s190 = smul.addr %s189, 41
      %s191 = smul.addr %s190, 8
      %s192 = scalar_lea.vmem %s0, %s191
      %p193 = scmp.lt.s32.totalorder %s15, 1
      %s194 = scalar_select %p193, %s15, 1
      %s195 = smul.addr %s194, 36
      %s196 = smul.addr %s195, 8
      %s197 = scalar_lea.vmem %s4, %s196
      %v199 = vld [vmem:[%s192] sm:$0xff]
      %v200 = vld [vmem:[%s192 + $0x8] sm:$0xff]
      %v201 = vld [vmem:[%s192 + $0x10] sm:$0xff]
      %v202 = vld [vmem:[%s192 + $0x18] sm:$0xff]
      %v203 = vld [vmem:[%s192 + $0x20] sm:$0xff]
      %v204 = vld [vmem:[%s192 + $0x28] sm:$0xff]
      %v205 = vld [vmem:[%s192 + $0x30] sm:$0xff]
      %v206 = vld [vmem:[%s192 + $0x38] sm:$0xff]
      %v207 = vld [vmem:[%s192 + $0x40] sm:$0xff]
      %v208 = vld [vmem:[%s192 + $0x48] sm:$0xff]
      %v209 = vld [vmem:[%s192 + $0x50] sm:$0xff]
      %v210 = vld [vmem:[%s192 + $0x58] sm:$0xff]
      %v211 = vld [vmem:[%s192 + $0x60] sm:$0xff]
      %v212 = vld [vmem:[%s192 + $0x68] sm:$0xff]
      %v213 = vld [vmem:[%s192 + $0x70] sm:$0xff]
      %v214 = vld [vmem:[%s192 + $0x78] sm:$0xff]
      %v215 = vld [vmem:[%s192 + $0x80] sm:$0xff]
      %v216 = vld [vmem:[%s192 + $0x88] sm:$0xff]
      %v217 = vld [vmem:[%s192 + $0x90] sm:$0xff]
      %v218 = vld [vmem:[%s192 + $0x98] sm:$0xff]
      %v219 = vld [vmem:[%s192 + $0xa0] sm:$0xff]
      %v220 = vld [vmem:[%s192 + $0xa8] sm:$0xff]
      %v221 = vld [vmem:[%s192 + $0xb0] sm:$0xff]
      %v222 = vld [vmem:[%s192 + $0xb8] sm:$0xff]
      %v223 = vld [vmem:[%s192 + $0xc0] sm:$0xff]
      %v224 = vld [vmem:[%s192 + $0xc8] sm:$0xff]
      %v225 = vld [vmem:[%s192 + $0xd0] sm:$0xff]
      %v226 = vld [vmem:[%s192 + $0xd8] sm:$0xff]
      %v227 = vld [vmem:[%s192 + $0xe0] sm:$0xff]
      %v228 = vld [vmem:[%s192 + $0xe8] sm:$0xff]
      %v229 = vld [vmem:[%s192 + $0xf0] sm:$0xff]
      %v230 = vld [vmem:[%s192 + $0xf8] sm:$0xff]
      %v231 = vld [vmem:[%s192 + $0x100] sm:$0xff]
      %v232 = vld [vmem:[%s192 + $0x108] sm:$0xff]
      %v233 = vld [vmem:[%s192 + $0x110] sm:$0xff]
      %v234 = vld [vmem:[%s192 + $0x118] sm:$0xff]
      %v235 = vld [vmem:[%s192 + $0x1] sm:$0xff]
      %v236 = vld [vmem:[%s192 + $0x9] sm:$0xff]
      %v237 = vld [vmem:[%s192 + $0x11] sm:$0xff]
      %v238 = vld [vmem:[%s192 + $0x19] sm:$0xff]
      %v239 = vld [vmem:[%s192 + $0x21] sm:$0xff]
      %v240 = vld [vmem:[%s192 + $0x29] sm:$0xff]
      %v241 = vld [vmem:[%s192 + $0x31] sm:$0xff]
      %v242 = vld [vmem:[%s192 + $0x39] sm:$0xff]
      %v243 = vld [vmem:[%s192 + $0x41] sm:$0xff]
      %v244 = vld [vmem:[%s192 + $0x49] sm:$0xff]
      %v245 = vld [vmem:[%s192 + $0x51] sm:$0xff]
      %v246 = vld [vmem:[%s192 + $0x59] sm:$0xff]
      %v247 = vld [vmem:[%s192 + $0x61] sm:$0xff]
      %v248 = vld [vmem:[%s192 + $0x69] sm:$0xff]
      %v249 = vld [vmem:[%s192 + $0x71] sm:$0xff]
      %v250 = vld [vmem:[%s192 + $0x79] sm:$0xff]
      %v251 = vld [vmem:[%s192 + $0x81] sm:$0xff]
      %v252 = vld [vmem:[%s192 + $0x89] sm:$0xff]
      %v253 = vld [vmem:[%s192 + $0x91] sm:$0xff]
      %v254 = vld [vmem:[%s192 + $0x99] sm:$0xff]
      %v255 = vld [vmem:[%s192 + $0xa1] sm:$0xff]
      %v256 = vld [vmem:[%s192 + $0xa9] sm:$0xff]
      %v257 = vld [vmem:[%s192 + $0xb1] sm:$0xff]
      %v258 = vld [vmem:[%s192 + $0xb9] sm:$0xff]
      %v259 = vld [vmem:[%s192 + $0xc1] sm:$0xff]
      %v260 = vld [vmem:[%s192 + $0xc9] sm:$0xff]
      %v261 = vld [vmem:[%s192 + $0xd1] sm:$0xff]
      %v262 = vld [vmem:[%s192 + $0xd9] sm:$0xff]
      %v263 = vld [vmem:[%s192 + $0xe1] sm:$0xff]
      %v264 = vld [vmem:[%s192 + $0xe9] sm:$0xff]
      %v265 = vld [vmem:[%s192 + $0xf1] sm:$0xff]
      %v266 = vld [vmem:[%s192 + $0xf9] sm:$0xff]
      %v267 = vld [vmem:[%s192 + $0x101] sm:$0xff]
      %v268 = vld [vmem:[%s192 + $0x109] sm:$0xff]
      %v269 = vld [vmem:[%s192 + $0x111] sm:$0xff]
      %v270 = vld [vmem:[%s192 + $0x119] sm:$0xff]
      %v271 = vld [vmem:[%s192 + $0x2] sm:$0xff]
      %v272 = vld [vmem:[%s192 + $0xa] sm:$0xff]
      %v273 = vld [vmem:[%s192 + $0x12] sm:$0xff]
      %v274 = vld [vmem:[%s192 + $0x1a] sm:$0xff]
      %v275 = vld [vmem:[%s192 + $0x22] sm:$0xff]
      %v276 = vld [vmem:[%s192 + $0x2a] sm:$0xff]
      %v277 = vld [vmem:[%s192 + $0x32] sm:$0xff]
      %v278 = vld [vmem:[%s192 + $0x3a] sm:$0xff]
      %v279 = vld [vmem:[%s192 + $0x42] sm:$0xff]
      %v280 = vld [vmem:[%s192 + $0x4a] sm:$0xff]
      %v281 = vld [vmem:[%s192 + $0x52] sm:$0xff]
      %v282 = vld [vmem:[%s192 + $0x5a] sm:$0xff]
      %v283 = vld [vmem:[%s192 + $0x62] sm:$0xff]
      %v284 = vld [vmem:[%s192 + $0x6a] sm:$0xff]
      %v285 = vld [vmem:[%s192 + $0x72] sm:$0xff]
      %v286 = vld [vmem:[%s192 + $0x7a] sm:$0xff]
      %v287 = vld [vmem:[%s192 + $0x82] sm:$0xff]
      %v288 = vld [vmem:[%s192 + $0x8a] sm:$0xff]
      %v289 = vld [vmem:[%s192 + $0x92] sm:$0xff]
      %v290 = vld [vmem:[%s192 + $0x9a] sm:$0xff]
      %v291 = vld [vmem:[%s192 + $0xa2] sm:$0xff]
      %v292 = vld [vmem:[%s192 + $0xaa] sm:$0xff]
      %v293 = vld [vmem:[%s192 + $0xb2] sm:$0xff]
      %v294 = vld [vmem:[%s192 + $0xba] sm:$0xff]
      %v295 = vld [vmem:[%s192 + $0xc2] sm:$0xff]
      %v296 = vld [vmem:[%s192 + $0xca] sm:$0xff]
      %v297 = vld [vmem:[%s192 + $0xd2] sm:$0xff]
      %v298 = vld [vmem:[%s192 + $0xda] sm:$0xff]
      %v299 = vld [vmem:[%s192 + $0xe2] sm:$0xff]
      %v300 = vld [vmem:[%s192 + $0xea] sm:$0xff]
      %v301 = vld [vmem:[%s192 + $0xf2] sm:$0xff]
      %v302 = vld [vmem:[%s192 + $0xfa] sm:$0xff]
      %v303 = vld [vmem:[%s192 + $0x102] sm:$0xff]
      %v304 = vld [vmem:[%s192 + $0x10a] sm:$0xff]
      %v305 = vld [vmem:[%s192 + $0x112] sm:$0xff]
      %v306 = vld [vmem:[%s192 + $0x11a] sm:$0xff]
      %v307 = vld [vmem:[%s192 + $0x122] sm:$0xff]
      %v308 = vld [vmem:[%s192 + $0x12a] sm:$0xff]
      %v309 = vld [vmem:[%s192 + $0x13] sm:$0xff]
      %v310 = vld [vmem:[%s192 + $0x1b] sm:$0xff]
      %v311 = vld [vmem:[%s192 + $0x23] sm:$0xff]
      %v312 = vld [vmem:[%s192 + $0x2b] sm:$0xff]
      %v313 = vld [vmem:[%s192 + $0x33] sm:$0xff]
      %v314 = vld [vmem:[%s192 + $0x3b] sm:$0xff]
      %v315 = vld [vmem:[%s192 + $0x43] sm:$0xff]
      %v316 = vld [vmem:[%s192 + $0x4b] sm:$0xff]
      %v317 = vld [vmem:[%s192 + $0x53] sm:$0xff]
      %v318 = vld [vmem:[%s192 + $0x5b] sm:$0xff]
      %v319 = vld [vmem:[%s192 + $0x63] sm:$0xff]
      %v320 = vld [vmem:[%s192 + $0x6b] sm:$0xff]
      %v321 = vld [vmem:[%s192 + $0x73] sm:$0xff]
      %v322 = vld [vmem:[%s192 + $0x7b] sm:$0xff]
      %v323 = vld [vmem:[%s192 + $0x83] sm:$0xff]
      %v324 = vld [vmem:[%s192 + $0x8b] sm:$0xff]
      %v325 = vld [vmem:[%s192 + $0x93] sm:$0xff]
      %v326 = vld [vmem:[%s192 + $0x9b] sm:$0xff]
      %v327 = vld [vmem:[%s192 + $0xa3] sm:$0xff]
      %v328 = vld [vmem:[%s192 + $0xab] sm:$0xff]
      %v329 = vld [vmem:[%s192 + $0xb3] sm:$0xff]
      %v330 = vld [vmem:[%s192 + $0xbb] sm:$0xff]
      %v331 = vld [vmem:[%s192 + $0xc3] sm:$0xff]
      %v332 = vld [vmem:[%s192 + $0xcb] sm:$0xff]
      %v333 = vld [vmem:[%s192 + $0xd3] sm:$0xff]
      %v334 = vld [vmem:[%s192 + $0xdb] sm:$0xff]
      %v335 = vld [vmem:[%s192 + $0xe3] sm:$0xff]
      %v336 = vld [vmem:[%s192 + $0xeb] sm:$0xff]
      %v337 = vld [vmem:[%s192 + $0xf3] sm:$0xff]
      %v338 = vld [vmem:[%s192 + $0xfb] sm:$0xff]
      %v339 = vld [vmem:[%s192 + $0x103] sm:$0xff]
      %v340 = vld [vmem:[%s192 + $0x10b] sm:$0xff]
      %v341 = vld [vmem:[%s192 + $0x113] sm:$0xff]
      %v342 = vld [vmem:[%s192 + $0x11b] sm:$0xff]
      %v343 = vld [vmem:[%s192 + $0x123] sm:$0xff]
      %v344 = vld [vmem:[%s192 + $0x12b] sm:$0xff]
      %v345 = vld [vmem:[%s192 + $0x14] sm:$0xff]
      %v346 = vld [vmem:[%s192 + $0x1c] sm:$0xff]
      %v347 = vld [vmem:[%s192 + $0x24] sm:$0xff]
      %v348 = vld [vmem:[%s192 + $0x2c] sm:$0xff]
      %v349 = vld [vmem:[%s192 + $0x34] sm:$0xff]
      %v350 = vld [vmem:[%s192 + $0x3c] sm:$0xff]
      %v351 = vld [vmem:[%s192 + $0x44] sm:$0xff]
      %v352 = vld [vmem:[%s192 + $0x4c] sm:$0xff]
      %v353 = vld [vmem:[%s192 + $0x54] sm:$0xff]
      %v354 = vld [vmem:[%s192 + $0x5c] sm:$0xff]
      %v355 = vld [vmem:[%s192 + $0x64] sm:$0xff]
      %v356 = vld [vmem:[%s192 + $0x6c] sm:$0xff]
      %v357 = vld [vmem:[%s192 + $0x74] sm:$0xff]
      %v358 = vld [vmem:[%s192 + $0x7c] sm:$0xff]
      %v359 = vld [vmem:[%s192 + $0x84] sm:$0xff]
      %v360 = vld [vmem:[%s192 + $0x8c] sm:$0xff]
      %v361 = vld [vmem:[%s192 + $0x94] sm:$0xff]
      %v362 = vld [vmem:[%s192 + $0x9c] sm:$0xff]
      %v363 = vld [vmem:[%s192 + $0xa4] sm:$0xff]
      %v364 = vld [vmem:[%s192 + $0xac] sm:$0xff]
      %v365 = vld [vmem:[%s192 + $0xb4] sm:$0xff]
      %v366 = vld [vmem:[%s192 + $0xbc] sm:$0xff]
      %v367 = vld [vmem:[%s192 + $0xc4] sm:$0xff]
      %v368 = vld [vmem:[%s192 + $0xcc] sm:$0xff]
      %v369 = vld [vmem:[%s192 + $0xd4] sm:$0xff]
      %v370 = vld [vmem:[%s192 + $0xdc] sm:$0xff]
      %v371 = vld [vmem:[%s192 + $0xe4] sm:$0xff]
      %v372 = vld [vmem:[%s192 + $0xec] sm:$0xff]
      %v373 = vld [vmem:[%s192 + $0xf4] sm:$0xff]
      %v374 = vld [vmem:[%s192 + $0xfc] sm:$0xff]
      %v375 = vld [vmem:[%s192 + $0x104] sm:$0xff]
      %v376 = vld [vmem:[%s192 + $0x10c] sm:$0xff]
      %v377 = vld [vmem:[%s192 + $0x114] sm:$0xff]
      %v378 = vld [vmem:[%s192 + $0x11c] sm:$0xff]
      %v379 = vld [vmem:[%s192 + $0x124] sm:$0xff]
      %v380 = vld [vmem:[%s192 + $0x12c] sm:$0xff]
      %v381 = vld [vmem:[%s192 + $0x134] sm:$0xff]
      %v382 = vld [vmem:[%s192 + $0x13c] sm:$0xff]
      %v383 = vld [vmem:[%s192 + $0x25] sm:$0xff]
      %v384 = vld [vmem:[%s192 + $0x2d] sm:$0xff]
      %v385 = vld [vmem:[%s192 + $0x35] sm:$0xff]
      %v386 = vld [vmem:[%s192 + $0x3d] sm:$0xff]
      %v387 = vld [vmem:[%s192 + $0x45] sm:$0xff]
      %v388 = vld [vmem:[%s192 + $0x4d] sm:$0xff]
      %v389 = vld [vmem:[%s192 + $0x55] sm:$0xff]
      %v390 = vld [vmem:[%s192 + $0x5d] sm:$0xff]
      %v391 = vld [vmem:[%s192 + $0x65] sm:$0xff]
      %v392 = vld [vmem:[%s192 + $0x6d] sm:$0xff]
      %v393 = vld [vmem:[%s192 + $0x75] sm:$0xff]
      %v394 = vld [vmem:[%s192 + $0x7d] sm:$0xff]
      %v395 = vld [vmem:[%s192 + $0x85] sm:$0xff]
      %v396 = vld [vmem:[%s192 + $0x8d] sm:$0xff]
      %v397 = vld [vmem:[%s192 + $0x95] sm:$0xff]
      %v398 = vld [vmem:[%s192 + $0x9d] sm:$0xff]
      %v399 = vld [vmem:[%s192 + $0xa5] sm:$0xff]
      %v400 = vld [vmem:[%s192 + $0xad] sm:$0xff]
      %v401 = vld [vmem:[%s192 + $0xb5] sm:$0xff]
      %v402 = vld [vmem:[%s192 + $0xbd] sm:$0xff]
      %v403 = vld [vmem:[%s192 + $0xc5] sm:$0xff]
      %v404 = vld [vmem:[%s192 + $0xcd] sm:$0xff]
      %v405 = vld [vmem:[%s192 + $0xd5] sm:$0xff]
      %v406 = vld [vmem:[%s192 + $0xdd] sm:$0xff]
      %v407 = vld [vmem:[%s192 + $0xe5] sm:$0xff]
      %v408 = vld [vmem:[%s192 + $0xed] sm:$0xff]
      %v409 = vld [vmem:[%s192 + $0xf5] sm:$0xff]
      %v410 = vld [vmem:[%s192 + $0xfd] sm:$0xff]
      %v411 = vld [vmem:[%s192 + $0x105] sm:$0xff]
      %v412 = vld [vmem:[%s192 + $0x10d] sm:$0xff]
      %v413 = vld [vmem:[%s192 + $0x115] sm:$0xff]
      %v414 = vld [vmem:[%s192 + $0x11d] sm:$0xff]
      %v415 = vld [vmem:[%s192 + $0x125] sm:$0xff]
      %v416 = vld [vmem:[%s192 + $0x12d] sm:$0xff]
      %v417 = vld [vmem:[%s192 + $0x135] sm:$0xff]
      %v418 = vld [vmem:[%s192 + $0x13d] sm:$0xff]
      %v419 = vld [vmem:[%s192 + $0x26] sm:$0xff]
      %v420 = vld [vmem:[%s192 + $0x2e] sm:$0xff]
      %v421 = vld [vmem:[%s192 + $0x36] sm:$0xff]
      %v422 = vld [vmem:[%s192 + $0x3e] sm:$0xff]
      %v423 = vld [vmem:[%s192 + $0x46] sm:$0xff]
      %v424 = vld [vmem:[%s192 + $0x4e] sm:$0xff]
      %v425 = vld [vmem:[%s192 + $0x56] sm:$0xff]
      %v426 = vld [vmem:[%s192 + $0x5e] sm:$0xff]
      %v427 = vld [vmem:[%s192 + $0x66] sm:$0xff]
      %v428 = vld [vmem:[%s192 + $0x6e] sm:$0xff]
      %v429 = vld [vmem:[%s192 + $0x76] sm:$0xff]
      %v430 = vld [vmem:[%s192 + $0x7e] sm:$0xff]
      %v431 = vld [vmem:[%s192 + $0x86] sm:$0xff]
      %v432 = vld [vmem:[%s192 + $0x8e] sm:$0xff]
      %v433 = vld [vmem:[%s192 + $0x96] sm:$0xff]
      %v434 = vld [vmem:[%s192 + $0x9e] sm:$0xff]
      %v435 = vld [vmem:[%s192 + $0xa6] sm:$0xff]
      %v436 = vld [vmem:[%s192 + $0xae] sm:$0xff]
      %v437 = vld [vmem:[%s192 + $0xb6] sm:$0xff]
      %v438 = vld [vmem:[%s192 + $0xbe] sm:$0xff]
      %v439 = vld [vmem:[%s192 + $0xc6] sm:$0xff]
      %v440 = vld [vmem:[%s192 + $0xce] sm:$0xff]
      %v441 = vld [vmem:[%s192 + $0xd6] sm:$0xff]
      %v442 = vld [vmem:[%s192 + $0xde] sm:$0xff]
      %v443 = vld [vmem:[%s192 + $0xe6] sm:$0xff]
      %v444 = vld [vmem:[%s192 + $0xee] sm:$0xff]
      %v445 = vld [vmem:[%s192 + $0xf6] sm:$0xff]
      %v446 = vld [vmem:[%s192 + $0xfe] sm:$0xff]
      %v447 = vld [vmem:[%s192 + $0x106] sm:$0xff]
      %v448 = vld [vmem:[%s192 + $0x10e] sm:$0xff]
      %v449 = vld [vmem:[%s192 + $0x116] sm:$0xff]
      %v450 = vld [vmem:[%s192 + $0x11e] sm:$0xff]
      %v451 = vld [vmem:[%s192 + $0x126] sm:$0xff]
      %v452 = vld [vmem:[%s192 + $0x12e] sm:$0xff]
      %v453 = vld [vmem:[%s192 + $0x136] sm:$0xff]
      %v454 = vld [vmem:[%s192 + $0x13e] sm:$0xff]
      %491 = vrot.lane.b32.xlu0 %v235, 4
      %v492 = vpop.permute.xlu0 %491
      %493 = vrot.lane.b32.xlu0 %v236, 4
      %v494 = vpop.permute.xlu0 %493
      %495 = vrot.lane.b32.xlu0 %v237, 4
      %v496 = vpop.permute.xlu0 %495
      %497 = vrot.lane.b32.xlu0 %v238, 4
      %v498 = vpop.permute.xlu0 %497
      %499 = vrot.lane.b32.xlu0 %v239, 4
      %v500 = vpop.permute.xlu0 %499
      %501 = vrot.lane.b32.xlu0 %v240, 4
      %v502 = vpop.permute.xlu0 %501
      %503 = vrot.lane.b32.xlu0 %v241, 4
      %v504 = vpop.permute.xlu0 %503
      %505 = vrot.lane.b32.xlu0 %v242, 4
      %v506 = vpop.permute.xlu0 %505
      %507 = vrot.lane.b32.xlu0 %v243, 4
      %v508 = vpop.permute.xlu0 %507
      %509 = vrot.lane.b32.xlu0 %v244, 4
      %v510 = vpop.permute.xlu0 %509
      %511 = vrot.lane.b32.xlu0 %v245, 4
      %v512 = vpop.permute.xlu0 %511
      %513 = vrot.lane.b32.xlu0 %v246, 4
      %v514 = vpop.permute.xlu0 %513
      %515 = vrot.lane.b32.xlu0 %v247, 4
      %v516 = vpop.permute.xlu0 %515
      %517 = vrot.lane.b32.xlu0 %v248, 4
      %v518 = vpop.permute.xlu0 %517
      %519 = vrot.lane.b32.xlu0 %v249, 4
      %v520 = vpop.permute.xlu0 %519
      %521 = vrot.lane.b32.xlu0 %v250, 4
      %v522 = vpop.permute.xlu0 %521
      %523 = vrot.lane.b32.xlu0 %v251, 4
      %v524 = vpop.permute.xlu0 %523
      %525 = vrot.lane.b32.xlu0 %v252, 4
      %v526 = vpop.permute.xlu0 %525
      %527 = vrot.lane.b32.xlu0 %v253, 4
      %v528 = vpop.permute.xlu0 %527
      %529 = vrot.lane.b32.xlu0 %v254, 4
      %v530 = vpop.permute.xlu0 %529
      %531 = vrot.lane.b32.xlu0 %v255, 4
      %v532 = vpop.permute.xlu0 %531
      %533 = vrot.lane.b32.xlu0 %v256, 4
      %v534 = vpop.permute.xlu0 %533
      %535 = vrot.lane.b32.xlu0 %v257, 4
      %v536 = vpop.permute.xlu0 %535
      %537 = vrot.lane.b32.xlu0 %v258, 4
      %v538 = vpop.permute.xlu0 %537
      %539 = vrot.lane.b32.xlu0 %v259, 4
      %v540 = vpop.permute.xlu0 %539
      %541 = vrot.lane.b32.xlu0 %v260, 4
      %v542 = vpop.permute.xlu0 %541
      %543 = vrot.lane.b32.xlu0 %v261, 4
      %v544 = vpop.permute.xlu0 %543
      %545 = vrot.lane.b32.xlu0 %v262, 4
      %v546 = vpop.permute.xlu0 %545
      %547 = vrot.lane.b32.xlu0 %v263, 4
      %v548 = vpop.permute.xlu0 %547
      %549 = vrot.lane.b32.xlu0 %v264, 4
      %v550 = vpop.permute.xlu0 %549
      %551 = vrot.lane.b32.xlu0 %v265, 4
      %v552 = vpop.permute.xlu0 %551
      %553 = vrot.lane.b32.xlu0 %v266, 4
      %v554 = vpop.permute.xlu0 %553
      %555 = vrot.lane.b32.xlu0 %v267, 4
      %v556 = vpop.permute.xlu0 %555
      %557 = vrot.lane.b32.xlu0 %v268, 4
      %v558 = vpop.permute.xlu0 %557
      %559 = vrot.lane.b32.xlu0 %v269, 4
      %v560 = vpop.permute.xlu0 %559
      %561 = vrot.lane.b32.xlu0 %v270, 4
      %v562 = vpop.permute.xlu0 %561
      %635 = vrot.lane.b32.xlu0 %v271, 8
      %v636 = vpop.permute.xlu0 %635
      %637 = vrot.lane.b32.xlu0 %v272, 8
      %v638 = vpop.permute.xlu0 %637
      %639 = vrot.lane.b32.xlu0 %v273, 8
      %v640 = vpop.permute.xlu0 %639
      %641 = vrot.lane.b32.xlu0 %v274, 8
      %v642 = vpop.permute.xlu0 %641
      %643 = vrot.lane.b32.xlu0 %v275, 8
      %v644 = vpop.permute.xlu0 %643
      %645 = vrot.lane.b32.xlu0 %v276, 8
      %v646 = vpop.permute.xlu0 %645
      %647 = vrot.lane.b32.xlu0 %v277, 8
      %v648 = vpop.permute.xlu0 %647
      %649 = vrot.lane.b32.xlu0 %v278, 8
      %v650 = vpop.permute.xlu0 %649
      %651 = vrot.lane.b32.xlu0 %v279, 8
      %v652 = vpop.permute.xlu0 %651
      %653 = vrot.lane.b32.xlu0 %v280, 8
      %v654 = vpop.permute.xlu0 %653
      %655 = vrot.lane.b32.xlu0 %v281, 8
      %v656 = vpop.permute.xlu0 %655
      %657 = vrot.lane.b32.xlu0 %v282, 8
      %v658 = vpop.permute.xlu0 %657
      %659 = vrot.lane.b32.xlu0 %v283, 8
      %v660 = vpop.permute.xlu0 %659
      %661 = vrot.lane.b32.xlu0 %v284, 8
      %v662 = vpop.permute.xlu0 %661
      %663 = vrot.lane.b32.xlu0 %v285, 8
      %v664 = vpop.permute.xlu0 %663
      %665 = vrot.lane.b32.xlu0 %v286, 8
      %v666 = vpop.permute.xlu0 %665
      %667 = vrot.lane.b32.xlu0 %v287, 8
      %v668 = vpop.permute.xlu0 %667
      %669 = vrot.lane.b32.xlu0 %v288, 8
      %v670 = vpop.permute.xlu0 %669
      %671 = vrot.lane.b32.xlu0 %v289, 8
      %v672 = vpop.permute.xlu0 %671
      %673 = vrot.lane.b32.xlu0 %v290, 8
      %v674 = vpop.permute.xlu0 %673
      %675 = vrot.lane.b32.xlu0 %v291, 8
      %v676 = vpop.permute.xlu0 %675
      %677 = vrot.lane.b32.xlu0 %v292, 8
      %v678 = vpop.permute.xlu0 %677
      %679 = vrot.lane.b32.xlu0 %v293, 8
      %v680 = vpop.permute.xlu0 %679
      %681 = vrot.lane.b32.xlu0 %v294, 8
      %v682 = vpop.permute.xlu0 %681
      %683 = vrot.lane.b32.xlu0 %v295, 8
      %v684 = vpop.permute.xlu0 %683
      %685 = vrot.lane.b32.xlu0 %v296, 8
      %v686 = vpop.permute.xlu0 %685
      %687 = vrot.lane.b32.xlu0 %v297, 8
      %v688 = vpop.permute.xlu0 %687
      %689 = vrot.lane.b32.xlu0 %v298, 8
      %v690 = vpop.permute.xlu0 %689
      %691 = vrot.lane.b32.xlu0 %v299, 8
      %v692 = vpop.permute.xlu0 %691
      %693 = vrot.lane.b32.xlu0 %v300, 8
      %v694 = vpop.permute.xlu0 %693
      %695 = vrot.lane.b32.xlu0 %v301, 8
      %v696 = vpop.permute.xlu0 %695
      %697 = vrot.lane.b32.xlu0 %v302, 8
      %v698 = vpop.permute.xlu0 %697
      %699 = vrot.lane.b32.xlu0 %v303, 8
      %v700 = vpop.permute.xlu0 %699
      %701 = vrot.lane.b32.xlu0 %v304, 8
      %v702 = vpop.permute.xlu0 %701
      %703 = vrot.lane.b32.xlu0 %v305, 8
      %v704 = vpop.permute.xlu0 %703
      %705 = vrot.lane.b32.xlu0 %v306, 8
      %v706 = vpop.permute.xlu0 %705
      %745 = vrot.lane.b32.xlu0 %v273, 12
      %v746 = vpop.permute.xlu0 %745
      %747 = vrot.lane.b32.xlu0 %v274, 12
      %v748 = vpop.permute.xlu0 %747
      %749 = vrot.lane.b32.xlu0 %v275, 12
      %v750 = vpop.permute.xlu0 %749
      %751 = vrot.lane.b32.xlu0 %v276, 12
      %v752 = vpop.permute.xlu0 %751
      %753 = vrot.lane.b32.xlu0 %v277, 12
      %v754 = vpop.permute.xlu0 %753
      %755 = vrot.lane.b32.xlu0 %v278, 12
      %v756 = vpop.permute.xlu0 %755
      %757 = vrot.lane.b32.xlu0 %v279, 12
      %v758 = vpop.permute.xlu0 %757
      %759 = vrot.lane.b32.xlu0 %v280, 12
      %v760 = vpop.permute.xlu0 %759
      %761 = vrot.lane.b32.xlu0 %v281, 12
      %v762 = vpop.permute.xlu0 %761
      %763 = vrot.lane.b32.xlu0 %v282, 12
      %v764 = vpop.permute.xlu0 %763
      %765 = vrot.lane.b32.xlu0 %v283, 12
      %v766 = vpop.permute.xlu0 %765
      %767 = vrot.lane.b32.xlu0 %v284, 12
      %v768 = vpop.permute.xlu0 %767
      %769 = vrot.lane.b32.xlu0 %v285, 12
      %v770 = vpop.permute.xlu0 %769
      %771 = vrot.lane.b32.xlu0 %v286, 12
      %v772 = vpop.permute.xlu0 %771
      %773 = vrot.lane.b32.xlu0 %v287, 12
      %v774 = vpop.permute.xlu0 %773
      %775 = vrot.lane.b32.xlu0 %v288, 12
      %v776 = vpop.permute.xlu0 %775
      %777 = vrot.lane.b32.xlu0 %v289, 12
      %v778 = vpop.permute.xlu0 %777
      %779 = vrot.lane.b32.xlu0 %v290, 12
      %v780 = vpop.permute.xlu0 %779
      %781 = vrot.lane.b32.xlu0 %v291, 12
      %v782 = vpop.permute.xlu0 %781
      %783 = vrot.lane.b32.xlu0 %v292, 12
      %v784 = vpop.permute.xlu0 %783
      %785 = vrot.lane.b32.xlu0 %v293, 12
      %v786 = vpop.permute.xlu0 %785
      %787 = vrot.lane.b32.xlu0 %v294, 12
      %v788 = vpop.permute.xlu0 %787
      %789 = vrot.lane.b32.xlu0 %v295, 12
      %v790 = vpop.permute.xlu0 %789
      %791 = vrot.lane.b32.xlu0 %v296, 12
      %v792 = vpop.permute.xlu0 %791
      %793 = vrot.lane.b32.xlu0 %v297, 12
      %v794 = vpop.permute.xlu0 %793
      %795 = vrot.lane.b32.xlu0 %v298, 12
      %v796 = vpop.permute.xlu0 %795
      %797 = vrot.lane.b32.xlu0 %v299, 12
      %v798 = vpop.permute.xlu0 %797
      %799 = vrot.lane.b32.xlu0 %v300, 12
      %v800 = vpop.permute.xlu0 %799
      %801 = vrot.lane.b32.xlu0 %v301, 12
      %v802 = vpop.permute.xlu0 %801
      %803 = vrot.lane.b32.xlu0 %v302, 12
      %v804 = vpop.permute.xlu0 %803
      %805 = vrot.lane.b32.xlu0 %v303, 12
      %v806 = vpop.permute.xlu0 %805
      %807 = vrot.lane.b32.xlu0 %v304, 12
      %v808 = vpop.permute.xlu0 %807
      %809 = vrot.lane.b32.xlu0 %v305, 12
      %v810 = vpop.permute.xlu0 %809
      %811 = vrot.lane.b32.xlu0 %v306, 12
      %v812 = vpop.permute.xlu0 %811
      %813 = vrot.lane.b32.xlu0 %v307, 12
      %v814 = vpop.permute.xlu0 %813
      %815 = vrot.lane.b32.xlu0 %v308, 12
      %v816 = vpop.permute.xlu0 %815
      %889 = vrot.lane.b32.xlu0 %v309, 16
      %v890 = vpop.permute.xlu0 %889
      %891 = vrot.lane.b32.xlu0 %v310, 16
      %v892 = vpop.permute.xlu0 %891
      %893 = vrot.lane.b32.xlu0 %v311, 16
      %v894 = vpop.permute.xlu0 %893
      %895 = vrot.lane.b32.xlu0 %v312, 16
      %v896 = vpop.permute.xlu0 %895
      %897 = vrot.lane.b32.xlu0 %v313, 16
      %v898 = vpop.permute.xlu0 %897
      %899 = vrot.lane.b32.xlu0 %v314, 16
      %v900 = vpop.permute.xlu0 %899
      %901 = vrot.lane.b32.xlu0 %v315, 16
      %v902 = vpop.permute.xlu0 %901
      %903 = vrot.lane.b32.xlu0 %v316, 16
      %v904 = vpop.permute.xlu0 %903
      %905 = vrot.lane.b32.xlu0 %v317, 16
      %v906 = vpop.permute.xlu0 %905
      %907 = vrot.lane.b32.xlu0 %v318, 16
      %v908 = vpop.permute.xlu0 %907
      %909 = vrot.lane.b32.xlu0 %v319, 16
      %v910 = vpop.permute.xlu0 %909
      %911 = vrot.lane.b32.xlu0 %v320, 16
      %v912 = vpop.permute.xlu0 %911
      %913 = vrot.lane.b32.xlu0 %v321, 16
      %v914 = vpop.permute.xlu0 %913
      %915 = vrot.lane.b32.xlu0 %v322, 16
      %v916 = vpop.permute.xlu0 %915
      %917 = vrot.lane.b32.xlu0 %v323, 16
      %v918 = vpop.permute.xlu0 %917
      %919 = vrot.lane.b32.xlu0 %v324, 16
      %v920 = vpop.permute.xlu0 %919
      %921 = vrot.lane.b32.xlu0 %v325, 16
      %v922 = vpop.permute.xlu0 %921
      %923 = vrot.lane.b32.xlu0 %v326, 16
      %v924 = vpop.permute.xlu0 %923
      %925 = vrot.lane.b32.xlu0 %v327, 16
      %v926 = vpop.permute.xlu0 %925
      %927 = vrot.lane.b32.xlu0 %v328, 16
      %v928 = vpop.permute.xlu0 %927
      %929 = vrot.lane.b32.xlu0 %v329, 16
      %v930 = vpop.permute.xlu0 %929
      %931 = vrot.lane.b32.xlu0 %v330, 16
      %v932 = vpop.permute.xlu0 %931
      %933 = vrot.lane.b32.xlu0 %v331, 16
      %v934 = vpop.permute.xlu0 %933
      %935 = vrot.lane.b32.xlu0 %v332, 16
      %v936 = vpop.permute.xlu0 %935
      %937 = vrot.lane.b32.xlu0 %v333, 16
      %v938 = vpop.permute.xlu0 %937
      %939 = vrot.lane.b32.xlu0 %v334, 16
      %v940 = vpop.permute.xlu0 %939
      %941 = vrot.lane.b32.xlu0 %v335, 16
      %v942 = vpop.permute.xlu0 %941
      %943 = vrot.lane.b32.xlu0 %v336, 16
      %v944 = vpop.permute.xlu0 %943
      %945 = vrot.lane.b32.xlu0 %v337, 16
      %v946 = vpop.permute.xlu0 %945
      %947 = vrot.lane.b32.xlu0 %v338, 16
      %v948 = vpop.permute.xlu0 %947
      %949 = vrot.lane.b32.xlu0 %v339, 16
      %v950 = vpop.permute.xlu0 %949
      %951 = vrot.lane.b32.xlu0 %v340, 16
      %v952 = vpop.permute.xlu0 %951
      %953 = vrot.lane.b32.xlu0 %v341, 16
      %v954 = vpop.permute.xlu0 %953
      %955 = vrot.lane.b32.xlu0 %v342, 16
      %v956 = vpop.permute.xlu0 %955
      %957 = vrot.lane.b32.xlu0 %v343, 16
      %v958 = vpop.permute.xlu0 %957
      %959 = vrot.lane.b32.xlu0 %v344, 16
      %v960 = vpop.permute.xlu0 %959
      %1033 = vrot.lane.b32.xlu0 %v345, 20
      %v1034 = vpop.permute.xlu0 %1033
      %1035 = vrot.lane.b32.xlu0 %v346, 20
      %v1036 = vpop.permute.xlu0 %1035
      %1037 = vrot.lane.b32.xlu0 %v347, 20
      %v1038 = vpop.permute.xlu0 %1037
      %1039 = vrot.lane.b32.xlu0 %v348, 20
      %v1040 = vpop.permute.xlu0 %1039
      %1041 = vrot.lane.b32.xlu0 %v349, 20
      %v1042 = vpop.permute.xlu0 %1041
      %1043 = vrot.lane.b32.xlu0 %v350, 20
      %v1044 = vpop.permute.xlu0 %1043
      %1045 = vrot.lane.b32.xlu0 %v351, 20
      %v1046 = vpop.permute.xlu0 %1045
      %1047 = vrot.lane.b32.xlu0 %v352, 20
      %v1048 = vpop.permute.xlu0 %1047
      %1049 = vrot.lane.b32.xlu0 %v353, 20
      %v1050 = vpop.permute.xlu0 %1049
      %1051 = vrot.lane.b32.xlu0 %v354, 20
      %v1052 = vpop.permute.xlu0 %1051
      %1053 = vrot.lane.b32.xlu0 %v355, 20
      %v1054 = vpop.permute.xlu0 %1053
      %1055 = vrot.lane.b32.xlu0 %v356, 20
      %v1056 = vpop.permute.xlu0 %1055
      %1057 = vrot.lane.b32.xlu0 %v357, 20
      %v1058 = vpop.permute.xlu0 %1057
      %1059 = vrot.lane.b32.xlu0 %v358, 20
      %v1060 = vpop.permute.xlu0 %1059
      %1061 = vrot.lane.b32.xlu0 %v359, 20
      %v1062 = vpop.permute.xlu0 %1061
      %1063 = vrot.lane.b32.xlu0 %v360, 20
      %v1064 = vpop.permute.xlu0 %1063
      %1065 = vrot.lane.b32.xlu0 %v361, 20
      %v1066 = vpop.permute.xlu0 %1065
      %1067 = vrot.lane.b32.xlu0 %v362, 20
      %v1068 = vpop.permute.xlu0 %1067
      %1069 = vrot.lane.b32.xlu0 %v363, 20
      %v1070 = vpop.permute.xlu0 %1069
      %1071 = vrot.lane.b32.xlu0 %v364, 20
      %v1072 = vpop.permute.xlu0 %1071
      %1073 = vrot.lane.b32.xlu0 %v365, 20
      %v1074 = vpop.permute.xlu0 %1073
      %1075 = vrot.lane.b32.xlu0 %v366, 20
      %v1076 = vpop.permute.xlu0 %1075
      %1077 = vrot.lane.b32.xlu0 %v367, 20
      %v1078 = vpop.permute.xlu0 %1077
      %1079 = vrot.lane.b32.xlu0 %v368, 20
      %v1080 = vpop.permute.xlu0 %1079
      %1081 = vrot.lane.b32.xlu0 %v369, 20
      %v1082 = vpop.permute.xlu0 %1081
      %1083 = vrot.lane.b32.xlu0 %v370, 20
      %v1084 = vpop.permute.xlu0 %1083
      %1085 = vrot.lane.b32.xlu0 %v371, 20
      %v1086 = vpop.permute.xlu0 %1085
      %1087 = vrot.lane.b32.xlu0 %v372, 20
      %v1088 = vpop.permute.xlu0 %1087
      %1089 = vrot.lane.b32.xlu0 %v373, 20
      %v1090 = vpop.permute.xlu0 %1089
      %1091 = vrot.lane.b32.xlu0 %v374, 20
      %v1092 = vpop.permute.xlu0 %1091
      %1093 = vrot.lane.b32.xlu0 %v375, 20
      %v1094 = vpop.permute.xlu0 %1093
      %1095 = vrot.lane.b32.xlu0 %v376, 20
      %v1096 = vpop.permute.xlu0 %1095
      %1097 = vrot.lane.b32.xlu0 %v377, 20
      %v1098 = vpop.permute.xlu0 %1097
      %1099 = vrot.lane.b32.xlu0 %v378, 20
      %v1100 = vpop.permute.xlu0 %1099
      %1101 = vrot.lane.b32.xlu0 %v379, 20
      %v1102 = vpop.permute.xlu0 %1101
      %1103 = vrot.lane.b32.xlu0 %v380, 20
      %v1104 = vpop.permute.xlu0 %1103
      %1143 = vrot.lane.b32.xlu0 %v347, 24
      %v1144 = vpop.permute.xlu0 %1143
      %1145 = vrot.lane.b32.xlu0 %v348, 24
      %v1146 = vpop.permute.xlu0 %1145
      %1147 = vrot.lane.b32.xlu0 %v349, 24
      %v1148 = vpop.permute.xlu0 %1147
      %1149 = vrot.lane.b32.xlu0 %v350, 24
      %v1150 = vpop.permute.xlu0 %1149
      %1151 = vrot.lane.b32.xlu0 %v351, 24
      %v1152 = vpop.permute.xlu0 %1151
      %1153 = vrot.lane.b32.xlu0 %v352, 24
      %v1154 = vpop.permute.xlu0 %1153
      %1155 = vrot.lane.b32.xlu0 %v353, 24
      %v1156 = vpop.permute.xlu0 %1155
      %1157 = vrot.lane.b32.xlu0 %v354, 24
      %v1158 = vpop.permute.xlu0 %1157
      %1159 = vrot.lane.b32.xlu0 %v355, 24
      %v1160 = vpop.permute.xlu0 %1159
      %1161 = vrot.lane.b32.xlu0 %v356, 24
      %v1162 = vpop.permute.xlu0 %1161
      %1163 = vrot.lane.b32.xlu0 %v357, 24
      %v1164 = vpop.permute.xlu0 %1163
      %1165 = vrot.lane.b32.xlu0 %v358, 24
      %v1166 = vpop.permute.xlu0 %1165
      %1167 = vrot.lane.b32.xlu0 %v359, 24
      %v1168 = vpop.permute.xlu0 %1167
      %1169 = vrot.lane.b32.xlu0 %v360, 24
      %v1170 = vpop.permute.xlu0 %1169
      %1171 = vrot.lane.b32.xlu0 %v361, 24
      %v1172 = vpop.permute.xlu0 %1171
      %1173 = vrot.lane.b32.xlu0 %v362, 24
      %v1174 = vpop.permute.xlu0 %1173
      %1175 = vrot.lane.b32.xlu0 %v363, 24
      %v1176 = vpop.permute.xlu0 %1175
      %1177 = vrot.lane.b32.xlu0 %v364, 24
      %v1178 = vpop.permute.xlu0 %1177
      %1179 = vrot.lane.b32.xlu0 %v365, 24
      %v1180 = vpop.permute.xlu0 %1179
      %1181 = vrot.lane.b32.xlu0 %v366, 24
      %v1182 = vpop.permute.xlu0 %1181
      %1183 = vrot.lane.b32.xlu0 %v367, 24
      %v1184 = vpop.permute.xlu0 %1183
      %1185 = vrot.lane.b32.xlu0 %v368, 24
      %v1186 = vpop.permute.xlu0 %1185
      %1187 = vrot.lane.b32.xlu0 %v369, 24
      %v1188 = vpop.permute.xlu0 %1187
      %1189 = vrot.lane.b32.xlu0 %v370, 24
      %v1190 = vpop.permute.xlu0 %1189
      %1191 = vrot.lane.b32.xlu0 %v371, 24
      %v1192 = vpop.permute.xlu0 %1191
      %1193 = vrot.lane.b32.xlu0 %v372, 24
      %v1194 = vpop.permute.xlu0 %1193
      %1195 = vrot.lane.b32.xlu0 %v373, 24
      %v1196 = vpop.permute.xlu0 %1195
      %1197 = vrot.lane.b32.xlu0 %v374, 24
      %v1198 = vpop.permute.xlu0 %1197
      %1199 = vrot.lane.b32.xlu0 %v375, 24
      %v1200 = vpop.permute.xlu0 %1199
      %1201 = vrot.lane.b32.xlu0 %v376, 24
      %v1202 = vpop.permute.xlu0 %1201
      %1203 = vrot.lane.b32.xlu0 %v377, 24
      %v1204 = vpop.permute.xlu0 %1203
      %1205 = vrot.lane.b32.xlu0 %v378, 24
      %v1206 = vpop.permute.xlu0 %1205
      %1207 = vrot.lane.b32.xlu0 %v379, 24
      %v1208 = vpop.permute.xlu0 %1207
      %1209 = vrot.lane.b32.xlu0 %v380, 24
      %v1210 = vpop.permute.xlu0 %1209
      %1211 = vrot.lane.b32.xlu0 %v381, 24
      %v1212 = vpop.permute.xlu0 %1211
      %1213 = vrot.lane.b32.xlu0 %v382, 24
      %v1214 = vpop.permute.xlu0 %1213
      %1287 = vrot.lane.b32.xlu0 %v383, 28
      %v1288 = vpop.permute.xlu0 %1287
      %1289 = vrot.lane.b32.xlu0 %v384, 28
      %v1290 = vpop.permute.xlu0 %1289
      %1291 = vrot.lane.b32.xlu0 %v385, 28
      %v1292 = vpop.permute.xlu0 %1291
      %1293 = vrot.lane.b32.xlu0 %v386, 28
      %v1294 = vpop.permute.xlu0 %1293
      %1295 = vrot.lane.b32.xlu0 %v387, 28
      %v1296 = vpop.permute.xlu0 %1295
      %1297 = vrot.lane.b32.xlu0 %v388, 28
      %v1298 = vpop.permute.xlu0 %1297
      %1299 = vrot.lane.b32.xlu0 %v389, 28
      %v1300 = vpop.permute.xlu0 %1299
      %1301 = vrot.lane.b32.xlu0 %v390, 28
      %v1302 = vpop.permute.xlu0 %1301
      %1303 = vrot.lane.b32.xlu0 %v391, 28
      %v1304 = vpop.permute.xlu0 %1303
      %1305 = vrot.lane.b32.xlu0 %v392, 28
      %v1306 = vpop.permute.xlu0 %1305
      %1307 = vrot.lane.b32.xlu0 %v393, 28
      %v1308 = vpop.permute.xlu0 %1307
      %1309 = vrot.lane.b32.xlu0 %v394, 28
      %v1310 = vpop.permute.xlu0 %1309
      %1311 = vrot.lane.b32.xlu0 %v395, 28
      %v1312 = vpop.permute.xlu0 %1311
      %1313 = vrot.lane.b32.xlu0 %v396, 28
      %v1314 = vpop.permute.xlu0 %1313
      %1315 = vrot.lane.b32.xlu0 %v397, 28
      %v1316 = vpop.permute.xlu0 %1315
      %1317 = vrot.lane.b32.xlu0 %v398, 28
      %v1318 = vpop.permute.xlu0 %1317
      %1319 = vrot.lane.b32.xlu0 %v399, 28
      %v1320 = vpop.permute.xlu0 %1319
      %1321 = vrot.lane.b32.xlu0 %v400, 28
      %v1322 = vpop.permute.xlu0 %1321
      %1323 = vrot.lane.b32.xlu0 %v401, 28
      %v1324 = vpop.permute.xlu0 %1323
      %1325 = vrot.lane.b32.xlu0 %v402, 28
      %v1326 = vpop.permute.xlu0 %1325
      %1327 = vrot.lane.b32.xlu0 %v403, 28
      %v1328 = vpop.permute.xlu0 %1327
      %1329 = vrot.lane.b32.xlu0 %v404, 28
      %v1330 = vpop.permute.xlu0 %1329
      %1331 = vrot.lane.b32.xlu0 %v405, 28
      %v1332 = vpop.permute.xlu0 %1331
      %1333 = vrot.lane.b32.xlu0 %v406, 28
      %v1334 = vpop.permute.xlu0 %1333
      %1335 = vrot.lane.b32.xlu0 %v407, 28
      %v1336 = vpop.permute.xlu0 %1335
      %1337 = vrot.lane.b32.xlu0 %v408, 28
      %v1338 = vpop.permute.xlu0 %1337
      %1339 = vrot.lane.b32.xlu0 %v409, 28
      %v1340 = vpop.permute.xlu0 %1339
      %1341 = vrot.lane.b32.xlu0 %v410, 28
      %v1342 = vpop.permute.xlu0 %1341
      %1343 = vrot.lane.b32.xlu0 %v411, 28
      %v1344 = vpop.permute.xlu0 %1343
      %1345 = vrot.lane.b32.xlu0 %v412, 28
      %v1346 = vpop.permute.xlu0 %1345
      %1347 = vrot.lane.b32.xlu0 %v413, 28
      %v1348 = vpop.permute.xlu0 %1347
      %1349 = vrot.lane.b32.xlu0 %v414, 28
      %v1350 = vpop.permute.xlu0 %1349
      %1351 = vrot.lane.b32.xlu0 %v415, 28
      %v1352 = vpop.permute.xlu0 %1351
      %1353 = vrot.lane.b32.xlu0 %v416, 28
      %v1354 = vpop.permute.xlu0 %1353
      %1355 = vrot.lane.b32.xlu0 %v417, 28
      %v1356 = vpop.permute.xlu0 %1355
      %1357 = vrot.lane.b32.xlu0 %v418, 28
      %v1358 = vpop.permute.xlu0 %1357
      %1431 = vrot.lane.b32.xlu0 %v419, 32
      %v1432 = vpop.permute.xlu0 %1431
      %1433 = vrot.lane.b32.xlu0 %v420, 32
      %v1434 = vpop.permute.xlu0 %1433
      %1435 = vrot.lane.b32.xlu0 %v421, 32
      %v1436 = vpop.permute.xlu0 %1435
      %1437 = vrot.lane.b32.xlu0 %v422, 32
      %v1438 = vpop.permute.xlu0 %1437
      %1439 = vrot.lane.b32.xlu0 %v423, 32
      %v1440 = vpop.permute.xlu0 %1439
      %1441 = vrot.lane.b32.xlu0 %v424, 32
      %v1442 = vpop.permute.xlu0 %1441
      %1443 = vrot.lane.b32.xlu0 %v425, 32
      %v1444 = vpop.permute.xlu0 %1443
      %1445 = vrot.lane.b32.xlu0 %v426, 32
      %v1446 = vpop.permute.xlu0 %1445
      %1447 = vrot.lane.b32.xlu0 %v427, 32
      %v1448 = vpop.permute.xlu0 %1447
      %1449 = vrot.lane.b32.xlu0 %v428, 32
      %v1450 = vpop.permute.xlu0 %1449
      %1451 = vrot.lane.b32.xlu0 %v429, 32
      %v1452 = vpop.permute.xlu0 %1451
      %1453 = vrot.lane.b32.xlu0 %v430, 32
      %v1454 = vpop.permute.xlu0 %1453
      %1455 = vrot.lane.b32.xlu0 %v431, 32
      %v1456 = vpop.permute.xlu0 %1455
      %1457 = vrot.lane.b32.xlu0 %v432, 32
      %v1458 = vpop.permute.xlu0 %1457
      %1459 = vrot.lane.b32.xlu0 %v433, 32
      %v1460 = vpop.permute.xlu0 %1459
      %1461 = vrot.lane.b32.xlu0 %v434, 32
      %v1462 = vpop.permute.xlu0 %1461
      %1463 = vrot.lane.b32.xlu0 %v435, 32
      %v1464 = vpop.permute.xlu0 %1463
      %1465 = vrot.lane.b32.xlu0 %v436, 32
      %v1466 = vpop.permute.xlu0 %1465
      %1467 = vrot.lane.b32.xlu0 %v437, 32
      %v1468 = vpop.permute.xlu0 %1467
      %1469 = vrot.lane.b32.xlu0 %v438, 32
      %v1470 = vpop.permute.xlu0 %1469
      %1471 = vrot.lane.b32.xlu0 %v439, 32
      %v1472 = vpop.permute.xlu0 %1471
      %1473 = vrot.lane.b32.xlu0 %v440, 32
      %v1474 = vpop.permute.xlu0 %1473
      %1475 = vrot.lane.b32.xlu0 %v441, 32
      %v1476 = vpop.permute.xlu0 %1475
      %1477 = vrot.lane.b32.xlu0 %v442, 32
      %v1478 = vpop.permute.xlu0 %1477
      %1479 = vrot.lane.b32.xlu0 %v443, 32
      %v1480 = vpop.permute.xlu0 %1479
      %1481 = vrot.lane.b32.xlu0 %v444, 32
      %v1482 = vpop.permute.xlu0 %1481
      %1483 = vrot.lane.b32.xlu0 %v445, 32
      %v1484 = vpop.permute.xlu0 %1483
      %1485 = vrot.lane.b32.xlu0 %v446, 32
      %v1486 = vpop.permute.xlu0 %1485
      %1487 = vrot.lane.b32.xlu0 %v447, 32
      %v1488 = vpop.permute.xlu0 %1487
      %1489 = vrot.lane.b32.xlu0 %v448, 32
      %v1490 = vpop.permute.xlu0 %1489
      %1491 = vrot.lane.b32.xlu0 %v449, 32
      %v1492 = vpop.permute.xlu0 %1491
      %1493 = vrot.lane.b32.xlu0 %v450, 32
      %v1494 = vpop.permute.xlu0 %1493
      %1495 = vrot.lane.b32.xlu0 %v451, 32
      %v1496 = vpop.permute.xlu0 %1495
      %1497 = vrot.lane.b32.xlu0 %v452, 32
      %v1498 = vpop.permute.xlu0 %1497
      %1499 = vrot.lane.b32.xlu0 %v453, 32
      %v1500 = vpop.permute.xlu0 %1499
      %1501 = vrot.lane.b32.xlu0 %v454, 32
      %v1502 = vpop.permute.xlu0 %1501
      %vm1539 = vcmask 31744
      %v1540 = vsel %vm1539, %v199, %v492
      %v1541 = vsel %vm1539, %v200, %v494
      %v1542 = vsel %vm1539, %v201, %v496
      %v1543 = vsel %vm1539, %v202, %v498
      %v1544 = vsel %vm1539, %v203, %v500
      %v1545 = vsel %vm1539, %v204, %v502
      %v1546 = vsel %vm1539, %v205, %v504
      %v1547 = vsel %vm1539, %v206, %v506
      %v1548 = vsel %vm1539, %v207, %v508
      %v1549 = vsel %vm1539, %v208, %v510
      %v1550 = vsel %vm1539, %v209, %v512
      %v1551 = vsel %vm1539, %v210, %v514
      %v1552 = vsel %vm1539, %v211, %v516
      %v1553 = vsel %vm1539, %v212, %v518
      %v1554 = vsel %vm1539, %v213, %v520
      %v1555 = vsel %vm1539, %v214, %v522
      %v1556 = vsel %vm1539, %v215, %v524
      %v1557 = vsel %vm1539, %v216, %v526
      %v1558 = vsel %vm1539, %v217, %v528
      %v1559 = vsel %vm1539, %v218, %v530
      %v1560 = vsel %vm1539, %v219, %v532
      %v1561 = vsel %vm1539, %v220, %v534
      %v1562 = vsel %vm1539, %v221, %v536
      %v1563 = vsel %vm1539, %v222, %v538
      %v1564 = vsel %vm1539, %v223, %v540
      %v1565 = vsel %vm1539, %v224, %v542
      %v1566 = vsel %vm1539, %v225, %v544
      %v1567 = vsel %vm1539, %v226, %v546
      %v1568 = vsel %vm1539, %v227, %v548
      %v1569 = vsel %vm1539, %v228, %v550
      %v1570 = vsel %vm1539, %v229, %v552
      %v1571 = vsel %vm1539, %v230, %v554
      %v1572 = vsel %vm1539, %v231, %v556
      %v1573 = vsel %vm1539, %v232, %v558
      %v1574 = vsel %vm1539, %v233, %v560
      %v1575 = vsel %vm1539, %v234, %v562
      %vm1576 = vcmask 64512
      %v1577 = vsel %vm1576, %v1540, %v636
      %v1578 = vsel %vm1576, %v1541, %v638
      %v1579 = vsel %vm1576, %v1542, %v640
      %v1580 = vsel %vm1576, %v1543, %v642
      %v1581 = vsel %vm1576, %v1544, %v644
      %v1582 = vsel %vm1576, %v1545, %v646
      %v1583 = vsel %vm1576, %v1546, %v648
      %v1584 = vsel %vm1576, %v1547, %v650
      %v1585 = vsel %vm1576, %v1548, %v652
      %v1586 = vsel %vm1576, %v1549, %v654
      %v1587 = vsel %vm1576, %v1550, %v656
      %v1588 = vsel %vm1576, %v1551, %v658
      %v1589 = vsel %vm1576, %v1552, %v660
      %v1590 = vsel %vm1576, %v1553, %v662
      %v1591 = vsel %vm1576, %v1554, %v664
      %v1592 = vsel %vm1576, %v1555, %v666
      %v1593 = vsel %vm1576, %v1556, %v668
      %v1594 = vsel %vm1576, %v1557, %v670
      %v1595 = vsel %vm1576, %v1558, %v672
      %v1596 = vsel %vm1576, %v1559, %v674
      %v1597 = vsel %vm1576, %v1560, %v676
      %v1598 = vsel %vm1576, %v1561, %v678
      %v1599 = vsel %vm1576, %v1562, %v680
      %v1600 = vsel %vm1576, %v1563, %v682
      %v1601 = vsel %vm1576, %v1564, %v684
      %v1602 = vsel %vm1576, %v1565, %v686
      %v1603 = vsel %vm1576, %v1566, %v688
      %v1604 = vsel %vm1576, %v1567, %v690
      %v1605 = vsel %vm1576, %v1568, %v692
      %v1606 = vsel %vm1576, %v1569, %v694
      %v1607 = vsel %vm1576, %v1570, %v696
      %v1608 = vsel %vm1576, %v1571, %v698
      %v1609 = vsel %vm1576, %v1572, %v700
      %v1610 = vsel %vm1576, %v1573, %v702
      %v1611 = vsel %vm1576, %v1574, %v704
      %v1612 = vsel %vm1576, %v1575, %v706
      %vm1613 = vcmask 97280
      %v1614 = vsel %vm1613, %v1577, %v746
      %v1615 = vsel %vm1613, %v1578, %v748
      %v1616 = vsel %vm1613, %v1579, %v750
      %v1617 = vsel %vm1613, %v1580, %v752
      %v1618 = vsel %vm1613, %v1581, %v754
      %v1619 = vsel %vm1613, %v1582, %v756
      %v1620 = vsel %vm1613, %v1583, %v758
      %v1621 = vsel %vm1613, %v1584, %v760
      %v1622 = vsel %vm1613, %v1585, %v762
      %v1623 = vsel %vm1613, %v1586, %v764
      %v1624 = vsel %vm1613, %v1587, %v766
      %v1625 = vsel %vm1613, %v1588, %v768
      %v1626 = vsel %vm1613, %v1589, %v770
      %v1627 = vsel %vm1613, %v1590, %v772
      %v1628 = vsel %vm1613, %v1591, %v774
      %v1629 = vsel %vm1613, %v1592, %v776
      %v1630 = vsel %vm1613, %v1593, %v778
      %v1631 = vsel %vm1613, %v1594, %v780
      %v1632 = vsel %vm1613, %v1595, %v782
      %v1633 = vsel %vm1613, %v1596, %v784
      %v1634 = vsel %vm1613, %v1597, %v786
      %v1635 = vsel %vm1613, %v1598, %v788
      %v1636 = vsel %vm1613, %v1599, %v790
      %v1637 = vsel %vm1613, %v1600, %v792
      %v1638 = vsel %vm1613, %v1601, %v794
      %v1639 = vsel %vm1613, %v1602, %v796
      %v1640 = vsel %vm1613, %v1603, %v798
      %v1641 = vsel %vm1613, %v1604, %v800
      %v1642 = vsel %vm1613, %v1605, %v802
      %v1643 = vsel %vm1613, %v1606, %v804
      %v1644 = vsel %vm1613, %v1607, %v806
      %v1645 = vsel %vm1613, %v1608, %v808
      %v1646 = vsel %vm1613, %v1609, %v810
      %v1647 = vsel %vm1613, %v1610, %v812
      %v1648 = vsel %vm1613, %v1611, %v814
      %v1649 = vsel %vm1613, %v1612, %v816
      %vm1650 = vcmask 130048
      %v1651 = vsel %vm1650, %v1614, %v890
      %v1652 = vsel %vm1650, %v1615, %v892
      %v1653 = vsel %vm1650, %v1616, %v894
      %v1654 = vsel %vm1650, %v1617, %v896
      %v1655 = vsel %vm1650, %v1618, %v898
      %v1656 = vsel %vm1650, %v1619, %v900
      %v1657 = vsel %vm1650, %v1620, %v902
      %v1658 = vsel %vm1650, %v1621, %v904
      %v1659 = vsel %vm1650, %v1622, %v906
      %v1660 = vsel %vm1650, %v1623, %v908
      %v1661 = vsel %vm1650, %v1624, %v910
      %v1662 = vsel %vm1650, %v1625, %v912
      %v1663 = vsel %vm1650, %v1626, %v914
      %v1664 = vsel %vm1650, %v1627, %v916
      %v1665 = vsel %vm1650, %v1628, %v918
      %v1666 = vsel %vm1650, %v1629, %v920
      %v1667 = vsel %vm1650, %v1630, %v922
      %v1668 = vsel %vm1650, %v1631, %v924
      %v1669 = vsel %vm1650, %v1632, %v926
      %v1670 = vsel %vm1650, %v1633, %v928
      %v1671 = vsel %vm1650, %v1634, %v930
      %v1672 = vsel %vm1650, %v1635, %v932
      %v1673 = vsel %vm1650, %v1636, %v934
      %v1674 = vsel %vm1650, %v1637, %v936
      %v1675 = vsel %vm1650, %v1638, %v938
      %v1676 = vsel %vm1650, %v1639, %v940
      %v1677 = vsel %vm1650, %v1640, %v942
      %v1678 = vsel %vm1650, %v1641, %v944
      %v1679 = vsel %vm1650, %v1642, %v946
      %v1680 = vsel %vm1650, %v1643, %v948
      %v1681 = vsel %vm1650, %v1644, %v950
      %v1682 = vsel %vm1650, %v1645, %v952
      %v1683 = vsel %vm1650, %v1646, %v954
      %v1684 = vsel %vm1650, %v1647, %v956
      %v1685 = vsel %vm1650, %v1648, %v958
      %v1686 = vsel %vm1650, %v1649, %v960
      %vm1687 = vcmask 162816
      %v1688 = vsel %vm1687, %v1651, %v1034
      %v1689 = vsel %vm1687, %v1652, %v1036
      %v1690 = vsel %vm1687, %v1653, %v1038
      %v1691 = vsel %vm1687, %v1654, %v1040
      %v1692 = vsel %vm1687, %v1655, %v1042
      %v1693 = vsel %vm1687, %v1656, %v1044
      %v1694 = vsel %vm1687, %v1657, %v1046
      %v1695 = vsel %vm1687, %v1658, %v1048
      %v1696 = vsel %vm1687, %v1659, %v1050
      %v1697 = vsel %vm1687, %v1660, %v1052
      %v1698 = vsel %vm1687, %v1661, %v1054
      %v1699 = vsel %vm1687, %v1662, %v1056
      %v1700 = vsel %vm1687, %v1663, %v1058
      %v1701 = vsel %vm1687, %v1664, %v1060
      %v1702 = vsel %vm1687, %v1665, %v1062
      %v1703 = vsel %vm1687, %v1666, %v1064
      %v1704 = vsel %vm1687, %v1667, %v1066
      %v1705 = vsel %vm1687, %v1668, %v1068
      %v1706 = vsel %vm1687, %v1669, %v1070
      %v1707 = vsel %vm1687, %v1670, %v1072
      %v1708 = vsel %vm1687, %v1671, %v1074
      %v1709 = vsel %vm1687, %v1672, %v1076
      %v1710 = vsel %vm1687, %v1673, %v1078
      %v1711 = vsel %vm1687, %v1674, %v1080
      %v1712 = vsel %vm1687, %v1675, %v1082
      %v1713 = vsel %vm1687, %v1676, %v1084
      %v1714 = vsel %vm1687, %v1677, %v1086
      %v1715 = vsel %vm1687, %v1678, %v1088
      %v1716 = vsel %vm1687, %v1679, %v1090
      %v1717 = vsel %vm1687, %v1680, %v1092
      %v1718 = vsel %vm1687, %v1681, %v1094
      %v1719 = vsel %vm1687, %v1682, %v1096
      %v1720 = vsel %vm1687, %v1683, %v1098
      %v1721 = vsel %vm1687, %v1684, %v1100
      %v1722 = vsel %vm1687, %v1685, %v1102
      %v1723 = vsel %vm1687, %v1686, %v1104
      %vm1724 = vcmask 195584
      %v1725 = vsel %vm1724, %v1688, %v1144
      %v1726 = vsel %vm1724, %v1689, %v1146
      %v1727 = vsel %vm1724, %v1690, %v1148
      %v1728 = vsel %vm1724, %v1691, %v1150
      %v1729 = vsel %vm1724, %v1692, %v1152
      %v1730 = vsel %vm1724, %v1693, %v1154
      %v1731 = vsel %vm1724, %v1694, %v1156
      %v1732 = vsel %vm1724, %v1695, %v1158
      %v1733 = vsel %vm1724, %v1696, %v1160
      %v1734 = vsel %vm1724, %v1697, %v1162
      %v1735 = vsel %vm1724, %v1698, %v1164
      %v1736 = vsel %vm1724, %v1699, %v1166
      %v1737 = vsel %vm1724, %v1700, %v1168
      %v1738 = vsel %vm1724, %v1701, %v1170
      %v1739 = vsel %vm1724, %v1702, %v1172
      %v1740 = vsel %vm1724, %v1703, %v1174
      %v1741 = vsel %vm1724, %v1704, %v1176
      %v1742 = vsel %vm1724, %v1705, %v1178
      %v1743 = vsel %vm1724, %v1706, %v1180
      %v1744 = vsel %vm1724, %v1707, %v1182
      %v1745 = vsel %vm1724, %v1708, %v1184
      %v1746 = vsel %vm1724, %v1709, %v1186
      %v1747 = vsel %vm1724, %v1710, %v1188
      %v1748 = vsel %vm1724, %v1711, %v1190
      %v1749 = vsel %vm1724, %v1712, %v1192
      %v1750 = vsel %vm1724, %v1713, %v1194
      %v1751 = vsel %vm1724, %v1714, %v1196
      %v1752 = vsel %vm1724, %v1715, %v1198
      %v1753 = vsel %vm1724, %v1716, %v1200
      %v1754 = vsel %vm1724, %v1717, %v1202
      %v1755 = vsel %vm1724, %v1718, %v1204
      %v1756 = vsel %vm1724, %v1719, %v1206
      %v1757 = vsel %vm1724, %v1720, %v1208
      %v1758 = vsel %vm1724, %v1721, %v1210
      %v1759 = vsel %vm1724, %v1722, %v1212
      %v1760 = vsel %vm1724, %v1723, %v1214
      %vm1761 = vcmask 228352
      %v1762 = vsel %vm1761, %v1725, %v1288
      %v1763 = vsel %vm1761, %v1726, %v1290
      %v1764 = vsel %vm1761, %v1727, %v1292
      %v1765 = vsel %vm1761, %v1728, %v1294
      %v1766 = vsel %vm1761, %v1729, %v1296
      %v1767 = vsel %vm1761, %v1730, %v1298
      %v1768 = vsel %vm1761, %v1731, %v1300
      %v1769 = vsel %vm1761, %v1732, %v1302
      %v1770 = vsel %vm1761, %v1733, %v1304
      %v1771 = vsel %vm1761, %v1734, %v1306
      %v1772 = vsel %vm1761, %v1735, %v1308
      %v1773 = vsel %vm1761, %v1736, %v1310
      %v1774 = vsel %vm1761, %v1737, %v1312
      %v1775 = vsel %vm1761, %v1738, %v1314
      %v1776 = vsel %vm1761, %v1739, %v1316
      %v1777 = vsel %vm1761, %v1740, %v1318
      %v1778 = vsel %vm1761, %v1741, %v1320
      %v1779 = vsel %vm1761, %v1742, %v1322
      %v1780 = vsel %vm1761, %v1743, %v1324
      %v1781 = vsel %vm1761, %v1744, %v1326
      %v1782 = vsel %vm1761, %v1745, %v1328
      %v1783 = vsel %vm1761, %v1746, %v1330
      %v1784 = vsel %vm1761, %v1747, %v1332
      %v1785 = vsel %vm1761, %v1748, %v1334
      %v1786 = vsel %vm1761, %v1749, %v1336
      %v1787 = vsel %vm1761, %v1750, %v1338
      %v1788 = vsel %vm1761, %v1751, %v1340
      %v1789 = vsel %vm1761, %v1752, %v1342
      %v1790 = vsel %vm1761, %v1753, %v1344
      %v1791 = vsel %vm1761, %v1754, %v1346
      %v1792 = vsel %vm1761, %v1755, %v1348
      %v1793 = vsel %vm1761, %v1756, %v1350
      %v1794 = vsel %vm1761, %v1757, %v1352
      %v1795 = vsel %vm1761, %v1758, %v1354
      %v1796 = vsel %vm1761, %v1759, %v1356
      %v1797 = vsel %vm1761, %v1760, %v1358
      %vm1798 = vcmask 261120
      %v1799 = vsel %vm1798, %v1762, %v1432
      %v1800 = vsel %vm1798, %v1763, %v1434
      %v1801 = vsel %vm1798, %v1764, %v1436
      %v1802 = vsel %vm1798, %v1765, %v1438
      %v1803 = vsel %vm1798, %v1766, %v1440
      %v1804 = vsel %vm1798, %v1767, %v1442
      %v1805 = vsel %vm1798, %v1768, %v1444
      %v1806 = vsel %vm1798, %v1769, %v1446
      %v1807 = vsel %vm1798, %v1770, %v1448
      %v1808 = vsel %vm1798, %v1771, %v1450
      %v1809 = vsel %vm1798, %v1772, %v1452
      %v1810 = vsel %vm1798, %v1773, %v1454
      %v1811 = vsel %vm1798, %v1774, %v1456
      %v1812 = vsel %vm1798, %v1775, %v1458
      %v1813 = vsel %vm1798, %v1776, %v1460
      %v1814 = vsel %vm1798, %v1777, %v1462
      %v1815 = vsel %vm1798, %v1778, %v1464
      %v1816 = vsel %vm1798, %v1779, %v1466
      %v1817 = vsel %vm1798, %v1780, %v1468
      %v1818 = vsel %vm1798, %v1781, %v1470
      %v1819 = vsel %vm1798, %v1782, %v1472
      %v1820 = vsel %vm1798, %v1783, %v1474
      %v1821 = vsel %vm1798, %v1784, %v1476
      %v1822 = vsel %vm1798, %v1785, %v1478
      %v1823 = vsel %vm1798, %v1786, %v1480
      %v1824 = vsel %vm1798, %v1787, %v1482
      %v1825 = vsel %vm1798, %v1788, %v1484
      %v1826 = vsel %vm1798, %v1789, %v1486
      %v1827 = vsel %vm1798, %v1790, %v1488
      %v1828 = vsel %vm1798, %v1791, %v1490
      %v1829 = vsel %vm1798, %v1792, %v1492
      %v1830 = vsel %vm1798, %v1793, %v1494
      %v1831 = vsel %vm1798, %v1794, %v1496
      %v1832 = vsel %vm1798, %v1795, %v1498
      %v1833 = vsel %vm1798, %v1796, %v1500
      %v1834 = vsel %vm1798, %v1797, %v1502
      %v1835 = vpack.c.bf16 %v1800, %v1799
      %v1836 = vpack.c.bf16 %v1802, %v1801
      %v1837 = vpack.c.bf16 %v1804, %v1803
      %v1838 = vpack.c.bf16 %v1806, %v1805
      %v1839 = vpack.c.bf16 %v1808, %v1807
      %v1840 = vpack.c.bf16 %v1810, %v1809
      %v1841 = vpack.c.bf16 %v1812, %v1811
      %v1842 = vpack.c.bf16 %v1814, %v1813
      %v1843 = vpack.c.bf16 %v1816, %v1815
      %v1844 = vpack.c.bf16 %v1818, %v1817
      %v1845 = vpack.c.bf16 %v1820, %v1819
      %v1846 = vpack.c.bf16 %v1822, %v1821
      %v1847 = vpack.c.bf16 %v1824, %v1823
      %v1848 = vpack.c.bf16 %v1826, %v1825
      %v1849 = vpack.c.bf16 %v1828, %v1827
      %v1850 = vpack.c.bf16 %v1830, %v1829
      %v1851 = vpack.c.bf16 %v1832, %v1831
      %v1852 = vpack.c.bf16 %v1834, %v1833
      %v1853 = vld [vmem:[%s1] sm:$0xf]
      %v1854 = vld [vmem:[%s1 + $0x4] sm:$0xf]
      %v1855 = vld [vmem:[%s1 + $0x8] sm:$0xf]
      %v1856 = vld [vmem:[%s1 + $0xc] sm:$0xf]
      %v1857 = vld [vmem:[%s1 + $0x10] sm:$0x3]
      %v1858 = vld [vmem:[%s2] sm:$0x1]
      %v1859 = vlaneseq
      %v1860 = vshrl.u32 %v1859, 7
      %v1861 = vsub.s32 0, %v1860
      %v1862 = vrot.slane %v1858, %v1861
      %v1868 = vunpack.c.l.b16 %v1853
      %v1869 = vunpack.c.l.b16 %v1854
      %v1870 = vunpack.c.l.b16 %v1855
      %v1871 = vunpack.c.l.b16 %v1856
      %v1872 = vunpack.c.l.b16 %v1857
      %v1873 = vpack.c.b16 %v1869, %v1868
      %v1874 = vpack.c.b16 %v1871, %v1870
      %v1875 = vpack.c.b16 %v1872, %v1872
      %vm1878 = vcmask 293888
      %v1880 = vsel %vm1878, %v1835, 0
      %v1883 = vsel %vm1878, %v1836, 0
      %v1886 = vsel %vm1878, %v1837, 0
      %v1889 = vsel %vm1878, %v1838, 0
      %v1892 = vsel %vm1878, %v1839, 0
      %v1895 = vsel %vm1878, %v1840, 0
      %v1898 = vsel %vm1878, %v1841, 0
      %v1901 = vsel %vm1878, %v1842, 0
      %v1904 = vsel %vm1878, %v1843, 0
      %v1907 = vsel %vm1878, %v1844, 0
      %v1910 = vsel %vm1878, %v1845, 0
      %v1913 = vsel %vm1878, %v1846, 0
      %v1916 = vsel %vm1878, %v1847, 0
      %v1919 = vsel %vm1878, %v1848, 0
      %v1922 = vsel %vm1878, %v1849, 0
      %v1925 = vsel %vm1878, %v1850, 0
      %v1928 = vsel %vm1878, %v1851, 0
      %v1931 = vsel %vm1878, %v1852, 0
      %vm1933 = vcmask 1041408
      %v1935 = vsel %vm1933, %v1875, 0
      %1937 = vmatprep.subr.bf16.mxu0 0
      %1938 = vmatpush1.bf16.msra.mxu0 %v1873
      %1939 = vmatprep.subr.bf16.mxu0 0
      %1940 = vmatpush1.bf16.msra.mxu0 %v1874
      %1941 = vmatprep.subr.bf16.mxu0 0
      %1942 = vmatpush1.bf16.msra.mxu0 %v1935
      %1943 = vmatprep.subr.bf16.mxu0 0
      %1944 = vmatpush1.bf16.msra.mxu0 0
      %1945 = vmatprep.subr.bf16.mxu0 0
      %1946 = vmatpush1.bf16.msra.mxu0 0
      %1947 = vmatprep.subr.bf16.mxu0 0
      %1948 = vmatpush1.bf16.msra.mxu0 0
      %1949 = vmatprep.subr.bf16.mxu0 0
      %1950 = vmatpush1.bf16.msra.mxu0 0
      %1951 = vmatprep.subr.bf16.mxu0 0
      %1952 = vmatpush1.bf16.msra.mxu0 0
      %1953 = vmatprep.subr.bf16.mxu0 0
      %1954 = vmatpush1.bf16.msra.mxu0 0
      %1955 = vmatprep.subr.bf16.mxu0 0
      %1956 = vmatpush1.bf16.msra.mxu0 0
      %1957 = vmatprep.subr.bf16.mxu0 0
      %1958 = vmatpush1.bf16.msra.mxu0 0
      %1959 = vmatprep.subr.bf16.mxu0 0
      %1960 = vmatpush1.bf16.msra.mxu0 0
      %1961 = vmatprep.subr.bf16.mxu0 0
      %1962 = vmatpush1.bf16.msra.mxu0 0
      %1963 = vmatprep.subr.bf16.mxu0 0
      %1964 = vmatpush1.bf16.msra.mxu0 0
      %1965 = vmatprep.subr.bf16.mxu0 0
      %1966 = vmatpush1.bf16.msra.mxu0 0
      %1967 = vmatprep.subr.bf16.mxu0 0
      %1968 = vmatpush1.bf16.msra.mxu0 0
      %1969 = vmatprep.mubr.bf16.mxu0 0
      %1970 = vmatmul.mubr.bf16.gmra.mrb[0].mxu0 %v1880
      %v1971 = vpop.f32.mrb[0].mxu0
      %v1972 = vadd.f32 %v1862, %v1971
      %v1973 = vpop.f32.mrb[0].mxu0
      %v1974 = vpop.f32.mrb[0].mxu0
      %v1975 = vadd.f32 %v1862, %v1974
      %v1976 = vpop.f32.mrb[0].mxu0
      %1977 = vmatprep.mubr.bf16.mxu0 0
      %1978 = vmatmul.mubr.bf16.gmra.mrb[0].mxu0 %v1883
      %v1979 = vpop.f32.mrb[0].mxu0
      %v1980 = vadd.f32 %v1862, %v1979
      %v1981 = vpop.f32.mrb[0].mxu0
      %v1982 = vpop.f32.mrb[0].mxu0
      %v1983 = vadd.f32 %v1862, %v1982
      %v1984 = vpop.f32.mrb[0].mxu0
      %1985 = vmatprep.mubr.bf16.mxu0 0
      %1986 = vmatmul.mubr.bf16.gmra.mrb[0].mxu0 %v1886
      %v1987 = vpop.f32.mrb[0].mxu0
      %v1988 = vadd.f32 %v1862, %v1987
      %v1989 = vpop.f32.mrb[0].mxu0
      %v1990 = vpop.f32.mrb[0].mxu0
      %v1991 = vadd.f32 %v1862, %v1990
      %v1992 = vpop.f32.mrb[0].mxu0
      %1993 = vmatprep.mubr.bf16.mxu0 0
      %1994 = vmatmul.mubr.bf16.gmra.mrb[0].mxu0 %v1889
      %v1995 = vpop.f32.mrb[0].mxu0
      %v1996 = vadd.f32 %v1862, %v1995
      %v1997 = vpop.f32.mrb[0].mxu0
      %v1998 = vpop.f32.mrb[0].mxu0
      %v1999 = vadd.f32 %v1862, %v1998
      %v2000 = vpop.f32.mrb[0].mxu0
      %2001 = vmatprep.mubr.bf16.mxu0 0
      %2002 = vmatmul.mubr.bf16.gmra.mrb[0].mxu0 %v1892
      %v2003 = vpop.f32.mrb[0].mxu0
      %v2004 = vadd.f32 %v1862, %v2003
      %v2005 = vpop.f32.mrb[0].mxu0
      %v2006 = vpop.f32.mrb[0].mxu0
      %v2007 = vadd.f32 %v1862, %v2006
      %v2008 = vpop.f32.mrb[0].mxu0
      %2009 = vmatprep.mubr.bf16.mxu0 0
      %2010 = vmatmul.mubr.bf16.gmra.mrb[0].mxu0 %v1895
      %v2011 = vpop.f32.mrb[0].mxu0
      %v2012 = vadd.f32 %v1862, %v2011
      %v2013 = vpop.f32.mrb[0].mxu0
      %v2014 = vpop.f32.mrb[0].mxu0
      %v2015 = vadd.f32 %v1862, %v2014
      %v2016 = vpop.f32.mrb[0].mxu0
      %2017 = vmatprep.mubr.bf16.mxu0 0
      %2018 = vmatmul.mubr.bf16.gmra.mrb[0].mxu0 %v1898
      %v2019 = vpop.f32.mrb[0].mxu0
      %v2020 = vadd.f32 %v1862, %v2019
      %v2021 = vpop.f32.mrb[0].mxu0
      %v2022 = vpop.f32.mrb[0].mxu0
      %v2023 = vadd.f32 %v1862, %v2022
      %v2024 = vpop.f32.mrb[0].mxu0
      %2025 = vmatprep.mubr.bf16.mxu0 0
      %2026 = vmatmul.mubr.bf16.gmra.mrb[0].mxu0 %v1901
      %v2027 = vpop.f32.mrb[0].mxu0
      %v2028 = vadd.f32 %v1862, %v2027
      %v2029 = vpop.f32.mrb[0].mxu0
      %v2030 = vpop.f32.mrb[0].mxu0
      %v2031 = vadd.f32 %v1862, %v2030
      %v2032 = vpop.f32.mrb[0].mxu0
      %2033 = vmatprep.mubr.bf16.mxu0 0
      %2034 = vmatmul.mubr.bf16.gmra.mrb[0].mxu0 %v1904
      %v2035 = vpop.f32.mrb[0].mxu0
      %v2036 = vadd.f32 %v1862, %v2035
      %v2037 = vpop.f32.mrb[0].mxu0
      %v2038 = vpop.f32.mrb[0].mxu0
      %v2039 = vadd.f32 %v1862, %v2038
      %v2040 = vpop.f32.mrb[0].mxu0
      %2041 = vmatprep.mubr.bf16.mxu0 0
      %2042 = vmatmul.mubr.bf16.gmra.mrb[0].mxu0 %v1907
      %v2043 = vpop.f32.mrb[0].mxu0
      %v2044 = vadd.f32 %v1862, %v2043
      %v2045 = vpop.f32.mrb[0].mxu0
      %v2046 = vpop.f32.mrb[0].mxu0
      %v2047 = vadd.f32 %v1862, %v2046
      %v2048 = vpop.f32.mrb[0].mxu0
      %2049 = vmatprep.mubr.bf16.mxu0 0
      %2050 = vmatmul.mubr.bf16.gmra.mrb[0].mxu0 %v1910
      %v2051 = vpop.f32.mrb[0].mxu0
      %v2052 = vadd.f32 %v1862, %v2051
      %v2053 = vpop.f32.mrb[0].mxu0
      %v2054 = vpop.f32.mrb[0].mxu0
      %v2055 = vadd.f32 %v1862, %v2054
      %v2056 = vpop.f32.mrb[0].mxu0
      %2057 = vmatprep.mubr.bf16.mxu0 0
      %2058 = vmatmul.mubr.bf16.gmra.mrb[0].mxu0 %v1913
      %v2059 = vpop.f32.mrb[0].mxu0
      %v2060 = vadd.f32 %v1862, %v2059
      %v2061 = vpop.f32.mrb[0].mxu0
      %v2062 = vpop.f32.mrb[0].mxu0
      %v2063 = vadd.f32 %v1862, %v2062
      %v2064 = vpop.f32.mrb[0].mxu0
      %2065 = vmatprep.mubr.bf16.mxu0 0
      %2066 = vmatmul.mubr.bf16.gmra.mrb[0].mxu0 %v1916
      %v2067 = vpop.f32.mrb[0].mxu0
      %v2068 = vadd.f32 %v1862, %v2067
      %v2069 = vpop.f32.mrb[0].mxu0
      %v2070 = vpop.f32.mrb[0].mxu0
      %v2071 = vadd.f32 %v1862, %v2070
      %v2072 = vpop.f32.mrb[0].mxu0
      %2073 = vmatprep.mubr.bf16.mxu0 0
      %2074 = vmatmul.mubr.bf16.gmra.mrb[0].mxu0 %v1919
      %v2075 = vpop.f32.mrb[0].mxu0
      %v2076 = vadd.f32 %v1862, %v2075
      %v2077 = vpop.f32.mrb[0].mxu0
      %v2078 = vpop.f32.mrb[0].mxu0
      %v2079 = vadd.f32 %v1862, %v2078
      %v2080 = vpop.f32.mrb[0].mxu0
      %2081 = vmatprep.mubr.bf16.mxu0 0
      %2082 = vmatmul.mubr.bf16.gmra.mrb[0].mxu0 %v1922
      %v2083 = vpop.f32.mrb[0].mxu0
      %v2084 = vadd.f32 %v1862, %v2083
      %v2085 = vpop.f32.mrb[0].mxu0
      %v2086 = vpop.f32.mrb[0].mxu0
      %v2087 = vadd.f32 %v1862, %v2086
      %v2088 = vpop.f32.mrb[0].mxu0
      %2089 = vmatprep.mubr.bf16.mxu0 0
      %2090 = vmatmul.mubr.bf16.gmra.mrb[0].mxu0 %v1925
      %v2091 = vpop.f32.mrb[0].mxu0
      %v2092 = vadd.f32 %v1862, %v2091
      %v2093 = vpop.f32.mrb[0].mxu0
      %v2094 = vpop.f32.mrb[0].mxu0
      %v2095 = vadd.f32 %v1862, %v2094
      %v2096 = vpop.f32.mrb[0].mxu0
      %2097 = vmatprep.mubr.bf16.mxu0 0
      %2098 = vmatmul.mubr.bf16.gmra.mrb[0].mxu0 %v1928
      %v2099 = vpop.f32.mrb[0].mxu0
      %v2100 = vadd.f32 %v1862, %v2099
      %v2101 = vpop.f32.mrb[0].mxu0
      %v2102 = vpop.f32.mrb[0].mxu0
      %v2103 = vadd.f32 %v1862, %v2102
      %v2104 = vpop.f32.mrb[0].mxu0
      %2105 = vmatprep.mubr.bf16.mxu0 0
      %2106 = vmatmul.mubr.bf16.gmra.mrb[0].mxu0 %v1931
      %v2107 = vpop.f32.mrb[0].mxu0
      %v2108 = vadd.f32 %v1862, %v2107
      %v2109 = vpop.f32.mrb[0].mxu0
      %v2110 = vpop.f32.mrb[0].mxu0
      %v2111 = vadd.f32 %v1862, %v2110
      %v2112 = vpop.f32.mrb[0].mxu0
      %2113 = vdwg.mxu0
      %v2114 = vlaneseq
      %v2115 = vshrl.u32 %v2114, 7
      %v2116 = vadd.s32 %v2115, 8
      %v2117 = vadd.s32 %v2115, 16
      %v2118 = vadd.s32 %v2115, 24
      %v2119 = vadd.s32 %v2115, 32
      %v2120 = vadd.s32 %v2115, 40
      %v2121 = vadd.s32 %v2115, 48
      %v2122 = vadd.s32 %v2115, 56
      %v2123 = vadd.s32 %v2115, 64
      %v2124 = vadd.s32 %v2115, 72
      %v2125 = vadd.s32 %v2115, 80
      %v2126 = vadd.s32 %v2115, 88
      %v2127 = vadd.s32 %v2115, 96
      %v2128 = vadd.s32 %v2115, 104
      %v2129 = vadd.s32 %v2115, 112
      %v2130 = vadd.s32 %v2115, 120
      %v2131 = vadd.s32 %v2115, 128
      %v2132 = vadd.s32 %v2115, 136
      %v2133 = vadd.s32 %v2115, 144
      %v2134 = vadd.s32 %v2115, 152
      %v2135 = vadd.s32 %v2115, 160
      %v2136 = vadd.s32 %v2115, 168
      %v2137 = vadd.s32 %v2115, 176
      %v2138 = vadd.s32 %v2115, 184
      %v2139 = vadd.s32 %v2115, 192
      %v2140 = vadd.s32 %v2115, 200
      %v2141 = vadd.s32 %v2115, 208
      %v2142 = vadd.s32 %v2115, 216
      %v2143 = vadd.s32 %v2115, 224
      %v2144 = vadd.s32 %v2115, 232
      %v2145 = vadd.s32 %v2115, 240
      %v2146 = vadd.s32 %v2115, 248
      %v2147 = vadd.s32 %v2115, 256
      %v2148 = vadd.s32 %v2115, 264
      %v2149 = vadd.s32 %v2115, 272
      %v2150 = vadd.s32 %v2115, 280
      %vm2151 = vcmp.lt.s32.totalorder %v2115, 0
      %v2152 = vsub.s32 0, %v2115
      %v2153 = vsel %vm2151, %v2152, %v2115
      %v2154 = vmul.u32.u64.compose %v2153, 3817748708
      %v2155 = vextract.low.u32 %v2154
      %v2156 = vextract.high.u32 %v2154
      %v2157 = vshrl.u32 %v2156, 4
      %v2158 = vmul.u32 %v2157, 18
      %v2159 = vsub.s32 %v2153, %v2158
      %v2160 = vsub.s32 0, %v2159
      %v2161 = vsel %vm2151, %v2160, %v2159
      %vm2162 = vcmp.lt.s32.totalorder %v2116, 0
      %v2163 = vsub.s32 0, %v2116
      %v2164 = vsel %vm2162, %v2163, %v2116
      %v2165 = vmul.u32.u64.compose %v2164, 3817748708
      %v2166 = vextract.low.u32 %v2165
      %v2167 = vextract.high.u32 %v2165
      %v2168 = vshrl.u32 %v2167, 4
      %v2169 = vmul.u32 %v2168, 18
      %v2170 = vsub.s32 %v2164, %v2169
      %v2171 = vsub.s32 0, %v2170
      %v2172 = vsel %vm2162, %v2171, %v2170
      %vm2173 = vcmp.lt.s32.totalorder %v2117, 0
      %v2174 = vsub.s32 0, %v2117
      %v2175 = vsel %vm2173, %v2174, %v2117
      %v2176 = vmul.u32.u64.compose %v2175, 3817748708
      %v2177 = vextract.low.u32 %v2176
      %v2178 = vextract.high.u32 %v2176
      %v2179 = vshrl.u32 %v2178, 4
      %v2180 = vmul.u32 %v2179, 18
      %v2181 = vsub.s32 %v2175, %v2180
      %v2182 = vsub.s32 0, %v2181
      %v2183 = vsel %vm2173, %v2182, %v2181
      %vm2184 = vcmp.lt.s32.totalorder %v2118, 0
      %v2185 = vsub.s32 0, %v2118
      %v2186 = vsel %vm2184, %v2185, %v2118
      %v2187 = vmul.u32.u64.compose %v2186, 3817748708
      %v2188 = vextract.low.u32 %v2187
      %v2189 = vextract.high.u32 %v2187
      %v2190 = vshrl.u32 %v2189, 4
      %v2191 = vmul.u32 %v2190, 18
      %v2192 = vsub.s32 %v2186, %v2191
      %v2193 = vsub.s32 0, %v2192
      %v2194 = vsel %vm2184, %v2193, %v2192
      %vm2195 = vcmp.lt.s32.totalorder %v2119, 0
      %v2196 = vsub.s32 0, %v2119
      %v2197 = vsel %vm2195, %v2196, %v2119
      %v2198 = vmul.u32.u64.compose %v2197, 3817748708
      %v2199 = vextract.low.u32 %v2198
      %v2200 = vextract.high.u32 %v2198
      %v2201 = vshrl.u32 %v2200, 4
      %v2202 = vmul.u32 %v2201, 18
      %v2203 = vsub.s32 %v2197, %v2202
      %v2204 = vsub.s32 0, %v2203
      %v2205 = vsel %vm2195, %v2204, %v2203
      %vm2206 = vcmp.lt.s32.totalorder %v2120, 0
      %v2207 = vsub.s32 0, %v2120
      %v2208 = vsel %vm2206, %v2207, %v2120
      %v2209 = vmul.u32.u64.compose %v2208, 3817748708
      %v2210 = vextract.low.u32 %v2209
      %v2211 = vextract.high.u32 %v2209
      %v2212 = vshrl.u32 %v2211, 4
      %v2213 = vmul.u32 %v2212, 18
      %v2214 = vsub.s32 %v2208, %v2213
      %v2215 = vsub.s32 0, %v2214
      %v2216 = vsel %vm2206, %v2215, %v2214
      %vm2217 = vcmp.lt.s32.totalorder %v2121, 0
      %v2218 = vsub.s32 0, %v2121
      %v2219 = vsel %vm2217, %v2218, %v2121
      %v2220 = vmul.u32.u64.compose %v2219, 3817748708
      %v2221 = vextract.low.u32 %v2220
      %v2222 = vextract.high.u32 %v2220
      %v2223 = vshrl.u32 %v2222, 4
      %v2224 = vmul.u32 %v2223, 18
      %v2225 = vsub.s32 %v2219, %v2224
      %v2226 = vsub.s32 0, %v2225
      %v2227 = vsel %vm2217, %v2226, %v2225
      %vm2228 = vcmp.lt.s32.totalorder %v2122, 0
      %v2229 = vsub.s32 0, %v2122
      %v2230 = vsel %vm2228, %v2229, %v2122
      %v2231 = vmul.u32.u64.compose %v2230, 3817748708
      %v2232 = vextract.low.u32 %v2231
      %v2233 = vextract.high.u32 %v2231
      %v2234 = vshrl.u32 %v2233, 4
      %v2235 = vmul.u32 %v2234, 18
      %v2236 = vsub.s32 %v2230, %v2235
      %v2237 = vsub.s32 0, %v2236
      %v2238 = vsel %vm2228, %v2237, %v2236
      %vm2239 = vcmp.lt.s32.totalorder %v2123, 0
      %v2240 = vsub.s32 0, %v2123
      %v2241 = vsel %vm2239, %v2240, %v2123
      %v2242 = vmul.u32.u64.compose %v2241, 3817748708
      %v2243 = vextract.low.u32 %v2242
      %v2244 = vextract.high.u32 %v2242
      %v2245 = vshrl.u32 %v2244, 4
      %v2246 = vmul.u32 %v2245, 18
      %v2247 = vsub.s32 %v2241, %v2246
      %v2248 = vsub.s32 0, %v2247
      %v2249 = vsel %vm2239, %v2248, %v2247
      %vm2250 = vcmp.lt.s32.totalorder %v2124, 0
      %v2251 = vsub.s32 0, %v2124
      %v2252 = vsel %vm2250, %v2251, %v2124
      %v2253 = vmul.u32.u64.compose %v2252, 3817748708
      %v2254 = vextract.low.u32 %v2253
      %v2255 = vextract.high.u32 %v2253
      %v2256 = vshrl.u32 %v2255, 4
      %v2257 = vmul.u32 %v2256, 18
      %v2258 = vsub.s32 %v2252, %v2257
      %v2259 = vsub.s32 0, %v2258
      %v2260 = vsel %vm2250, %v2259, %v2258
      %vm2261 = vcmp.lt.s32.totalorder %v2125, 0
      %v2262 = vsub.s32 0, %v2125
      %v2263 = vsel %vm2261, %v2262, %v2125
      %v2264 = vmul.u32.u64.compose %v2263, 3817748708
      %v2265 = vextract.low.u32 %v2264
      %v2266 = vextract.high.u32 %v2264
      %v2267 = vshrl.u32 %v2266, 4
      %v2268 = vmul.u32 %v2267, 18
      %v2269 = vsub.s32 %v2263, %v2268
      %v2270 = vsub.s32 0, %v2269
      %v2271 = vsel %vm2261, %v2270, %v2269
      %vm2272 = vcmp.lt.s32.totalorder %v2126, 0
      %v2273 = vsub.s32 0, %v2126
      %v2274 = vsel %vm2272, %v2273, %v2126
      %v2275 = vmul.u32.u64.compose %v2274, 3817748708
      %v2276 = vextract.low.u32 %v2275
      %v2277 = vextract.high.u32 %v2275
      %v2278 = vshrl.u32 %v2277, 4
      %v2279 = vmul.u32 %v2278, 18
      %v2280 = vsub.s32 %v2274, %v2279
      %v2281 = vsub.s32 0, %v2280
      %v2282 = vsel %vm2272, %v2281, %v2280
      %vm2283 = vcmp.lt.s32.totalorder %v2127, 0
      %v2284 = vsub.s32 0, %v2127
      %v2285 = vsel %vm2283, %v2284, %v2127
      %v2286 = vmul.u32.u64.compose %v2285, 3817748708
      %v2287 = vextract.low.u32 %v2286
      %v2288 = vextract.high.u32 %v2286
      %v2289 = vshrl.u32 %v2288, 4
      %v2290 = vmul.u32 %v2289, 18
      %v2291 = vsub.s32 %v2285, %v2290
      %v2292 = vsub.s32 0, %v2291
      %v2293 = vsel %vm2283, %v2292, %v2291
      %vm2294 = vcmp.lt.s32.totalorder %v2128, 0
      %v2295 = vsub.s32 0, %v2128
      %v2296 = vsel %vm2294, %v2295, %v2128
      %v2297 = vmul.u32.u64.compose %v2296, 3817748708
      %v2298 = vextract.low.u32 %v2297
      %v2299 = vextract.high.u32 %v2297
      %v2300 = vshrl.u32 %v2299, 4
      %v2301 = vmul.u32 %v2300, 18
      %v2302 = vsub.s32 %v2296, %v2301
      %v2303 = vsub.s32 0, %v2302
      %v2304 = vsel %vm2294, %v2303, %v2302
      %vm2305 = vcmp.lt.s32.totalorder %v2129, 0
      %v2306 = vsub.s32 0, %v2129
      %v2307 = vsel %vm2305, %v2306, %v2129
      %v2308 = vmul.u32.u64.compose %v2307, 3817748708
      %v2309 = vextract.low.u32 %v2308
      %v2310 = vextract.high.u32 %v2308
      %v2311 = vshrl.u32 %v2310, 4
      %v2312 = vmul.u32 %v2311, 18
      %v2313 = vsub.s32 %v2307, %v2312
      %v2314 = vsub.s32 0, %v2313
      %v2315 = vsel %vm2305, %v2314, %v2313
      %vm2316 = vcmp.lt.s32.totalorder %v2130, 0
      %v2317 = vsub.s32 0, %v2130
      %v2318 = vsel %vm2316, %v2317, %v2130
      %v2319 = vmul.u32.u64.compose %v2318, 3817748708
      %v2320 = vextract.low.u32 %v2319
      %v2321 = vextract.high.u32 %v2319
      %v2322 = vshrl.u32 %v2321, 4
      %v2323 = vmul.u32 %v2322, 18
      %v2324 = vsub.s32 %v2318, %v2323
      %v2325 = vsub.s32 0, %v2324
      %v2326 = vsel %vm2316, %v2325, %v2324
      %vm2327 = vcmp.lt.s32.totalorder %v2131, 0
      %v2328 = vsub.s32 0, %v2131
      %v2329 = vsel %vm2327, %v2328, %v2131
      %v2330 = vmul.u32.u64.compose %v2329, 3817748708
      %v2331 = vextract.low.u32 %v2330
      %v2332 = vextract.high.u32 %v2330
      %v2333 = vshrl.u32 %v2332, 4
      %v2334 = vmul.u32 %v2333, 18
      %v2335 = vsub.s32 %v2329, %v2334
      %v2336 = vsub.s32 0, %v2335
      %v2337 = vsel %vm2327, %v2336, %v2335
      %vm2338 = vcmp.lt.s32.totalorder %v2132, 0
      %v2339 = vsub.s32 0, %v2132
      %v2340 = vsel %vm2338, %v2339, %v2132
      %v2341 = vmul.u32.u64.compose %v2340, 3817748708
      %v2342 = vextract.low.u32 %v2341
      %v2343 = vextract.high.u32 %v2341
      %v2344 = vshrl.u32 %v2343, 4
      %v2345 = vmul.u32 %v2344, 18
      %v2346 = vsub.s32 %v2340, %v2345
      %v2347 = vsub.s32 0, %v2346
      %v2348 = vsel %vm2338, %v2347, %v2346
      %vm2349 = vcmp.lt.s32.totalorder %v2133, 0
      %v2350 = vsub.s32 0, %v2133
      %v2351 = vsel %vm2349, %v2350, %v2133
      %v2352 = vmul.u32.u64.compose %v2351, 3817748708
      %v2353 = vextract.low.u32 %v2352
      %v2354 = vextract.high.u32 %v2352
      %v2355 = vshrl.u32 %v2354, 4
      %v2356 = vmul.u32 %v2355, 18
      %v2357 = vsub.s32 %v2351, %v2356
      %v2358 = vsub.s32 0, %v2357
      %v2359 = vsel %vm2349, %v2358, %v2357
      %vm2360 = vcmp.lt.s32.totalorder %v2134, 0
      %v2361 = vsub.s32 0, %v2134
      %v2362 = vsel %vm2360, %v2361, %v2134
      %v2363 = vmul.u32.u64.compose %v2362, 3817748708
      %v2364 = vextract.low.u32 %v2363
      %v2365 = vextract.high.u32 %v2363
      %v2366 = vshrl.u32 %v2365, 4
      %v2367 = vmul.u32 %v2366, 18
      %v2368 = vsub.s32 %v2362, %v2367
      %v2369 = vsub.s32 0, %v2368
      %v2370 = vsel %vm2360, %v2369, %v2368
      %vm2371 = vcmp.lt.s32.totalorder %v2135, 0
      %v2372 = vsub.s32 0, %v2135
      %v2373 = vsel %vm2371, %v2372, %v2135
      %v2374 = vmul.u32.u64.compose %v2373, 3817748708
      %v2375 = vextract.low.u32 %v2374
      %v2376 = vextract.high.u32 %v2374
      %v2377 = vshrl.u32 %v2376, 4
      %v2378 = vmul.u32 %v2377, 18
      %v2379 = vsub.s32 %v2373, %v2378
      %v2380 = vsub.s32 0, %v2379
      %v2381 = vsel %vm2371, %v2380, %v2379
      %vm2382 = vcmp.lt.s32.totalorder %v2136, 0
      %v2383 = vsub.s32 0, %v2136
      %v2384 = vsel %vm2382, %v2383, %v2136
      %v2385 = vmul.u32.u64.compose %v2384, 3817748708
      %v2386 = vextract.low.u32 %v2385
      %v2387 = vextract.high.u32 %v2385
      %v2388 = vshrl.u32 %v2387, 4
      %v2389 = vmul.u32 %v2388, 18
      %v2390 = vsub.s32 %v2384, %v2389
      %v2391 = vsub.s32 0, %v2390
      %v2392 = vsel %vm2382, %v2391, %v2390
      %vm2393 = vcmp.lt.s32.totalorder %v2137, 0
      %v2394 = vsub.s32 0, %v2137
      %v2395 = vsel %vm2393, %v2394, %v2137
      %v2396 = vmul.u32.u64.compose %v2395, 3817748708
      %v2397 = vextract.low.u32 %v2396
      %v2398 = vextract.high.u32 %v2396
      %v2399 = vshrl.u32 %v2398, 4
      %v2400 = vmul.u32 %v2399, 18
      %v2401 = vsub.s32 %v2395, %v2400
      %v2402 = vsub.s32 0, %v2401
      %v2403 = vsel %vm2393, %v2402, %v2401
      %vm2404 = vcmp.lt.s32.totalorder %v2138, 0
      %v2405 = vsub.s32 0, %v2138
      %v2406 = vsel %vm2404, %v2405, %v2138
      %v2407 = vmul.u32.u64.compose %v2406, 3817748708
      %v2408 = vextract.low.u32 %v2407
      %v2409 = vextract.high.u32 %v2407
      %v2410 = vshrl.u32 %v2409, 4
      %v2411 = vmul.u32 %v2410, 18
      %v2412 = vsub.s32 %v2406, %v2411
      %v2413 = vsub.s32 0, %v2412
      %v2414 = vsel %vm2404, %v2413, %v2412
      %vm2415 = vcmp.lt.s32.totalorder %v2139, 0
      %v2416 = vsub.s32 0, %v2139
      %v2417 = vsel %vm2415, %v2416, %v2139
      %v2418 = vmul.u32.u64.compose %v2417, 3817748708
      %v2419 = vextract.low.u32 %v2418
      %v2420 = vextract.high.u32 %v2418
      %v2421 = vshrl.u32 %v2420, 4
      %v2422 = vmul.u32 %v2421, 18
      %v2423 = vsub.s32 %v2417, %v2422
      %v2424 = vsub.s32 0, %v2423
      %v2425 = vsel %vm2415, %v2424, %v2423
      %vm2426 = vcmp.lt.s32.totalorder %v2140, 0
      %v2427 = vsub.s32 0, %v2140
      %v2428 = vsel %vm2426, %v2427, %v2140
      %v2429 = vmul.u32.u64.compose %v2428, 3817748708
      %v2430 = vextract.low.u32 %v2429
      %v2431 = vextract.high.u32 %v2429
      %v2432 = vshrl.u32 %v2431, 4
      %v2433 = vmul.u32 %v2432, 18
      %v2434 = vsub.s32 %v2428, %v2433
      %v2435 = vsub.s32 0, %v2434
      %v2436 = vsel %vm2426, %v2435, %v2434
      %vm2437 = vcmp.lt.s32.totalorder %v2141, 0
      %v2438 = vsub.s32 0, %v2141
      %v2439 = vsel %vm2437, %v2438, %v2141
      %v2440 = vmul.u32.u64.compose %v2439, 3817748708
      %v2441 = vextract.low.u32 %v2440
      %v2442 = vextract.high.u32 %v2440
      %v2443 = vshrl.u32 %v2442, 4
      %v2444 = vmul.u32 %v2443, 18
      %v2445 = vsub.s32 %v2439, %v2444
      %v2446 = vsub.s32 0, %v2445
      %v2447 = vsel %vm2437, %v2446, %v2445
      %vm2448 = vcmp.lt.s32.totalorder %v2142, 0
      %v2449 = vsub.s32 0, %v2142
      %v2450 = vsel %vm2448, %v2449, %v2142
      %v2451 = vmul.u32.u64.compose %v2450, 3817748708
      %v2452 = vextract.low.u32 %v2451
      %v2453 = vextract.high.u32 %v2451
      %v2454 = vshrl.u32 %v2453, 4
      %v2455 = vmul.u32 %v2454, 18
      %v2456 = vsub.s32 %v2450, %v2455
      %v2457 = vsub.s32 0, %v2456
      %v2458 = vsel %vm2448, %v2457, %v2456
      %vm2459 = vcmp.lt.s32.totalorder %v2143, 0
      %v2460 = vsub.s32 0, %v2143
      %v2461 = vsel %vm2459, %v2460, %v2143
      %v2462 = vmul.u32.u64.compose %v2461, 3817748708
      %v2463 = vextract.low.u32 %v2462
      %v2464 = vextract.high.u32 %v2462
      %v2465 = vshrl.u32 %v2464, 4
      %v2466 = vmul.u32 %v2465, 18
      %v2467 = vsub.s32 %v2461, %v2466
      %v2468 = vsub.s32 0, %v2467
      %v2469 = vsel %vm2459, %v2468, %v2467
      %vm2470 = vcmp.lt.s32.totalorder %v2144, 0
      %v2471 = vsub.s32 0, %v2144
      %v2472 = vsel %vm2470, %v2471, %v2144
      %v2473 = vmul.u32.u64.compose %v2472, 3817748708
      %v2474 = vextract.low.u32 %v2473
      %v2475 = vextract.high.u32 %v2473
      %v2476 = vshrl.u32 %v2475, 4
      %v2477 = vmul.u32 %v2476, 18
      %v2478 = vsub.s32 %v2472, %v2477
      %v2479 = vsub.s32 0, %v2478
      %v2480 = vsel %vm2470, %v2479, %v2478
      %vm2481 = vcmp.lt.s32.totalorder %v2145, 0
      %v2482 = vsub.s32 0, %v2145
      %v2483 = vsel %vm2481, %v2482, %v2145
      %v2484 = vmul.u32.u64.compose %v2483, 3817748708
      %v2485 = vextract.low.u32 %v2484
      %v2486 = vextract.high.u32 %v2484
      %v2487 = vshrl.u32 %v2486, 4
      %v2488 = vmul.u32 %v2487, 18
      %v2489 = vsub.s32 %v2483, %v2488
      %v2490 = vsub.s32 0, %v2489
      %v2491 = vsel %vm2481, %v2490, %v2489
      %vm2492 = vcmp.lt.s32.totalorder %v2146, 0
      %v2493 = vsub.s32 0, %v2146
      %v2494 = vsel %vm2492, %v2493, %v2146
      %v2495 = vmul.u32.u64.compose %v2494, 3817748708
      %v2496 = vextract.low.u32 %v2495
      %v2497 = vextract.high.u32 %v2495
      %v2498 = vshrl.u32 %v2497, 4
      %v2499 = vmul.u32 %v2498, 18
      %v2500 = vsub.s32 %v2494, %v2499
      %v2501 = vsub.s32 0, %v2500
      %v2502 = vsel %vm2492, %v2501, %v2500
      %vm2503 = vcmp.lt.s32.totalorder %v2147, 0
      %v2504 = vsub.s32 0, %v2147
      %v2505 = vsel %vm2503, %v2504, %v2147
      %v2506 = vmul.u32.u64.compose %v2505, 3817748708
      %v2507 = vextract.low.u32 %v2506
      %v2508 = vextract.high.u32 %v2506
      %v2509 = vshrl.u32 %v2508, 4
      %v2510 = vmul.u32 %v2509, 18
      %v2511 = vsub.s32 %v2505, %v2510
      %v2512 = vsub.s32 0, %v2511
      %v2513 = vsel %vm2503, %v2512, %v2511
      %vm2514 = vcmp.lt.s32.totalorder %v2148, 0
      %v2515 = vsub.s32 0, %v2148
      %v2516 = vsel %vm2514, %v2515, %v2148
      %v2517 = vmul.u32.u64.compose %v2516, 3817748708
      %v2518 = vextract.low.u32 %v2517
      %v2519 = vextract.high.u32 %v2517
      %v2520 = vshrl.u32 %v2519, 4
      %v2521 = vmul.u32 %v2520, 18
      %v2522 = vsub.s32 %v2516, %v2521
      %v2523 = vsub.s32 0, %v2522
      %v2524 = vsel %vm2514, %v2523, %v2522
      %vm2525 = vcmp.lt.s32.totalorder %v2149, 0
      %v2526 = vsub.s32 0, %v2149
      %v2527 = vsel %vm2525, %v2526, %v2149
      %v2528 = vmul.u32.u64.compose %v2527, 3817748708
      %v2529 = vextract.low.u32 %v2528
      %v2530 = vextract.high.u32 %v2528
      %v2531 = vshrl.u32 %v2530, 4
      %v2532 = vmul.u32 %v2531, 18
      %v2533 = vsub.s32 %v2527, %v2532
      %v2534 = vsub.s32 0, %v2533
      %v2535 = vsel %vm2525, %v2534, %v2533
      %vm2536 = vcmp.lt.s32.totalorder %v2150, 0
      %v2537 = vsub.s32 0, %v2150
      %v2538 = vsel %vm2536, %v2537, %v2150
      %v2539 = vmul.u32.u64.compose %v2538, 3817748708
      %v2540 = vextract.low.u32 %v2539
      %v2541 = vextract.high.u32 %v2539
      %v2542 = vshrl.u32 %v2541, 4
      %v2543 = vmul.u32 %v2542, 18
      %v2544 = vsub.s32 %v2538, %v2543
      %v2545 = vsub.s32 0, %v2544
      %v2546 = vsel %vm2536, %v2545, %v2544
      %vm2547 = vcmp.ne.s32.totalorder %v2161, 0
      %vm2548 = vcmp.ne.s32.totalorder %v2172, 0
      %vm2549 = vcmp.ne.s32.totalorder %v2183, 0
      %vm2550 = vcmp.ne.s32.totalorder %v2194, 0
      %vm2551 = vcmp.ne.s32.totalorder %v2205, 0
      %vm2552 = vcmp.ne.s32.totalorder %v2216, 0
      %vm2553 = vcmp.ne.s32.totalorder %v2227, 0
      %vm2554 = vcmp.ne.s32.totalorder %v2238, 0
      %vm2555 = vcmp.ne.s32.totalorder %v2249, 0
      %vm2556 = vcmp.ne.s32.totalorder %v2260, 0
      %vm2557 = vcmp.ne.s32.totalorder %v2271, 0
      %vm2558 = vcmp.ne.s32.totalorder %v2282, 0
      %vm2559 = vcmp.ne.s32.totalorder %v2293, 0
      %vm2560 = vcmp.ne.s32.totalorder %v2304, 0
      %vm2561 = vcmp.ne.s32.totalorder %v2315, 0
      %vm2562 = vcmp.ne.s32.totalorder %v2326, 0
      %vm2563 = vcmp.ne.s32.totalorder %v2337, 0
      %vm2564 = vcmp.ne.s32.totalorder %v2348, 0
      %vm2565 = vcmp.ne.s32.totalorder %v2359, 0
      %vm2566 = vcmp.ne.s32.totalorder %v2370, 0
      %vm2567 = vcmp.ne.s32.totalorder %v2381, 0
      %vm2568 = vcmp.ne.s32.totalorder %v2392, 0
      %vm2569 = vcmp.ne.s32.totalorder %v2403, 0
      %vm2570 = vcmp.ne.s32.totalorder %v2414, 0
      %vm2571 = vcmp.ne.s32.totalorder %v2425, 0
      %vm2572 = vcmp.ne.s32.totalorder %v2436, 0
      %vm2573 = vcmp.ne.s32.totalorder %v2447, 0
      %vm2574 = vcmp.ne.s32.totalorder %v2458, 0
      %vm2575 = vcmp.ne.s32.totalorder %v2469, 0
      %vm2576 = vcmp.ne.s32.totalorder %v2480, 0
      %vm2577 = vcmp.ne.s32.totalorder %v2491, 0
      %vm2578 = vcmp.ne.s32.totalorder %v2502, 0
      %vm2579 = vcmp.ne.s32.totalorder %v2513, 0
      %vm2580 = vcmp.ne.s32.totalorder %v2524, 0
      %vm2581 = vcmp.ne.s32.totalorder %v2535, 0
      %vm2582 = vcmp.ne.s32.totalorder %v2546, 0
      %vm2583 = vcmp.lt.s32.totalorder %v2161, 0
      %vm2584 = vcmp.lt.s32.totalorder %v2172, 0
      %vm2585 = vcmp.lt.s32.totalorder %v2183, 0
      %vm2586 = vcmp.lt.s32.totalorder %v2194, 0
      %vm2587 = vcmp.lt.s32.totalorder %v2205, 0
      %vm2588 = vcmp.lt.s32.totalorder %v2216, 0
      %vm2589 = vcmp.lt.s32.totalorder %v2227, 0
      %vm2590 = vcmp.lt.s32.totalorder %v2238, 0
      %vm2591 = vcmp.lt.s32.totalorder %v2249, 0
      %vm2592 = vcmp.lt.s32.totalorder %v2260, 0
      %vm2593 = vcmp.lt.s32.totalorder %v2271, 0
      %vm2594 = vcmp.lt.s32.totalorder %v2282, 0
      %vm2595 = vcmp.lt.s32.totalorder %v2293, 0
      %vm2596 = vcmp.lt.s32.totalorder %v2304, 0
      %vm2597 = vcmp.lt.s32.totalorder %v2315, 0
      %vm2598 = vcmp.lt.s32.totalorder %v2326, 0
      %vm2599 = vcmp.lt.s32.totalorder %v2337, 0
      %vm2600 = vcmp.lt.s32.totalorder %v2348, 0
      %vm2601 = vcmp.lt.s32.totalorder %v2359, 0
      %vm2602 = vcmp.lt.s32.totalorder %v2370, 0
      %vm2603 = vcmp.lt.s32.totalorder %v2381, 0
      %vm2604 = vcmp.lt.s32.totalorder %v2392, 0
      %vm2605 = vcmp.lt.s32.totalorder %v2403, 0
      %vm2606 = vcmp.lt.s32.totalorder %v2414, 0
      %vm2607 = vcmp.lt.s32.totalorder %v2425, 0
      %vm2608 = vcmp.lt.s32.totalorder %v2436, 0
      %vm2609 = vcmp.lt.s32.totalorder %v2447, 0
      %vm2610 = vcmp.lt.s32.totalorder %v2458, 0
      %vm2611 = vcmp.lt.s32.totalorder %v2469, 0
      %vm2612 = vcmp.lt.s32.totalorder %v2480, 0
      %vm2613 = vcmp.lt.s32.totalorder %v2491, 0
      %vm2614 = vcmp.lt.s32.totalorder %v2502, 0
      %vm2615 = vcmp.lt.s32.totalorder %v2513, 0
      %vm2616 = vcmp.lt.s32.totalorder %v2524, 0
      %vm2617 = vcmp.lt.s32.totalorder %v2535, 0
      %vm2618 = vcmp.lt.s32.totalorder %v2546, 0
      %vm2619 = vmand %vm2583, %vm2547
      %vm2620 = vmand %vm2584, %vm2548
      %vm2621 = vmand %vm2585, %vm2549
      %vm2622 = vmand %vm2586, %vm2550
      %vm2623 = vmand %vm2587, %vm2551
      %vm2624 = vmand %vm2588, %vm2552
      %vm2625 = vmand %vm2589, %vm2553
      %vm2626 = vmand %vm2590, %vm2554
      %vm2627 = vmand %vm2591, %vm2555
      %vm2628 = vmand %vm2592, %vm2556
      %vm2629 = vmand %vm2593, %vm2557
      %vm2630 = vmand %vm2594, %vm2558
      %vm2631 = vmand %vm2595, %vm2559
      %vm2632 = vmand %vm2596, %vm2560
      %vm2633 = vmand %vm2597, %vm2561
      %vm2634 = vmand %vm2598, %vm2562
      %vm2635 = vmand %vm2599, %vm2563
      %vm2636 = vmand %vm2600, %vm2564
      %vm2637 = vmand %vm2601, %vm2565
      %vm2638 = vmand %vm2602, %vm2566
      %vm2639 = vmand %vm2603, %vm2567
      %vm2640 = vmand %vm2604, %vm2568
      %vm2641 = vmand %vm2605, %vm2569
      %vm2642 = vmand %vm2606, %vm2570
      %vm2643 = vmand %vm2607, %vm2571
      %vm2644 = vmand %vm2608, %vm2572
      %vm2645 = vmand %vm2609, %vm2573
      %vm2646 = vmand %vm2610, %vm2574
      %vm2647 = vmand %vm2611, %vm2575
      %vm2648 = vmand %vm2612, %vm2576
      %vm2649 = vmand %vm2613, %vm2577
      %vm2650 = vmand %vm2614, %vm2578
      %vm2651 = vmand %vm2615, %vm2579
      %vm2652 = vmand %vm2616, %vm2580
      %vm2653 = vmand %vm2617, %vm2581
      %vm2654 = vmand %vm2618, %vm2582
      %v2655 = vadd.s32 %v2161, 18
      %v2656 = vadd.s32 %v2172, 18
      %v2657 = vadd.s32 %v2183, 18
      %v2658 = vadd.s32 %v2194, 18
      %v2659 = vadd.s32 %v2205, 18
      %v2660 = vadd.s32 %v2216, 18
      %v2661 = vadd.s32 %v2227, 18
      %v2662 = vadd.s32 %v2238, 18
      %v2663 = vadd.s32 %v2249, 18
      %v2664 = vadd.s32 %v2260, 18
      %v2665 = vadd.s32 %v2271, 18
      %v2666 = vadd.s32 %v2282, 18
      %v2667 = vadd.s32 %v2293, 18
      %v2668 = vadd.s32 %v2304, 18
      %v2669 = vadd.s32 %v2315, 18
      %v2670 = vadd.s32 %v2326, 18
      %v2671 = vadd.s32 %v2337, 18
      %v2672 = vadd.s32 %v2348, 18
      %v2673 = vadd.s32 %v2359, 18
      %v2674 = vadd.s32 %v2370, 18
      %v2675 = vadd.s32 %v2381, 18
      %v2676 = vadd.s32 %v2392, 18
      %v2677 = vadd.s32 %v2403, 18
      %v2678 = vadd.s32 %v2414, 18
      %v2679 = vadd.s32 %v2425, 18
      %v2680 = vadd.s32 %v2436, 18
      %v2681 = vadd.s32 %v2447, 18
      %v2682 = vadd.s32 %v2458, 18
      %v2683 = vadd.s32 %v2469, 18
      %v2684 = vadd.s32 %v2480, 18
      %v2685 = vadd.s32 %v2491, 18
      %v2686 = vadd.s32 %v2502, 18
      %v2687 = vadd.s32 %v2513, 18
      %v2688 = vadd.s32 %v2524, 18
      %v2689 = vadd.s32 %v2535, 18
      %v2690 = vadd.s32 %v2546, 18
      %v2691 = vsel %vm2619, %v2655, %v2161
      %v2692 = vsel %vm2620, %v2656, %v2172
      %v2693 = vsel %vm2621, %v2657, %v2183
      %v2694 = vsel %vm2622, %v2658, %v2194
      %v2695 = vsel %vm2623, %v2659, %v2205
      %v2696 = vsel %vm2624, %v2660, %v2216
      %v2697 = vsel %vm2625, %v2661, %v2227
      %v2698 = vsel %vm2626, %v2662, %v2238
      %v2699 = vsel %vm2627, %v2663, %v2249
      %v2700 = vsel %vm2628, %v2664, %v2260
      %v2701 = vsel %vm2629, %v2665, %v2271
      %v2702 = vsel %vm2630, %v2666, %v2282
      %v2703 = vsel %vm2631, %v2667, %v2293
      %v2704 = vsel %vm2632, %v2668, %v2304
      %v2705 = vsel %vm2633, %v2669, %v2315
      %v2706 = vsel %vm2634, %v2670, %v2326
      %v2707 = vsel %vm2635, %v2671, %v2337
      %v2708 = vsel %vm2636, %v2672, %v2348
      %v2709 = vsel %vm2637, %v2673, %v2359
      %v2710 = vsel %vm2638, %v2674, %v2370
      %v2711 = vsel %vm2639, %v2675, %v2381
      %v2712 = vsel %vm2640, %v2676, %v2392
      %v2713 = vsel %vm2641, %v2677, %v2403
      %v2714 = vsel %vm2642, %v2678, %v2414
      %v2715 = vsel %vm2643, %v2679, %v2425
      %v2716 = vsel %vm2644, %v2680, %v2436
      %v2717 = vsel %vm2645, %v2681, %v2447
      %v2718 = vsel %vm2646, %v2682, %v2458
      %v2719 = vsel %vm2647, %v2683, %v2469
      %v2720 = vsel %vm2648, %v2684, %v2480
      %v2721 = vsel %vm2649, %v2685, %v2491
      %v2722 = vsel %vm2650, %v2686, %v2502
      %v2723 = vsel %vm2651, %v2687, %v2513
      %v2724 = vsel %vm2652, %v2688, %v2524
      %v2725 = vsel %vm2653, %v2689, %v2535
      %v2726 = vsel %vm2654, %v2690, %v2546
      %vm2727 = vcmp.lt.s32.totalorder %v2691, 16
      %vm2728 = vcmp.lt.s32.totalorder %v2692, 16
      %vm2729 = vcmp.lt.s32.totalorder %v2693, 16
      %vm2730 = vcmp.lt.s32.totalorder %v2694, 16
      %vm2731 = vcmp.lt.s32.totalorder %v2695, 16
      %vm2732 = vcmp.lt.s32.totalorder %v2696, 16
      %vm2733 = vcmp.lt.s32.totalorder %v2697, 16
      %vm2734 = vcmp.lt.s32.totalorder %v2698, 16
      %vm2735 = vcmp.lt.s32.totalorder %v2699, 16
      %vm2736 = vcmp.lt.s32.totalorder %v2700, 16
      %vm2737 = vcmp.lt.s32.totalorder %v2701, 16
      %vm2738 = vcmp.lt.s32.totalorder %v2702, 16
      %vm2739 = vcmp.lt.s32.totalorder %v2703, 16
      %vm2740 = vcmp.lt.s32.totalorder %v2704, 16
      %vm2741 = vcmp.lt.s32.totalorder %v2705, 16
      %vm2742 = vcmp.lt.s32.totalorder %v2706, 16
      %vm2743 = vcmp.lt.s32.totalorder %v2707, 16
      %vm2744 = vcmp.lt.s32.totalorder %v2708, 16
      %vm2745 = vcmp.lt.s32.totalorder %v2709, 16
      %vm2746 = vcmp.lt.s32.totalorder %v2710, 16
      %vm2747 = vcmp.lt.s32.totalorder %v2711, 16
      %vm2748 = vcmp.lt.s32.totalorder %v2712, 16
      %vm2749 = vcmp.lt.s32.totalorder %v2713, 16
      %vm2750 = vcmp.lt.s32.totalorder %v2714, 16
      %vm2751 = vcmp.lt.s32.totalorder %v2715, 16
      %vm2752 = vcmp.lt.s32.totalorder %v2716, 16
      %vm2753 = vcmp.lt.s32.totalorder %v2717, 16
      %vm2754 = vcmp.lt.s32.totalorder %v2718, 16
      %vm2755 = vcmp.lt.s32.totalorder %v2719, 16
      %vm2756 = vcmp.lt.s32.totalorder %v2720, 16
      %vm2757 = vcmp.lt.s32.totalorder %v2721, 16
      %vm2758 = vcmp.lt.s32.totalorder %v2722, 16
      %vm2759 = vcmp.lt.s32.totalorder %v2723, 16
      %vm2760 = vcmp.lt.s32.totalorder %v2724, 16
      %vm2761 = vcmp.lt.s32.totalorder %v2725, 16
      %vm2762 = vcmp.lt.s32.totalorder %v2726, 16
      %v2763 = vsel %vm2727, 1, 0
      %v2764 = vsel %vm2728, 1, 0
      %v2765 = vsel %vm2729, 1, 0
      %v2766 = vsel %vm2730, 1, 0
      %v2767 = vsel %vm2731, 1, 0
      %v2768 = vsel %vm2732, 1, 0
      %v2769 = vsel %vm2733, 1, 0
      %v2770 = vsel %vm2734, 1, 0
      %v2771 = vsel %vm2735, 1, 0
      %v2772 = vsel %vm2736, 1, 0
      %v2773 = vsel %vm2737, 1, 0
      %v2774 = vsel %vm2738, 1, 0
      %v2775 = vsel %vm2739, 1, 0
      %v2776 = vsel %vm2740, 1, 0
      %v2777 = vsel %vm2741, 1, 0
      %v2778 = vsel %vm2742, 1, 0
      %v2779 = vsel %vm2743, 1, 0
      %v2780 = vsel %vm2744, 1, 0
      %v2781 = vsel %vm2745, 1, 0
      %v2782 = vsel %vm2746, 1, 0
      %v2783 = vsel %vm2747, 1, 0
      %v2784 = vsel %vm2748, 1, 0
      %v2785 = vsel %vm2749, 1, 0
      %v2786 = vsel %vm2750, 1, 0
      %v2787 = vsel %vm2751, 1, 0
      %v2788 = vsel %vm2752, 1, 0
      %v2789 = vsel %vm2753, 1, 0
      %v2790 = vsel %vm2754, 1, 0
      %v2791 = vsel %vm2755, 1, 0
      %v2792 = vsel %vm2756, 1, 0
      %v2793 = vsel %vm2757, 1, 0
      %v2794 = vsel %vm2758, 1, 0
      %v2795 = vsel %vm2759, 1, 0
      %v2796 = vsel %vm2760, 1, 0
      %v2797 = vsel %vm2761, 1, 0
      %v2798 = vsel %vm2762, 1, 0
      %vm2799 = vcmp.eq.s32.totalorder %v2763, 1
      %vm2800 = vcmp.eq.s32.totalorder %v2764, 1
      %vm2801 = vcmp.eq.s32.totalorder %v2765, 1
      %vm2802 = vcmp.eq.s32.totalorder %v2766, 1
      %vm2803 = vcmp.eq.s32.totalorder %v2767, 1
      %vm2804 = vcmp.eq.s32.totalorder %v2768, 1
      %vm2805 = vcmp.eq.s32.totalorder %v2769, 1
      %vm2806 = vcmp.eq.s32.totalorder %v2770, 1
      %vm2807 = vcmp.eq.s32.totalorder %v2771, 1
      %vm2808 = vcmp.eq.s32.totalorder %v2772, 1
      %vm2809 = vcmp.eq.s32.totalorder %v2773, 1
      %vm2810 = vcmp.eq.s32.totalorder %v2774, 1
      %vm2811 = vcmp.eq.s32.totalorder %v2775, 1
      %vm2812 = vcmp.eq.s32.totalorder %v2776, 1
      %vm2813 = vcmp.eq.s32.totalorder %v2777, 1
      %vm2814 = vcmp.eq.s32.totalorder %v2778, 1
      %vm2815 = vcmp.eq.s32.totalorder %v2779, 1
      %vm2816 = vcmp.eq.s32.totalorder %v2780, 1
      %vm2817 = vcmp.eq.s32.totalorder %v2781, 1
      %vm2818 = vcmp.eq.s32.totalorder %v2782, 1
      %vm2819 = vcmp.eq.s32.totalorder %v2783, 1
      %vm2820 = vcmp.eq.s32.totalorder %v2784, 1
      %vm2821 = vcmp.eq.s32.totalorder %v2785, 1
      %vm2822 = vcmp.eq.s32.totalorder %v2786, 1
      %vm2823 = vcmp.eq.s32.totalorder %v2787, 1
      %vm2824 = vcmp.eq.s32.totalorder %v2788, 1
      %vm2825 = vcmp.eq.s32.totalorder %v2789, 1
      %vm2826 = vcmp.eq.s32.totalorder %v2790, 1
      %vm2827 = vcmp.eq.s32.totalorder %v2791, 1
      %vm2828 = vcmp.eq.s32.totalorder %v2792, 1
      %vm2829 = vcmp.eq.s32.totalorder %v2793, 1
      %vm2830 = vcmp.eq.s32.totalorder %v2794, 1
      %vm2831 = vcmp.eq.s32.totalorder %v2795, 1
      %vm2832 = vcmp.eq.s32.totalorder %v2796, 1
      %vm2833 = vcmp.eq.s32.totalorder %v2797, 1
      %vm2834 = vcmp.eq.s32.totalorder %v2798, 1
      %v2835 = vsel %vm2799, %v1972, 0.0
      %v2836 = vsel %vm2800, %v1975, 0.0
      %v2837 = vsel %vm2801, %v1980, 0.0
      %v2838 = vsel %vm2802, %v1983, 0.0
      %v2839 = vsel %vm2803, %v1988, 0.0
      %v2840 = vsel %vm2804, %v1991, 0.0
      %v2841 = vsel %vm2805, %v1996, 0.0
      %v2842 = vsel %vm2806, %v1999, 0.0
      %v2843 = vsel %vm2807, %v2004, 0.0
      %v2844 = vsel %vm2808, %v2007, 0.0
      %v2845 = vsel %vm2809, %v2012, 0.0
      %v2846 = vsel %vm2810, %v2015, 0.0
      %v2847 = vsel %vm2811, %v2020, 0.0
      %v2848 = vsel %vm2812, %v2023, 0.0
      %v2849 = vsel %vm2813, %v2028, 0.0
      %v2850 = vsel %vm2814, %v2031, 0.0
      %v2851 = vsel %vm2815, %v2036, 0.0
      %v2852 = vsel %vm2816, %v2039, 0.0
      %v2853 = vsel %vm2817, %v2044, 0.0
      %v2854 = vsel %vm2818, %v2047, 0.0
      %v2855 = vsel %vm2819, %v2052, 0.0
      %v2856 = vsel %vm2820, %v2055, 0.0
      %v2857 = vsel %vm2821, %v2060, 0.0
      %v2858 = vsel %vm2822, %v2063, 0.0
      %v2859 = vsel %vm2823, %v2068, 0.0
      %v2860 = vsel %vm2824, %v2071, 0.0
      %v2861 = vsel %vm2825, %v2076, 0.0
      %v2862 = vsel %vm2826, %v2079, 0.0
      %v2863 = vsel %vm2827, %v2084, 0.0
      %v2864 = vsel %vm2828, %v2087, 0.0
      %v2865 = vsel %vm2829, %v2092, 0.0
      %v2866 = vsel %vm2830, %v2095, 0.0
      %v2867 = vsel %vm2831, %v2100, 0.0
      %v2868 = vsel %vm2832, %v2103, 0.0
      %v2869 = vsel %vm2833, %v2108, 0.0
      %v2870 = vsel %vm2834, %v2111, 0.0
      %v2871 = vadd.f32 %v2835, %v2836
      %v2872 = vadd.f32 %v2871, %v2837
      %v2873 = vadd.f32 %v2872, %v2838
      %v2874 = vadd.f32 %v2873, %v2839
      %v2875 = vadd.f32 %v2874, %v2840
      %v2876 = vadd.f32 %v2875, %v2841
      %v2877 = vadd.f32 %v2876, %v2842
      %v2878 = vadd.f32 %v2877, %v2843
      %v2879 = vadd.f32 %v2878, %v2844
      %v2880 = vadd.f32 %v2879, %v2845
      %v2881 = vadd.f32 %v2880, %v2846
      %v2882 = vadd.f32 %v2881, %v2847
      %v2883 = vadd.f32 %v2882, %v2848
      %v2884 = vadd.f32 %v2883, %v2849
      %v2885 = vadd.f32 %v2884, %v2850
      %v2886 = vadd.f32 %v2885, %v2851
      %v2887 = vadd.f32 %v2886, %v2852
      %v2888 = vadd.f32 %v2887, %v2853
      %v2889 = vadd.f32 %v2888, %v2854
      %v2890 = vadd.f32 %v2889, %v2855
      %v2891 = vadd.f32 %v2890, %v2856
      %v2892 = vadd.f32 %v2891, %v2857
      %v2893 = vadd.f32 %v2892, %v2858
      %v2894 = vadd.f32 %v2893, %v2859
      %v2895 = vadd.f32 %v2894, %v2860
      %v2896 = vadd.f32 %v2895, %v2861
      %v2897 = vadd.f32 %v2896, %v2862
      %v2898 = vadd.f32 %v2897, %v2863
      %v2899 = vadd.f32 %v2898, %v2864
      %v2900 = vadd.f32 %v2899, %v2865
      %v2901 = vadd.f32 %v2900, %v2866
      %v2902 = vadd.f32 %v2901, %v2867
      %v2903 = vadd.f32 %v2902, %v2868
      %v2904 = vadd.f32 %v2903, %v2869
      %v2905 = vadd.f32 %v2904, %v2870
      %2906 = vadd.xlane.f32.xlu0 %v2905
      %v2907 = vpop.xlane.xlu0 %2906
      %v2908 = vrot.slane %v2907, 4
      %v2909 = vadd.f32 %v2907, %v2908
      %v2910 = vrot.slane %v2909, 2
      %v2911 = vadd.f32 %v2909, %v2910
      %v2912 = vrot.slane %v2911, 1
      %v2913 = vadd.f32 %v2911, %v2912
      %s2914 = vtos %v2913
      %v2915 = vmul.f32 %v2835, %v2835
      %v2916 = vmul.f32 %v2836, %v2836
      %v2917 = vmul.f32 %v2837, %v2837
      %v2918 = vmul.f32 %v2838, %v2838
      %v2919 = vmul.f32 %v2839, %v2839
      %v2920 = vmul.f32 %v2840, %v2840
      %v2921 = vmul.f32 %v2841, %v2841
      %v2922 = vmul.f32 %v2842, %v2842
      %v2923 = vmul.f32 %v2843, %v2843
      %v2924 = vmul.f32 %v2844, %v2844
      %v2925 = vmul.f32 %v2845, %v2845
      %v2926 = vmul.f32 %v2846, %v2846
      %v2927 = vmul.f32 %v2847, %v2847
      %v2928 = vmul.f32 %v2848, %v2848
      %v2929 = vmul.f32 %v2849, %v2849
      %v2930 = vmul.f32 %v2850, %v2850
      %v2931 = vmul.f32 %v2851, %v2851
      %v2932 = vmul.f32 %v2852, %v2852
      %v2933 = vmul.f32 %v2853, %v2853
      %v2934 = vmul.f32 %v2854, %v2854
      %v2935 = vmul.f32 %v2855, %v2855
      %v2936 = vmul.f32 %v2856, %v2856
      %v2937 = vmul.f32 %v2857, %v2857
      %v2938 = vmul.f32 %v2858, %v2858
      %v2939 = vmul.f32 %v2859, %v2859
      %v2940 = vmul.f32 %v2860, %v2860
      %v2941 = vmul.f32 %v2861, %v2861
      %v2942 = vmul.f32 %v2862, %v2862
      %v2943 = vmul.f32 %v2863, %v2863
      %v2944 = vmul.f32 %v2864, %v2864
      %v2945 = vmul.f32 %v2865, %v2865
      %v2946 = vmul.f32 %v2866, %v2866
      %v2947 = vmul.f32 %v2867, %v2867
      %v2948 = vmul.f32 %v2868, %v2868
      %v2949 = vmul.f32 %v2869, %v2869
      %v2950 = vmul.f32 %v2870, %v2870
      %v2951 = vadd.f32 %v2915, %v2916
      %v2952 = vadd.f32 %v2951, %v2917
      %v2953 = vadd.f32 %v2952, %v2918
      %v2954 = vadd.f32 %v2953, %v2919
      %v2955 = vadd.f32 %v2954, %v2920
      %v2956 = vadd.f32 %v2955, %v2921
      %v2957 = vadd.f32 %v2956, %v2922
      %v2958 = vadd.f32 %v2957, %v2923
      %v2959 = vadd.f32 %v2958, %v2924
      %v2960 = vadd.f32 %v2959, %v2925
      %v2961 = vadd.f32 %v2960, %v2926
      %v2962 = vadd.f32 %v2961, %v2927
      %v2963 = vadd.f32 %v2962, %v2928
      %v2964 = vadd.f32 %v2963, %v2929
      %v2965 = vadd.f32 %v2964, %v2930
      %v2966 = vadd.f32 %v2965, %v2931
      %v2967 = vadd.f32 %v2966, %v2932
      %v2968 = vadd.f32 %v2967, %v2933
      %v2969 = vadd.f32 %v2968, %v2934
      %v2970 = vadd.f32 %v2969, %v2935
      %v2971 = vadd.f32 %v2970, %v2936
      %v2972 = vadd.f32 %v2971, %v2937
      %v2973 = vadd.f32 %v2972, %v2938
      %v2974 = vadd.f32 %v2973, %v2939
      %v2975 = vadd.f32 %v2974, %v2940
      %v2976 = vadd.f32 %v2975, %v2941
      %v2977 = vadd.f32 %v2976, %v2942
      %v2978 = vadd.f32 %v2977, %v2943
      %v2979 = vadd.f32 %v2978, %v2944
      %v2980 = vadd.f32 %v2979, %v2945
      %v2981 = vadd.f32 %v2980, %v2946
      %v2982 = vadd.f32 %v2981, %v2947
      %v2983 = vadd.f32 %v2982, %v2948
      %v2984 = vadd.f32 %v2983, %v2949
      %v2985 = vadd.f32 %v2984, %v2950
      %2986 = vadd.xlane.f32.xlu0 %v2985
      %v2987 = vpop.xlane.xlu0 %2986
      %v2988 = vrot.slane %v2987, 4
      %v2989 = vadd.f32 %v2987, %v2988
      %v2990 = vrot.slane %v2989, 2
      %v2991 = vadd.f32 %v2989, %v2990
      %v2992 = vrot.slane %v2991, 1
      %v2993 = vadd.f32 %v2991, %v2992
      %s2994 = vtos %v2993
      %v2995 = vrcp.pop 2048.0
      %s2996 = vtos %v2995
      %s2997 = smul.f32 %s2914, %s2996
      %v2998 = vrcp.pop 2048.0
      %s2999 = vtos %v2998
      %s3000 = smul.f32 %s2994, %s2999
      %s3001 = smul.f32 %s2997, %s2997
      %s3002 = ssub.f32 %s3000, %s3001
      %s3003 = smax.f32 %s3002, 0.0
      %s3004 = sadd.f32 %s3003, 1e-05
      %v3005 = vstv %s3004
      %v3006 = vrsqrt.pop %v3005
      %s3007 = vtos %v3006
      %v3008 = vstv %s2997
      %v3009 = vsub.f32 %v1972, %v3008
      %v3010 = vsub.f32 %v1975, %v3008
      %v3011 = vsub.f32 %v1980, %v3008
      %v3012 = vsub.f32 %v1983, %v3008
      %v3013 = vsub.f32 %v1988, %v3008
      %v3014 = vsub.f32 %v1991, %v3008
      %v3015 = vsub.f32 %v1996, %v3008
      %v3016 = vsub.f32 %v1999, %v3008
      %v3017 = vsub.f32 %v2004, %v3008
      %v3018 = vsub.f32 %v2007, %v3008
      %v3019 = vsub.f32 %v2012, %v3008
      %v3020 = vsub.f32 %v2015, %v3008
      %v3021 = vsub.f32 %v2020, %v3008
      %v3022 = vsub.f32 %v2023, %v3008
      %v3023 = vsub.f32 %v2028, %v3008
      %v3024 = vsub.f32 %v2031, %v3008
      %v3025 = vsub.f32 %v2036, %v3008
      %v3026 = vsub.f32 %v2039, %v3008
      %v3027 = vsub.f32 %v2044, %v3008
      %v3028 = vsub.f32 %v2047, %v3008
      %v3029 = vsub.f32 %v2052, %v3008
      %v3030 = vsub.f32 %v2055, %v3008
      %v3031 = vsub.f32 %v2060, %v3008
      %v3032 = vsub.f32 %v2063, %v3008
      %v3033 = vsub.f32 %v2068, %v3008
      %v3034 = vsub.f32 %v2071, %v3008
      %v3035 = vsub.f32 %v2076, %v3008
      %v3036 = vsub.f32 %v2079, %v3008
      %v3037 = vsub.f32 %v2084, %v3008
      %v3038 = vsub.f32 %v2087, %v3008
      %v3039 = vsub.f32 %v2092, %v3008
      %v3040 = vsub.f32 %v2095, %v3008
      %v3041 = vsub.f32 %v2100, %v3008
      %v3042 = vsub.f32 %v2103, %v3008
      %v3043 = vsub.f32 %v2108, %v3008
      %v3044 = vsub.f32 %v2111, %v3008
      %v3045 = vstv %s3007
      %v3046 = vmul.f32 %v3009, %v3045
      %v3047 = vmul.f32 %v3010, %v3045
      %v3048 = vmul.f32 %v3011, %v3045
      %v3049 = vmul.f32 %v3012, %v3045
      %v3050 = vmul.f32 %v3013, %v3045
      %v3051 = vmul.f32 %v3014, %v3045
      %v3052 = vmul.f32 %v3015, %v3045
      %v3053 = vmul.f32 %v3016, %v3045
      %v3054 = vmul.f32 %v3017, %v3045
      %v3055 = vmul.f32 %v3018, %v3045
      %v3056 = vmul.f32 %v3019, %v3045
      %v3057 = vmul.f32 %v3020, %v3045
      %v3058 = vmul.f32 %v3021, %v3045
      %v3059 = vmul.f32 %v3022, %v3045
      %v3060 = vmul.f32 %v3023, %v3045
      %v3061 = vmul.f32 %v3024, %v3045
      %v3062 = vmul.f32 %v3025, %v3045
      %v3063 = vmul.f32 %v3026, %v3045
      %v3064 = vmul.f32 %v3027, %v3045
      %v3065 = vmul.f32 %v3028, %v3045
      %v3066 = vmul.f32 %v3029, %v3045
      %v3067 = vmul.f32 %v3030, %v3045
      %v3068 = vmul.f32 %v3031, %v3045
      %v3069 = vmul.f32 %v3032, %v3045
      %v3070 = vmul.f32 %v3033, %v3045
      %v3071 = vmul.f32 %v3034, %v3045
      %v3072 = vmul.f32 %v3035, %v3045
      %v3073 = vmul.f32 %v3036, %v3045
      %v3074 = vmul.f32 %v3037, %v3045
      %v3075 = vmul.f32 %v3038, %v3045
      %v3076 = vmul.f32 %v3039, %v3045
      %v3077 = vmul.f32 %v3040, %v3045
      %v3078 = vmul.f32 %v3041, %v3045
      %v3079 = vmul.f32 %v3042, %v3045
      %v3080 = vmul.f32 %v3043, %v3045
      %v3081 = vmul.f32 %v3044, %v3045
      %v3082 = vld [vmem:[%s2 + $0x1] sm:$0x1]
      %v3083 = vlaneseq
      %v3084 = vshrl.u32 %v3083, 7
      %v3085 = vsub.s32 0, %v3084
      %v3086 = vrot.slane %v3082, %v3085
      %v3087 = vmul.f32 %v3046, %v3086
      %v3088 = vmul.f32 %v3047, %v3086
      %v3089 = vmul.f32 %v3048, %v3086
      %v3090 = vmul.f32 %v3049, %v3086
      %v3091 = vmul.f32 %v3050, %v3086
      %v3092 = vmul.f32 %v3051, %v3086
      %v3093 = vmul.f32 %v3052, %v3086
      %v3094 = vmul.f32 %v3053, %v3086
      %v3095 = vmul.f32 %v3054, %v3086
      %v3096 = vmul.f32 %v3055, %v3086
      %v3097 = vmul.f32 %v3056, %v3086
      %v3098 = vmul.f32 %v3057, %v3086
      %v3099 = vmul.f32 %v3058, %v3086
      %v3100 = vmul.f32 %v3059, %v3086
      %v3101 = vmul.f32 %v3060, %v3086
      %v3102 = vmul.f32 %v3061, %v3086
      %v3103 = vmul.f32 %v3062, %v3086
      %v3104 = vmul.f32 %v3063, %v3086
      %v3105 = vmul.f32 %v3064, %v3086
      %v3106 = vmul.f32 %v3065, %v3086
      %v3107 = vmul.f32 %v3066, %v3086
      %v3108 = vmul.f32 %v3067, %v3086
      %v3109 = vmul.f32 %v3068, %v3086
      %v3110 = vmul.f32 %v3069, %v3086
      %v3111 = vmul.f32 %v3070, %v3086
      %v3112 = vmul.f32 %v3071, %v3086
      %v3113 = vmul.f32 %v3072, %v3086
      %v3114 = vmul.f32 %v3073, %v3086
      %v3115 = vmul.f32 %v3074, %v3086
      %v3116 = vmul.f32 %v3075, %v3086
      %v3117 = vmul.f32 %v3076, %v3086
      %v3118 = vmul.f32 %v3077, %v3086
      %v3119 = vmul.f32 %v3078, %v3086
      %v3120 = vmul.f32 %v3079, %v3086
      %v3121 = vmul.f32 %v3080, %v3086
      %v3122 = vmul.f32 %v3081, %v3086
      %v3123 = vld [vmem:[%s2 + $0x2] sm:$0x1]
      %v3124 = vlaneseq
      %v3125 = vshrl.u32 %v3124, 7
      %v3126 = vsub.s32 0, %v3125
      %v3127 = vrot.slane %v3123, %v3126
      %v3128 = vadd.f32 %v3087, %v3127
      %v3129 = vadd.f32 %v3088, %v3127
      %v3130 = vadd.f32 %v3089, %v3127
      %v3131 = vadd.f32 %v3090, %v3127
      %v3132 = vadd.f32 %v3091, %v3127
      %v3133 = vadd.f32 %v3092, %v3127
      %v3134 = vadd.f32 %v3093, %v3127
      %v3135 = vadd.f32 %v3094, %v3127
      %v3136 = vadd.f32 %v3095, %v3127
      %v3137 = vadd.f32 %v3096, %v3127
      %v3138 = vadd.f32 %v3097, %v3127
      %v3139 = vadd.f32 %v3098, %v3127
      %v3140 = vadd.f32 %v3099, %v3127
      %v3141 = vadd.f32 %v3100, %v3127
      %v3142 = vadd.f32 %v3101, %v3127
      %v3143 = vadd.f32 %v3102, %v3127
      %v3144 = vadd.f32 %v3103, %v3127
      %v3145 = vadd.f32 %v3104, %v3127
      %v3146 = vadd.f32 %v3105, %v3127
      %v3147 = vadd.f32 %v3106, %v3127
      %v3148 = vadd.f32 %v3107, %v3127
      %v3149 = vadd.f32 %v3108, %v3127
      %v3150 = vadd.f32 %v3109, %v3127
      %v3151 = vadd.f32 %v3110, %v3127
      %v3152 = vadd.f32 %v3111, %v3127
      %v3153 = vadd.f32 %v3112, %v3127
      %v3154 = vadd.f32 %v3113, %v3127
      %v3155 = vadd.f32 %v3114, %v3127
      %v3156 = vadd.f32 %v3115, %v3127
      %v3157 = vadd.f32 %v3116, %v3127
      %v3158 = vadd.f32 %v3117, %v3127
      %v3159 = vadd.f32 %v3118, %v3127
      %v3160 = vadd.f32 %v3119, %v3127
      %v3161 = vadd.f32 %v3120, %v3127
      %v3162 = vadd.f32 %v3121, %v3127
      %v3163 = vadd.f32 %v3122, %v3127
      %v3164 = vmax.f32 %v3128, 0.0
      %v3165 = vmax.f32 %v3129, 0.0
      %v3166 = vmax.f32 %v3130, 0.0
      %v3167 = vmax.f32 %v3131, 0.0
      %v3168 = vmax.f32 %v3132, 0.0
      %v3169 = vmax.f32 %v3133, 0.0
      %v3170 = vmax.f32 %v3134, 0.0
      %v3171 = vmax.f32 %v3135, 0.0
      %v3172 = vmax.f32 %v3136, 0.0
      %v3173 = vmax.f32 %v3137, 0.0
      %v3174 = vmax.f32 %v3138, 0.0
      %v3175 = vmax.f32 %v3139, 0.0
      %v3176 = vmax.f32 %v3140, 0.0
      %v3177 = vmax.f32 %v3141, 0.0
      %v3178 = vmax.f32 %v3142, 0.0
      %v3179 = vmax.f32 %v3143, 0.0
      %v3180 = vmax.f32 %v3144, 0.0
      %v3181 = vmax.f32 %v3145, 0.0
      %v3182 = vmax.f32 %v3146, 0.0
      %v3183 = vmax.f32 %v3147, 0.0
      %v3184 = vmax.f32 %v3148, 0.0
      %v3185 = vmax.f32 %v3149, 0.0
      %v3186 = vmax.f32 %v3150, 0.0
      %v3187 = vmax.f32 %v3151, 0.0
      %v3188 = vmax.f32 %v3152, 0.0
      %v3189 = vmax.f32 %v3153, 0.0
      %v3190 = vmax.f32 %v3154, 0.0
      %v3191 = vmax.f32 %v3155, 0.0
      %v3192 = vmax.f32 %v3156, 0.0
      %v3193 = vmax.f32 %v3157, 0.0
      %v3194 = vmax.f32 %v3158, 0.0
      %v3195 = vmax.f32 %v3159, 0.0
      %v3196 = vmax.f32 %v3160, 0.0
      %v3197 = vmax.f32 %v3161, 0.0
      %v3198 = vmax.f32 %v3162, 0.0
      %v3199 = vmax.f32 %v3163, 0.0
      %v3200 = vsel %vm2799, %v3164, 0.0
      %v3201 = vsel %vm2800, %v3165, 0.0
      %v3202 = vsel %vm2801, %v3166, 0.0
      %v3203 = vsel %vm2802, %v3167, 0.0
      %v3204 = vsel %vm2803, %v3168, 0.0
      %v3205 = vsel %vm2804, %v3169, 0.0
      %v3206 = vsel %vm2805, %v3170, 0.0
      %v3207 = vsel %vm2806, %v3171, 0.0
      %v3208 = vsel %vm2807, %v3172, 0.0
      %v3209 = vsel %vm2808, %v3173, 0.0
      %v3210 = vsel %vm2809, %v3174, 0.0
      %v3211 = vsel %vm2810, %v3175, 0.0
      %v3212 = vsel %vm2811, %v3176, 0.0
      %v3213 = vsel %vm2812, %v3177, 0.0
      %v3214 = vsel %vm2813, %v3178, 0.0
      %v3215 = vsel %vm2814, %v3179, 0.0
      %v3216 = vsel %vm2815, %v3180, 0.0
      %v3217 = vsel %vm2816, %v3181, 0.0
      %v3218 = vsel %vm2817, %v3182, 0.0
      %v3219 = vsel %vm2818, %v3183, 0.0
      %v3220 = vsel %vm2819, %v3184, 0.0
      %v3221 = vsel %vm2820, %v3185, 0.0
      %v3222 = vsel %vm2821, %v3186, 0.0
      %v3223 = vsel %vm2822, %v3187, 0.0
      %v3224 = vsel %vm2823, %v3188, 0.0
      %v3225 = vsel %vm2824, %v3189, 0.0
      %v3226 = vsel %vm2825, %v3190, 0.0
      %v3227 = vsel %vm2826, %v3191, 0.0
      %v3228 = vsel %vm2827, %v3192, 0.0
      %v3229 = vsel %vm2828, %v3193, 0.0
      %v3230 = vsel %vm2829, %v3194, 0.0
      %v3231 = vsel %vm2830, %v3195, 0.0
      %v3232 = vsel %vm2831, %v3196, 0.0
      %v3233 = vsel %vm2832, %v3197, 0.0
      %v3234 = vsel %vm2833, %v3198, 0.0
      %v3235 = vsel %vm2834, %v3199, 0.0
      %v3236 = vadd.f32 %v3200, %v3201
      %v3237 = vadd.f32 %v3236, %v3202
      %v3238 = vadd.f32 %v3237, %v3203
      %v3239 = vadd.f32 %v3238, %v3204
      %v3240 = vadd.f32 %v3239, %v3205
      %v3241 = vadd.f32 %v3240, %v3206
      %v3242 = vadd.f32 %v3241, %v3207
      %v3243 = vadd.f32 %v3242, %v3208
      %v3244 = vadd.f32 %v3243, %v3209
      %v3245 = vadd.f32 %v3244, %v3210
      %v3246 = vadd.f32 %v3245, %v3211
      %v3247 = vadd.f32 %v3246, %v3212
      %v3248 = vadd.f32 %v3247, %v3213
      %v3249 = vadd.f32 %v3248, %v3214
      %v3250 = vadd.f32 %v3249, %v3215
      %v3251 = vadd.f32 %v3250, %v3216
      %v3252 = vadd.f32 %v3251, %v3217
      %v3253 = vadd.f32 %v3252, %v3218
      %v3254 = vadd.f32 %v3253, %v3219
      %v3255 = vadd.f32 %v3254, %v3220
      %v3256 = vadd.f32 %v3255, %v3221
      %v3257 = vadd.f32 %v3256, %v3222
      %v3258 = vadd.f32 %v3257, %v3223
      %v3259 = vadd.f32 %v3258, %v3224
      %v3260 = vadd.f32 %v3259, %v3225
      %v3261 = vadd.f32 %v3260, %v3226
      %v3262 = vadd.f32 %v3261, %v3227
      %v3263 = vadd.f32 %v3262, %v3228
      %v3264 = vadd.f32 %v3263, %v3229
      %v3265 = vadd.f32 %v3264, %v3230
      %v3266 = vadd.f32 %v3265, %v3231
      %v3267 = vadd.f32 %v3266, %v3232
      %v3268 = vadd.f32 %v3267, %v3233
      %v3269 = vadd.f32 %v3268, %v3234
      %v3270 = vadd.f32 %v3269, %v3235
      %v3271 = vrot.slane %v3270, 4
      %v3272 = vadd.f32 %v3270, %v3271
      %v3273 = vrot.slane %v3272, 2
      %v3274 = vadd.f32 %v3272, %v3273
      %v3275 = vrot.slane %v3274, 1
      %v3276 = vadd.f32 %v3274, %v3275
      %v3277 = vmul.f32 %v3276, 0.00390625
      %v3278 = vpack.c.bf16 %v3277, %v3277
      %v3279 = vld [vmem:[%s3] sm:$0xf]
      %v3280 = vld [vmem:[%s3 + $0x4] sm:$0xf]
      %v3281 = vld [vmem:[%s3 + $0x8] sm:$0xf]
      %v3282 = vld [vmem:[%s3 + $0xc] sm:$0xf]
      %v3283 = vld [vmem:[%s3 + $0x10] sm:$0xf]
      %v3284 = vld [vmem:[%s3 + $0x14] sm:$0xf]
      %v3285 = vld [vmem:[%s3 + $0x18] sm:$0xf]
      %v3286 = vld [vmem:[%s3 + $0x1c] sm:$0xf]
      %v3287 = vld [vmem:[%s3 + $0x20] sm:$0xf]
      %v3288 = vld [vmem:[%s3 + $0x24] sm:$0xf]
      %v3289 = vld [vmem:[%s3 + $0x28] sm:$0xf]
      %v3290 = vld [vmem:[%s3 + $0x2c] sm:$0xf]
      %v3291 = vld [vmem:[%s3 + $0x30] sm:$0xf]
      %v3292 = vld [vmem:[%s3 + $0x34] sm:$0xf]
      %v3293 = vld [vmem:[%s3 + $0x38] sm:$0xf]
      %v3294 = vld [vmem:[%s3 + $0x3c] sm:$0xf]
      %v3295 = vld [vmem:[%s2 + $0x3] sm:$0x1]
      %v3312 = vunpack.c.l.b16 %v3279
      %v3313 = vunpack.c.l.b16 %v3280
      %v3314 = vunpack.c.l.b16 %v3281
      %v3315 = vunpack.c.l.b16 %v3282
      %v3316 = vunpack.c.l.b16 %v3283
      %v3317 = vunpack.c.l.b16 %v3284
      %v3318 = vunpack.c.l.b16 %v3285
      %v3319 = vunpack.c.l.b16 %v3286
      %v3320 = vunpack.c.l.b16 %v3287
      %v3321 = vunpack.c.l.b16 %v3288
      %v3322 = vunpack.c.l.b16 %v3289
      %v3323 = vunpack.c.l.b16 %v3290
      %v3324 = vunpack.c.l.b16 %v3291
      %v3325 = vunpack.c.l.b16 %v3292
      %v3326 = vunpack.c.l.b16 %v3293
      %v3327 = vunpack.c.l.b16 %v3294
      %v3328 = vpack.c.b16 %v3313, %v3312
      %v3329 = vpack.c.b16 %v3315, %v3314
      %v3330 = vpack.c.b16 %v3317, %v3316
      %v3331 = vpack.c.b16 %v3319, %v3318
      %v3332 = vpack.c.b16 %v3321, %v3320
      %v3333 = vpack.c.b16 %v3323, %v3322
      %v3334 = vpack.c.b16 %v3325, %v3324
      %v3335 = vpack.c.b16 %v3327, %v3326
      %3344 = vmatprep.subr.bf16.mxu0 0
      %3345 = vmatpush1.bf16.msra.mxu0 %v3328
      %3346 = vmatprep.subr.bf16.mxu0 0
      %3347 = vmatpush1.bf16.msra.mxu0 %v3329
      %3348 = vmatprep.subr.bf16.mxu0 0
      %3349 = vmatpush1.bf16.msra.mxu0 %v3330
      %3350 = vmatprep.subr.bf16.mxu0 0
      %3351 = vmatpush1.bf16.msra.mxu0 %v3331
      %3352 = vmatprep.subr.bf16.mxu0 0
      %3353 = vmatpush1.bf16.msra.mxu0 %v3332
      %3354 = vmatprep.subr.bf16.mxu0 0
      %3355 = vmatpush1.bf16.msra.mxu0 %v3333
      %3356 = vmatprep.subr.bf16.mxu0 0
      %3357 = vmatpush1.bf16.msra.mxu0 %v3334
      %3358 = vmatprep.subr.bf16.mxu0 0
      %3359 = vmatpush1.bf16.msra.mxu0 %v3335
      %3360 = vmatprep.subr.bf16.mxu0 0
      %3361 = vmatpush1.bf16.msra.mxu0 0
      %3362 = vmatprep.subr.bf16.mxu0 0
      %3363 = vmatpush1.bf16.msra.mxu0 0
      %3364 = vmatprep.subr.bf16.mxu0 0
      %3365 = vmatpush1.bf16.msra.mxu0 0
      %3366 = vmatprep.subr.bf16.mxu0 0
      %3367 = vmatpush1.bf16.msra.mxu0 0
      %3368 = vmatprep.subr.bf16.mxu0 0
      %3369 = vmatpush1.bf16.msra.mxu0 0
      %3370 = vmatprep.subr.bf16.mxu0 0
      %3371 = vmatpush1.bf16.msra.mxu0 0
      %3372 = vmatprep.subr.bf16.mxu0 0
      %3373 = vmatpush1.bf16.msra.mxu0 0
      %3374 = vmatprep.subr.bf16.mxu0 0
      %3375 = vmatpush1.bf16.msra.mxu0 0
      %3376 = vmatprep.mubr.bf16.mxu0 0
      %3377 = vmatmul.mubr.bf16.gmra.mrb[0].mxu0 %v3278
      %v3378 = vpop.f32.mrb[0].mxu0
      %v3379 = vadd.f32 %v3295, %v3378
      %v3380 = vpop.f32.mrb[0].mxu0
      %v3381 = vpop.f32.mrb[0].mxu0
      %v3382 = vpop.f32.mrb[0].mxu0
      %3383 = vdwg.mxu0
      %v3384 = vxor.u32 %v3379, 2147483648
      %v3385 = vmul.f32 %v3384, 1.442695
      %v3386 = vpow.pop %v3385
      %v3387 = vadd.f32 %v3386, 1.0
      %v3388 = vrcp.pop %v3387
      %v3389 = vmul.f32 1.0, %v3388
      %v3390 = vlaneseq
      %v3391 = vshrl.u32 %v3390, 7
      %v3392 = vsub.s32 0, %v3391
      %v3393 = vrot.slane %v3389, %v3392
      %v3394 = vmul.f32 %v3200, %v3393
      %v3395 = vmul.f32 %v3201, %v3393
      %v3396 = vmul.f32 %v3202, %v3393
      %v3397 = vmul.f32 %v3203, %v3393
      %v3398 = vmul.f32 %v3204, %v3393
      %v3399 = vmul.f32 %v3205, %v3393
      %v3400 = vmul.f32 %v3206, %v3393
      %v3401 = vmul.f32 %v3207, %v3393
      %v3402 = vmul.f32 %v3208, %v3393
      %v3403 = vmul.f32 %v3209, %v3393
      %v3404 = vmul.f32 %v3210, %v3393
      %v3405 = vmul.f32 %v3211, %v3393
      %v3406 = vmul.f32 %v3212, %v3393
      %v3407 = vmul.f32 %v3213, %v3393
      %v3408 = vmul.f32 %v3214, %v3393
      %v3409 = vmul.f32 %v3215, %v3393
      %v3410 = vmul.f32 %v3216, %v3393
      %v3411 = vmul.f32 %v3217, %v3393
      %v3412 = vmul.f32 %v3218, %v3393
      %v3413 = vmul.f32 %v3219, %v3393
      %v3414 = vmul.f32 %v3220, %v3393
      %v3415 = vmul.f32 %v3221, %v3393
      %v3416 = vmul.f32 %v3222, %v3393
      %v3417 = vmul.f32 %v3223, %v3393
      %v3418 = vmul.f32 %v3224, %v3393
      %v3419 = vmul.f32 %v3225, %v3393
      %v3420 = vmul.f32 %v3226, %v3393
      %v3421 = vmul.f32 %v3227, %v3393
      %v3422 = vmul.f32 %v3228, %v3393
      %v3423 = vmul.f32 %v3229, %v3393
      %v3424 = vmul.f32 %v3230, %v3393
      %v3425 = vmul.f32 %v3231, %v3393
      %v3426 = vmul.f32 %v3232, %v3393
      %v3427 = vmul.f32 %v3233, %v3393
      %v3428 = vmul.f32 %v3234, %v3393
      %v3429 = vmul.f32 %v3235, %v3393
      %3430 = vst [vmem:[%s197] sm:$0xff] %v3394
      %3431 = vst [vmem:[%s197 + $0x8] sm:$0xff] %v3395
      %3432 = vst [vmem:[%s197 + $0x10] sm:$0xff] %v3396
      %3433 = vst [vmem:[%s197 + $0x18] sm:$0xff] %v3397
      %3434 = vst [vmem:[%s197 + $0x20] sm:$0xff] %v3398
      %3435 = vst [vmem:[%s197 + $0x28] sm:$0xff] %v3399
      %3436 = vst [vmem:[%s197 + $0x30] sm:$0xff] %v3400
      %3437 = vst [vmem:[%s197 + $0x38] sm:$0xff] %v3401
      %3438 = vst [vmem:[%s197 + $0x40] sm:$0xff] %v3402
      %3439 = vst [vmem:[%s197 + $0x48] sm:$0xff] %v3403
      %3440 = vst [vmem:[%s197 + $0x50] sm:$0xff] %v3404
      %3441 = vst [vmem:[%s197 + $0x58] sm:$0xff] %v3405
      %3442 = vst [vmem:[%s197 + $0x60] sm:$0xff] %v3406
      %3443 = vst [vmem:[%s197 + $0x68] sm:$0xff] %v3407
      %3444 = vst [vmem:[%s197 + $0x70] sm:$0xff] %v3408
      %3445 = vst [vmem:[%s197 + $0x78] sm:$0xff] %v3409
      %3446 = vst [vmem:[%s197 + $0x80] sm:$0xff] %v3410
      %3447 = vst [vmem:[%s197 + $0x88] sm:$0xff] %v3411
      %3448 = vst [vmem:[%s197 + $0x90] sm:$0xff] %v3412
      %3449 = vst [vmem:[%s197 + $0x98] sm:$0xff] %v3413
      %3450 = vst [vmem:[%s197 + $0xa0] sm:$0xff] %v3414
      %3451 = vst [vmem:[%s197 + $0xa8] sm:$0xff] %v3415
      %3452 = vst [vmem:[%s197 + $0xb0] sm:$0xff] %v3416
      %3453 = vst [vmem:[%s197 + $0xb8] sm:$0xff] %v3417
      %3454 = vst [vmem:[%s197 + $0xc0] sm:$0xff] %v3418
      %3455 = vst [vmem:[%s197 + $0xc8] sm:$0xff] %v3419
      %3456 = vst [vmem:[%s197 + $0xd0] sm:$0xff] %v3420
      %3457 = vst [vmem:[%s197 + $0xd8] sm:$0xff] %v3421
      %3458 = vst [vmem:[%s197 + $0xe0] sm:$0xff] %v3422
      %3459 = vst [vmem:[%s197 + $0xe8] sm:$0xff] %v3423
      %3460 = vst [vmem:[%s197 + $0xf0] sm:$0xff] %v3424
      %3461 = vst [vmem:[%s197 + $0xf8] sm:$0xff] %v3425
      %3462 = vst [vmem:[%s197 + $0x100] sm:$0xff] %v3426
      %3463 = vst [vmem:[%s197 + $0x108] sm:$0xff] %v3427
      %3464 = vst [vmem:[%s197 + $0x110] sm:$0xff] %v3428
      %3465 = vst [vmem:[%s197 + $0x118] sm:$0xff] %v3429
      %p3466 = scmp.lt.s32.totalorder %s15, 1
      %s3467 = scalar_select %p3466, %s15, 1
      %s3468 = smul.addr %s3467, 36
      %s3469 = smul.addr %s3468, 8
      %s3470 = scalar_lea.vmem %s4, %s3469
      // Predicated region
      $region37: #{ada_block_forward.1} parent=35 // pred_check
        %p3471 = pneg %p122
      $region38: #{ada_block_forward.1} parent=35 // pred_check_branch
        %3473 = sbr.rel (%p3471) target = $region40
      $region39: #{ada_block_forward.1} parent=35 // pred_region
        _
      $region40: #{ada_block_forward.1} parent=35 // pred_fallthru
        _
    $region36: #{ada_block_forward.1} parent=5 // pred_fallthru
      _
    %p3474 = scmp.le.s32.totalorder 2, %s10
    // Predicated region
    $region41: #{ada_block_forward.1} parent=5 // pred_check
      %p3475 = pneg %p3474
    $region42: #{ada_block_forward.1} parent=5 // pred_check_branch
      %3477 = sbr.rel (%p3475) target = $region44
    $region43: #{ada_block_forward.1} parent=5 // pred_region
      %s3478 = ssub.s32 %s10, 2
      // Predicated region
      $region45: #{ada_block_forward.1} parent=43 // pred_check
        %p3479 = pneg %p128
      $region46: #{ada_block_forward.1} parent=43 // pred_check_branch
        %3481 = sbr.rel (%p3479) target = $region48
      $region47: #{ada_block_forward.1} parent=43 // pred_region
        %p3482 = scmp.lt.s32.totalorder %s16, 1
        %s3483 = scalar_select %p3482, %s16, 1
        %s3484 = smul.addr %s3483, 36
        %s3485 = smul.addr %s3484, 8
        %s3486 = scalar_lea.vmem %s4, %s3485
      $region48: #{ada_block_forward.1} parent=43 // pred_fallthru
        _
    $region44: #{ada_block_forward.1} parent=5 // pred_fallthru
      _
  $region6: #{ada_block_forward.1} parent=0 // loop_footer
    %s14 = sadd.s32 1, %s10
  $region7: #{ada_block_forward.1} parent=0 // loop_footer_branch
    %9 = sbr.rel target = $region3
  $region8: #{ada_block_forward.1} parent=0 // loop_exit
    _

</llo_original>
